<compile_context>
chip_gen: v7x
topology: tpu7x:2x2x1
jax: 0.10.0
libtpu: 0.0.40
codegen_flags: <defaults>
</compile_context>

<pallas_src>
import functools

import jax
import jax.numpy as jnp
from jax import lax
from jax.experimental import pallas as pl
from jax.experimental.pallas import tpu as pltpu

LANE = 128


# ---------------------------------------------------------------------------
# small helpers
# ---------------------------------------------------------------------------
def _round_up(x, m):
    return (x + m - 1) // m * m


def _row_tiling(M, tm_max=512):
    """Pick (padded_rows, row_tile) with Mp % tm == 0 and >= 2 tiles when there is
    enough work (feeds both v7x TensorCores; harmless on v5e/v6e)."""
    if M <= 256:
        Mp = _round_up(M, 128)
        tm = 128
    else:
        Mp = _round_up(M, tm_max)
        tm = tm_max if Mp // tm_max >= 2 else tm_max // 2
    return Mp, tm


def _pad_rows(x, Mp):
    M = x.shape[0]
    return x if M == Mp else jnp.pad(x, ((0, Mp - M), (0, 0)))


def fold_bn(gamma, beta, mean, var, eps=1e-5):
    scale = gamma / jnp.sqrt(var + eps)
    bias = beta - mean * scale
    return scale, bias


# ---------------------------------------------------------------------------
# Pallas kernels
# ---------------------------------------------------------------------------
def _matmul_bias_act_kernel(x_ref, w_ref, b_ref, o_ref, *, act):
    y = jnp.dot(x_ref[...], w_ref[...], preferred_element_type=jnp.float32)
    y = y + b_ref[...]
    if act:
        y = jnp.maximum(y, 0.0)
    o_ref[...] = y.astype(o_ref.dtype)


def _matmul_bias_add_relu_kernel(x_ref, w_ref, b_ref, r_ref, o_ref):
    y = jnp.dot(x_ref[...], w_ref[...], preferred_element_type=jnp.float32)
    y = y + b_ref[...] + r_ref[...].astype(jnp.float32)
    o_ref[...] = jnp.maximum(y, 0.0).astype(o_ref.dtype)


def _grouped_conv3x3_kernel(x_ref, w_ref, b_ref, o_ref, *, s, Ho, Wo,
                            groups, cpg, cog, cout_pad):
    """Grouped 3x3 conv + bias + ReLU for one image.

    x_ref: (s*s, Hps, Wps, Cin_pad) phase-split padded input (phase p = a*s + b holds
           rows/cols congruent to (a, b) mod s of the zero-padded image).
    w_ref: (groups*9, cpg, cog) BN-folded weights, index g*9 + kh*3 + kw.
    o_ref: (1, Ho*Wo, Cout_pad) lane-dense output slab.
    """
    rows = Ho * Wo
    cols = []
    for g in range(groups):
        acc = jnp.zeros((rows, cog), jnp.float32)
        for kh in range(3):
            for kw in range(3):
                p = (kh % s) * s + (kw % s)       # which phase plane
                oh, ow = kh // s, kw // s         # offset inside that plane
                tap = x_ref[p, oh:oh + Ho, ow:ow + Wo, g * cpg:(g + 1) * cpg]
                acc = acc + jnp.dot(tap.reshape(rows, cpg),
                                    w_ref[g * 9 + kh * 3 + kw],
                                    preferred_element_type=jnp.float32)
        cols.append(acc)
    y = jnp.concatenate(cols, axis=-1) + b_ref[...]
    y = jnp.maximum(y, 0.0)
    if cout_pad:
        y = jnp.concatenate([y, jnp.zeros((rows, cout_pad), jnp.float32)], axis=-1)
    o_ref[0] = y.astype(o_ref.dtype)


# ---------------------------------------------------------------------------
# pallas_call wrappers for the matmul kernels
# ---------------------------------------------------------------------------
def matmul_bias_act(x, w, bias2d, *, act, out_dtype, tm_max=512):
    M, K = x.shape
    Kw, Cout = w.shape
    assert K == Kw, (K, Kw)
    Mp, tm = _row_tiling(M, tm_max)
    xb = _pad_rows(x, Mp).astype(jnp.bfloat16)
    wb = w.astype(jnp.bfloat16)
    kernel = functools.partial(_matmul_bias_act_kernel, act=act)
    y = pl.pallas_call(
        kernel,
        out_shape=jax.ShapeDtypeStruct((Mp, Cout), out_dtype),
        grid_spec=pltpu.PrefetchScalarGridSpec(
            num_scalar_prefetch=0,
            grid=(Mp // tm,),
            in_specs=[
                pl.BlockSpec((tm, K), lambda i: (i, 0)),
                pl.BlockSpec((K, Cout), lambda i: (0, 0)),
                pl.BlockSpec((1, Cout), lambda i: (0, 0)),
            ],
            out_specs=pl.BlockSpec((tm, Cout), lambda i: (i, 0)),
        ),
        compiler_params=pltpu.CompilerParams(dimension_semantics=("parallel",)),
    )(xb, wb, bias2d.astype(jnp.float32))
    return y if Mp == M else y[:M]


def matmul_bias_add_relu(x, w, bias2d, res, *, out_dtype, tm_max=512):
    M, K = x.shape
    Kw, Cout = w.shape
    assert K == Kw and res.shape == (M, Cout)
    Mp, tm = _row_tiling(M, tm_max)
    xb = _pad_rows(x, Mp).astype(jnp.bfloat16)
    rb = _pad_rows(res, Mp).astype(jnp.bfloat16)
    wb = w.astype(jnp.bfloat16)
    y = pl.pallas_call(
        _matmul_bias_add_relu_kernel,
        out_shape=jax.ShapeDtypeStruct((Mp, Cout), out_dtype),
        grid_spec=pltpu.PrefetchScalarGridSpec(
            num_scalar_prefetch=0,
            grid=(Mp // tm,),
            in_specs=[
                pl.BlockSpec((tm, K), lambda i: (i, 0)),
                pl.BlockSpec((K, Cout), lambda i: (0, 0)),
                pl.BlockSpec((1, Cout), lambda i: (0, 0)),
                pl.BlockSpec((tm, Cout), lambda i: (i, 0)),
            ],
            out_specs=pl.BlockSpec((tm, Cout), lambda i: (i, 0)),
        ),
        compiler_params=pltpu.CompilerParams(dimension_semantics=("parallel",)),
    )(xb, wb, bias2d.astype(jnp.float32), rb)
    return y if Mp == M else y[:M]


# ---------------------------------------------------------------------------
# Conv wrappers (layout glue; all compute stays in the Pallas kernels)
# ---------------------------------------------------------------------------
def conv1x1_bn(x_nhwc, w_hwio, scale, bias, *, stride=1, act=True,
               out_dtype=jnp.bfloat16):
    """1x1 conv with folded BN (+ optional ReLU); output channels padded to 128-multiples."""
    if stride != 1:
        # TODO(synk): fuse the stride-s row subsampling into the matmul BlockSpec
        # (row gather / strided window) instead of materializing the slice in HBM.
        x_nhwc = x_nhwc[:, ::stride, ::stride, :]
    N, H, W, Cx = x_nhwc.shape
    K, Cout = w_hwio.shape[-2], w_hwio.shape[-1]
    Cout_p = _round_up(Cout, LANE)
    wm = w_hwio.reshape(K, Cout) * scale[None, :]            # fold BN scale
    wm = jnp.pad(wm, ((0, Cx - K), (0, Cout_p - Cout)))      # rows: padded input channels
    bm = jnp.pad(bias, (0, Cout_p - Cout)).reshape(1, Cout_p)
    y = matmul_bias_act(x_nhwc.reshape(N * H * W, Cx), wm, bm,
                        act=act, out_dtype=out_dtype)
    return y.reshape(N, H, W, Cout_p)


def conv3x3_grouped_bn_relu(x_nhwc, w_hwio, scale, bias, *, stride, groups):
    """Grouped 3x3 conv (pad=1, stride s) + folded BN + ReLU in one pallas_call."""
    N, H, W, Cp = x_nhwc.shape
    cpg, Cout = w_hwio.shape[2], w_hwio.shape[3]
    cog = Cout // groups
    Cout_p = _round_up(Cout, LANE)
    s = stride
    Ho = (H - 1) // s + 1
    Wo = (W - 1) // s + 1

    # Fold BN scale into the weights and regroup to (G*9, cpg, cog).
    wf = w_hwio * scale[None, None, None, :]
    wf = wf.reshape(3, 3, cpg, groups, cog).transpose(3, 0, 1, 2, 4)
    wf = wf.reshape(groups * 9, cpg, cog).astype(jnp.bfloat16)
    b2 = bias.reshape(1, Cout).astype(jnp.float32)

    # Zero-pad spatially by 1, then split into s*s phase planes so each (kh, kw) tap of the
    # strided conv is a *contiguous* window of one plane (no im2col, no strided slicing):
    #   phases[n*s*s + a*s + b, i, j, c] == xpad[n, i*s + a, j*s + b, c]
    xp = jnp.pad(x_nhwc, ((0, 0), (1, 1), (1, 1), (0, 0))).astype(jnp.bfloat16)
    Hp, Wp = H + 2, W + 2
    Hps, Wps = -(-Hp // s), -(-Wp // s)
    xe = jnp.pad(xp, ((0, 0), (0, Hps * s - Hp), (0, Wps * s - Wp), (0, 0)))
    phases = xe.reshape(N, Hps, s, Wps, s, Cp).transpose(0, 2, 4, 1, 3, 5)
    phases = phases.reshape(N * s * s, Hps, Wps, Cp)

    kernel = functools.partial(
        _grouped_conv3x3_kernel, s=s, Ho=Ho, Wo=Wo, groups=groups,
        cpg=cpg, cog=cog, cout_pad=Cout_p - Cout)
    y = pl.pallas_call(
        kernel,
        out_shape=jax.ShapeDtypeStruct((N, Ho * Wo, Cout_p), jnp.bfloat16),
        grid_spec=pltpu.PrefetchScalarGridSpec(
            num_scalar_prefetch=0,
            grid=(N,),
            in_specs=[
                pl.BlockSpec((s * s, Hps, Wps, Cp), lambda n: (n, 0, 0, 0)),
                pl.BlockSpec((groups * 9, cpg, cog), lambda n: (0, 0, 0)),
                pl.BlockSpec((1, Cout), lambda n: (0, 0)),
            ],
            out_specs=pl.BlockSpec((1, Ho * Wo, Cout_p), lambda n: (n, 0, 0)),
        ),
        compiler_params=pltpu.CompilerParams(dimension_semantics=("parallel",)),
    )(phases, wf, b2)
    return y.reshape(N, Ho, Wo, Cout_p)


def conv1x1_bn_add_relu(x_nhwc, w_hwio, scale, bias, res_nhwc, *,
                        out_dtype=jnp.float32):
    """Final 1x1 conv + folded BN + residual add + ReLU (fused)."""
    N, H, W, Cp = x_nhwc.shape
    K, Cout = w_hwio.shape[-2], w_hwio.shape[-1]
    Cout_p = res_nhwc.shape[-1]
    wm = w_hwio.reshape(K, Cout) * scale[None, :]
    wm = jnp.pad(wm, ((0, Cp - K), (0, Cout_p - Cout)))
    bm = jnp.pad(bias, (0, Cout_p - Cout)).reshape(1, Cout_p)
    y = matmul_bias_add_relu(x_nhwc.reshape(N * H * W, Cp), wm, bm,
                             res_nhwc.reshape(N * H * W, Cout_p),
                             out_dtype=out_dtype)
    return y.reshape(N, H, W, Cout_p)


# ---------------------------------------------------------------------------
# ResNeXtBlock forward
# ---------------------------------------------------------------------------
def resnext_block_forward(x_nhwc, p, *, s, g):
    out4 = p['w3'].shape[-1]
    out4_p = _round_up(out4, LANE)

    s1, b1 = fold_bn(*p['bn1'])
    h = conv1x1_bn(x_nhwc, p['w1'], s1, b1, stride=1, act=True)

    s2, b2 = fold_bn(*p['bn2'])
    h = conv3x3_grouped_bn_relu(h, p['w2'], s2, b2, stride=s, groups=g)

    if 'wsc' in p:
        ssc, bsc = fold_bn(*p['bnsc'])
        sc = conv1x1_bn(x_nhwc, p['wsc'], ssc, bsc, stride=s, act=False)
    else:
        # identity shortcut (only when s == 1 and inp == out4); pad channels to match.
        sc = jnp.pad(x_nhwc, ((0, 0), (0, 0), (0, 0),
                              (0, out4_p - x_nhwc.shape[-1]))).astype(jnp.bfloat16)

    s3, b3 = fold_bn(*p['bn3'])
    y = conv1x1_bn_add_relu(h, p['w3'], s3, b3, sc, out_dtype=jnp.float32)
    return y[..., :out4]


# ---------------------------------------------------------------------------
# Deterministic parameter initialization (shapes per ResNeXtBlock.__init__)
# ---------------------------------------------------------------------------
def init_params(key, inp, outp, s, g, depth, basewidth):
    width = int(depth * outp / basewidth) * g
    out4 = outp * 4

    def conv_w(k, kh, kw, cin_per_g, cout):
        fan_in = kh * kw * cin_per_g
        return jax.random.normal(k, (kh, kw, cin_per_g, cout), jnp.float32) / jnp.sqrt(fan_in)

    def bn_p(k, c):
        k1, k2, k3, k4 = jax.random.split(k, 4)
        gamma = 1.0 + 0.1 * jax.random.normal(k1, (c,), jnp.float32)
        beta = 0.1 * jax.random.normal(k2, (c,), jnp.float32)
        mean = 0.1 * jax.random.normal(k3, (c,), jnp.float32)
        var = 1.0 + 0.1 * jax.random.uniform(k4, (c,), jnp.float32)
        return gamma, beta, mean, var

    ks = jax.random.split(key, 8)
    p = {
        'w1': conv_w(ks[0], 1, 1, inp, width), 'bn1': bn_p(ks[1], width),
        'w2': conv_w(ks[2], 3, 3, width // g, width), 'bn2': bn_p(ks[3], width),
        'w3': conv_w(ks[4], 1, 1, width, out4), 'bn3': bn_p(ks[5], out4),
    }
    if s != 1 or inp != out4:
        p['wsc'] = conv_w(ks[6], 1, 1, inp, out4)
        p['bnsc'] = bn_p(ks[7], out4)
    return p


# ---------------------------------------------------------------------------
# Pure-JAX reference (sanity check of the Pallas implementation)
# ---------------------------------------------------------------------------
def reference_forward(x_nhwc, p, *, s, g, eps=1e-5):
    dn = ('NHWC', 'HWIO', 'NHWC')

    def bn(y, gamma, beta, mean, var):
        return (y - mean) / jnp.sqrt(var + eps) * gamma + beta

    h = lax.conv_general_dilated(x_nhwc, p['w1'], (1, 1), 'VALID', dimension_numbers=dn)
    h = jax.nn.relu(bn(h, *p['bn1']))
    h = lax.conv_general_dilated(h, p['w2'], (s, s), ((1, 1), (1, 1)),
                                 dimension_numbers=dn, feature_group_count=g)
    h = jax.nn.relu(bn(h, *p['bn2']))
    h = lax.conv_general_dilated(h, p['w3'], (1, 1), 'VALID', dimension_numbers=dn)
    h = bn(h, *p['bn3'])
    if 'wsc' in p:
        sc = lax.conv_general_dilated(x_nhwc, p['wsc'], (s, s), 'VALID', dimension_numbers=dn)
        sc = bn(sc, *p['bnsc'])
    else:
        sc = x_nhwc
    return jax.nn.relu(h + sc)


if __name__ == "__main__":
    # ResNeXtBlock(inp=4, outp=4, s=2, g=2, depth=2, basewidth=4) -> width=4, out=16
    inp, outp, s, g, depth, basewidth = 4, 4, 2, 2, 2, 4
    N, H, W = 2, 16, 16

    key = jax.random.PRNGKey(0)
    kx, kp = jax.random.split(key)
    x_nchw = jax.random.normal(kx, (N, inp, H, W), dtype=jnp.float32)  # PyTorch NCHW
    x = jnp.transpose(x_nchw, (0, 2, 3, 1))                            # NHWC for kernels

    params = init_params(kp, inp, outp, s, g, depth, basewidth)

    fwd = jax.jit(functools.partial(resnext_block_forward, s=s, g=g))
    out = jax.block_until_ready(fwd(x, params))

    ref = reference_forward(x, params, s=s, g=g)
    assert out.shape == ref.shape == (N, H // s, W // s, outp * 4), out.shape
    err = float(jnp.max(jnp.abs(out - ref)))
    tol = 5e-2 * max(1.0, float(jnp.max(jnp.abs(ref))))   # bf16 matmul operands
    assert err < tol, f"max abs err {err} (tol {tol})"

    print("KERNEL_OK")
</pallas_src>

<mosaic_0001>
module attributes {stable_mosaic.version = 11 : i64} {
  func.func @_matmul_bias_act_kernel(%arg0: i32, %arg1: memref<256x4xbf16, #tpu.memory_space<vmem>>, %arg2: memref<4x128xbf16, #tpu.memory_space<vmem>>, %arg3: memref<1x128xf32, #tpu.memory_space<vmem>>, %arg4: memref<256x128xbf16, #tpu.memory_space<vmem>>) attributes {dimension_semantics = [#tpu.dimension_semantics<parallel>], iteration_bounds = array<i64: 2>, scalar_prefetch = 0 : i64, scratch_operands = 0 : i64, tpu.core_type = #tpu.core_type<tc>, window_params = [{transform_indices = @transform_0, window_bounds = array<i64: 256, 4>}, {pipeline_mode = #tpu.pipeline_mode<synchronous>, transform_indices = @transform_1, window_bounds = array<i64: 4, 128>}, {pipeline_mode = #tpu.pipeline_mode<synchronous>, transform_indices = @transform_2, window_bounds = array<i64: 1, 128>}, {transform_indices = @transform_3, window_bounds = array<i64: 256, 128>}]} {
    %c0 = arith.constant 0 : index
    %c0_0 = arith.constant 0 : index
    %0 = vector.load %arg1[%c0, %c0_0] : memref<256x4xbf16, #tpu.memory_space<vmem>>, vector<256x4xbf16>
    %c0_1 = arith.constant 0 : index
    %c0_2 = arith.constant 0 : index
    %1 = vector.load %arg2[%c0_1, %c0_2] : memref<4x128xbf16, #tpu.memory_space<vmem>>, vector<4x128xbf16>
    %cst = arith.constant dense<0.000000e+00> : vector<256x128xf32>
    %2 = tpu.matmul %0, %1, %cst {dimension_numbers = #tpu.dot_dimension_numbers<[1], [0], [0], [1], [0, 0, 1, 1], [], []>} : vector<256x4xbf16>, vector<4x128xbf16>, vector<256x128xf32> -> vector<256x128xf32>
    %c0_3 = arith.constant 0 : index
    %c0_4 = arith.constant 0 : index
    %3 = vector.load %arg3[%c0_3, %c0_4] : memref<1x128xf32, #tpu.memory_space<vmem>>, vector<1x128xf32>
    %4 = vector.broadcast %3 : vector<1x128xf32> to vector<256x128xf32>
    %5 = arith.addf %2, %4 : vector<256x128xf32>
    %cst_5 = arith.constant 0.000000e+00 : f32
    %6 = vector.broadcast %cst_5 : f32 to vector<256x128xf32>
    %7 = arith.maximumf %5, %6 : vector<256x128xf32>
    %8 = arith.truncf %7 : vector<256x128xf32> to vector<256x128xbf16>
    %c0_6 = arith.constant 0 : index
    %c0_7 = arith.constant 0 : index
    %9 = vector.load %arg4[%c0_6, %c0_7] : memref<256x128xbf16, #tpu.memory_space<vmem>>, vector<256x128xbf16>
    tpu.vector_store %arg4[%c0_6, %c0_7], %8 {strides = array<i32>} : memref<256x128xbf16, #tpu.memory_space<vmem>>, vector<256x128xbf16>,
    return
  }
  func.func @transform_0(%arg0: i32) -> (i32, i32) {
    %c0_i32 = arith.constant 0 : i32
    %c0_i32_0 = arith.constant 0 : i32
    return %arg0, %c0_i32 : i32, i32
  }
  func.func @transform_1(%arg0: i32) -> (i32, i32) {
    %c0_i32 = arith.constant 0 : i32
    %c0_i32_0 = arith.constant 0 : i32
    %c0_i32_1 = arith.constant 0 : i32
    return %c0_i32, %c0_i32_0 : i32, i32
  }
  func.func @transform_2(%arg0: i32) -> (i32, i32) {
    %c0_i32 = arith.constant 0 : i32
    %c0_i32_0 = arith.constant 0 : i32
    %c0_i32_1 = arith.constant 0 : i32
    return %c0_i32, %c0_i32_0 : i32, i32
  }
  func.func @transform_3(%arg0: i32) -> (i32, i32) {
    %c0_i32 = arith.constant 0 : i32
    %c0_i32_0 = arith.constant 0 : i32
    return %arg0, %c0_i32 : i32, i32
  }
}

module attributes {stable_mosaic.version = 11 : i64} {
  func.func @_grouped_conv3x3_kernel(%arg0: i32, %arg1: memref<4x9x9x128xbf16, #tpu.memory_space<vmem>>, %arg2: memref<18x2x2xbf16, #tpu.memory_space<vmem>>, %arg3: memref<1x4xf32, #tpu.memory_space<vmem>>, %arg4: memref<1x64x128xbf16, #tpu.memory_space<vmem>>) attributes {dimension_semantics = [#tpu.dimension_semantics<parallel>], iteration_bounds = array<i64: 2>, scalar_prefetch = 0 : i64, scratch_operands = 0 : i64, tpu.core_type = #tpu.core_type<tc>, window_params = [{transform_indices = @transform_0, window_bounds = array<i64: 4, 9, 9, 128>}, {pipeline_mode = #tpu.pipeline_mode<synchronous>, transform_indices = @transform_1, window_bounds = array<i64: 18, 2, 2>}, {pipeline_mode = #tpu.pipeline_mode<synchronous>, transform_indices = @transform_2, window_bounds = array<i64: 1, 4>}, {transform_indices = @transform_3, window_bounds = array<i64: 1, 64, 128>}]} {
    %cst = arith.constant 0.000000e+00 : f32
    %0 = vector.broadcast %cst : f32 to vector<64x2xf32>
    %c0 = arith.constant 0 : index
    %c0_0 = arith.constant 0 : index
    %c0_1 = arith.constant 0 : index
    %c0_2 = arith.constant 0 : index
    %1 = vector.load %arg1[%c0, %c0_0, %c0_1, %c0_2] : memref<4x9x9x128xbf16, #tpu.memory_space<vmem>>, vector<1x8x8x2xbf16>
    %2 = vector.shape_cast %1 : vector<1x8x8x2xbf16> to vector<8x8x2xbf16>
    %3 = vector.shape_cast %2 : vector<8x8x2xbf16> to vector<64x2xbf16>
    %c0_3 = arith.constant 0 : index
    %c0_4 = arith.constant 0 : index
    %c0_5 = arith.constant 0 : index
    %4 = vector.load %arg2[%c0_3, %c0_4, %c0_5] : memref<18x2x2xbf16, #tpu.memory_space<vmem>>, vector<1x2x2xbf16>
    %5 = vector.shape_cast %4 : vector<1x2x2xbf16> to vector<2x2xbf16>
    %cst_6 = arith.constant dense<0.000000e+00> : vector<64x2xf32>
    %6 = tpu.matmul %3, %5, %cst_6 {dimension_numbers = #tpu.dot_dimension_numbers<[1], [0], [0], [1], [0, 0, 1, 1], [], []>} : vector<64x2xbf16>, vector<2x2xbf16>, vector<64x2xf32> -> vector<64x2xf32>
    %7 = arith.addf %0, %6 : vector<64x2xf32>
    %c1 = arith.constant 1 : index
    %c0_7 = arith.constant 0 : index
    %c0_8 = arith.constant 0 : index
    %c0_9 = arith.constant 0 : index
    %8 = vector.load %arg1[%c1, %c0_7, %c0_8, %c0_9] : memref<4x9x9x128xbf16, #tpu.memory_space<vmem>>, vector<1x8x8x2xbf16>
    %9 = vector.shape_cast %8 : vector<1x8x8x2xbf16> to vector<8x8x2xbf16>
    %10 = vector.shape_cast %9 : vector<8x8x2xbf16> to vector<64x2xbf16>
    %c1_10 = arith.constant 1 : index
    %c0_11 = arith.constant 0 : index
    %c0_12 = arith.constant 0 : index
    %11 = vector.load %arg2[%c1_10, %c0_11, %c0_12] : memref<18x2x2xbf16, #tpu.memory_space<vmem>>, vector<1x2x2xbf16>
    %12 = vector.shape_cast %11 : vector<1x2x2xbf16> to vector<2x2xbf16>
    %cst_13 = arith.constant dense<0.000000e+00> : vector<64x2xf32>
    %13 = tpu.matmul %10, %12, %cst_13 {dimension_numbers = #tpu.dot_dimension_numbers<[1], [0], [0], [1], [0, 0, 1, 1], [], []>} : vector<64x2xbf16>, vector<2x2xbf16>, vector<64x2xf32> -> vector<64x2xf32>
    %14 = arith.addf %7, %13 : vector<64x2xf32>
    %c0_14 = arith.constant 0 : index
    %c0_15 = arith.constant 0 : index
    %c1_16 = arith.constant 1 : index
    %c0_17 = arith.constant 0 : index
    %15 = vector.load %arg1[%c0_14, %c0_15, %c1_16, %c0_17] : memref<4x9x9x128xbf16, #tpu.memory_space<vmem>>, vector<1x8x8x2xbf16>
    %16 = vector.shape_cast %15 : vector<1x8x8x2xbf16> to vector<8x8x2xbf16>
    %17 = vector.shape_cast %16 : vector<8x8x2xbf16> to vector<64x2xbf16>
    %c2 = arith.constant 2 : index
    %c0_18 = arith.constant 0 : index
    %c0_19 = arith.constant 0 : index
    %18 = vector.load %arg2[%c2, %c0_18, %c0_19] : memref<18x2x2xbf16, #tpu.memory_space<vmem>>, vector<1x2x2xbf16>
    %19 = vector.shape_cast %18 : vector<1x2x2xbf16> to vector<2x2xbf16>
    %cst_20 = arith.constant dense<0.000000e+00> : vector<64x2xf32>
    %20 = tpu.matmul %17, %19, %cst_20 {dimension_numbers = #tpu.dot_dimension_numbers<[1], [0], [0], [1], [0, 0, 1, 1], [], []>} : vector<64x2xbf16>, vector<2x2xbf16>, vector<64x2xf32> -> vector<64x2xf32>
    %21 = arith.addf %14, %20 : vector<64x2xf32>
    %c2_21 = arith.constant 2 : index
    %c0_22 = arith.constant 0 : index
    %c0_23 = arith.constant 0 : index
    %c0_24 = arith.constant 0 : index
    %22 = vector.load %arg1[%c2_21, %c0_22, %c0_23, %c0_24] : memref<4x9x9x128xbf16, #tpu.memory_space<vmem>>, vector<1x8x8x2xbf16>
    %23 = vector.shape_cast %22 : vector<1x8x8x2xbf16> to vector<8x8x2xbf16>
    %24 = vector.shape_cast %23 : vector<8x8x2xbf16> to vector<64x2xbf16>
    %c3 = arith.constant 3 : index
    %c0_25 = arith.constant 0 : index
    %c0_26 = arith.constant 0 : index
    %25 = vector.load %arg2[%c3, %c0_25, %c0_26] : memref<18x2x2xbf16, #tpu.memory_space<vmem>>, vector<1x2x2xbf16>
    %26 = vector.shape_cast %25 : vector<1x2x2xbf16> to vector<2x2xbf16>
    %cst_27 = arith.constant dense<0.000000e+00> : vector<64x2xf32>
    %27 = tpu.matmul %24, %26, %cst_27 {dimension_numbers = #tpu.dot_dimension_numbers<[1], [0], [0], [1], [0, 0, 1, 1], [], []>} : vector<64x2xbf16>, vector<2x2xbf16>, vector<64x2xf32> -> vector<64x2xf32>
    %28 = arith.addf %21, %27 : vector<64x2xf32>
    %c3_28 = arith.constant 3 : index
    %c0_29 = arith.constant 0 : index
    %c0_30 = arith.constant 0 : index
    %c0_31 = arith.constant 0 : index
    %29 = vector.load %arg1[%c3_28, %c0_29, %c0_30, %c0_31] : memref<4x9x9x128xbf16, #tpu.memory_space<vmem>>, vector<1x8x8x2xbf16>
    %30 = vector.shape_cast %29 : vector<1x8x8x2xbf16> to vector<8x8x2xbf16>
    %31 = vector.shape_cast %30 : vector<8x8x2xbf16> to vector<64x2xbf16>
    %c4 = arith.constant 4 : index
    %c0_32 = arith.constant 0 : index
    %c0_33 = arith.constant 0 : index
    %32 = vector.load %arg2[%c4, %c0_32, %c0_33] : memref<18x2x2xbf16, #tpu.memory_space<vmem>>, vector<1x2x2xbf16>
    %33 = vector.shape_cast %32 : vector<1x2x2xbf16> to vector<2x2xbf16>
    %cst_34 = arith.constant dense<0.000000e+00> : vector<64x2xf32>
    %34 = tpu.matmul %31, %33, %cst_34 {dimension_numbers = #tpu.dot_dimension_numbers<[1], [0], [0], [1], [0, 0, 1, 1], [], []>} : vector<64x2xbf16>, vector<2x2xbf16>, vector<64x2xf32> -> vector<64x2xf32>
    %35 = arith.addf %28, %34 : vector<64x2xf32>
    %c2_35 = arith.constant 2 : index
    %c0_36 = arith.constant 0 : index
    %c1_37 = arith.constant 1 : index
    %c0_38 = arith.constant 0 : index
    %36 = vector.load %arg1[%c2_35, %c0_36, %c1_37, %c0_38] : memref<4x9x9x128xbf16, #tpu.memory_space<vmem>>, vector<1x8x8x2xbf16>
    %37 = vector.shape_cast %36 : vector<1x8x8x2xbf16> to vector<8x8x2xbf16>
    %38 = vector.shape_cast %37 : vector<8x8x2xbf16> to vector<64x2xbf16>
    %c5 = arith.constant 5 : index
    %c0_39 = arith.constant 0 : index
    %c0_40 = arith.constant 0 : index
    %39 = vector.load %arg2[%c5, %c0_39, %c0_40] : memref<18x2x2xbf16, #tpu.memory_space<vmem>>, vector<1x2x2xbf16>
    %40 = vector.shape_cast %39 : vector<1x2x2xbf16> to vector<2x2xbf16>
    %cst_41 = arith.constant dense<0.000000e+00> : vector<64x2xf32>
    %41 = tpu.matmul %38, %40, %cst_41 {dimension_numbers = #tpu.dot_dimension_numbers<[1], [0], [0], [1], [0, 0, 1, 1], [], []>} : vector<64x2xbf16>, vector<2x2xbf16>, vector<64x2xf32> -> vector<64x2xf32>
    %42 = arith.addf %35, %41 : vector<64x2xf32>
    %c0_42 = arith.constant 0 : index
    %c1_43 = arith.constant 1 : index
    %c0_44 = arith.constant 0 : index
    %c0_45 = arith.constant 0 : index
    %43 = vector.load %arg1[%c0_42, %c1_43, %c0_44, %c0_45] : memref<4x9x9x128xbf16, #tpu.memory_space<vmem>>, vector<1x8x8x2xbf16>
    %44 = vector.shape_cast %43 : vector<1x8x8x2xbf16> to vector<8x8x2xbf16>
    %45 = vector.shape_cast %44 : vector<8x8x2xbf16> to vector<64x2xbf16>
    %c6 = arith.constant 6 : index
    %c0_46 = arith.constant 0 : index
    %c0_47 = arith.constant 0 : index
    %46 = vector.load %arg2[%c6, %c0_46, %c0_47] : memref<18x2x2xbf16, #tpu.memory_space<vmem>>, vector<1x2x2xbf16>
    %47 = vector.shape_cast %46 : vector<1x2x2xbf16> to vector<2x2xbf16>
    %cst_48 = arith.constant dense<0.000000e+00> : vector<64x2xf32>
    %48 = tpu.matmul %45, %47, %cst_48 {dimension_numbers = #tpu.dot_dimension_numbers<[1], [0], [0], [1], [0, 0, 1, 1], [], []>} : vector<64x2xbf16>, vector<2x2xbf16>, vector<64x2xf32> -> vector<64x2xf32>
    %49 = arith.addf %42, %48 : vector<64x2xf32>
    %c1_49 = arith.constant 1 : index
    %c1_50 = arith.constant 1 : index
    %c0_51 = arith.constant 0 : index
    %c0_52 = arith.constant 0 : index
    %50 = vector.load %arg1[%c1_49, %c1_50, %c0_51, %c0_52] : memref<4x9x9x128xbf16, #tpu.memory_space<vmem>>, vector<1x8x8x2xbf16>
    %51 = vector.shape_cast %50 : vector<1x8x8x2xbf16> to vector<8x8x2xbf16>
    %52 = vector.shape_cast %51 : vector<8x8x2xbf16> to vector<64x2xbf16>
    %c7 = arith.constant 7 : index
    %c0_53 = arith.constant 0 : index
    %c0_54 = arith.constant 0 : index
    %53 = vector.load %arg2[%c7, %c0_53, %c0_54] : memref<18x2x2xbf16, #tpu.memory_space<vmem>>, vector<1x2x2xbf16>
    %54 = vector.shape_cast %53 : vector<1x2x2xbf16> to vector<2x2xbf16>
    %cst_55 = arith.constant dense<0.000000e+00> : vector<64x2xf32>
    %55 = tpu.matmul %52, %54, %cst_55 {dimension_numbers = #tpu.dot_dimension_numbers<[1], [0], [0], [1], [0, 0, 1, 1], [], []>} : vector<64x2xbf16>, vector<2x2xbf16>, vector<64x2xf32> -> vector<64x2xf32>
    %56 = arith.addf %49, %55 : vector<64x2xf32>
    %c0_56 = arith.constant 0 : index
    %c1_57 = arith.constant 1 : index
    %c1_58 = arith.constant 1 : index
    %c0_59 = arith.constant 0 : index
    %57 = vector.load %arg1[%c0_56, %c1_57, %c1_58, %c0_59] : memref<4x9x9x128xbf16, #tpu.memory_space<vmem>>, vector<1x8x8x2xbf16>
    %58 = vector.shape_cast %57 : vector<1x8x8x2xbf16> to vector<8x8x2xbf16>
    %59 = vector.shape_cast %58 : vector<8x8x2xbf16> to vector<64x2xbf16>
    %c8 = arith.constant 8 : index
    %c0_60 = arith.constant 0 : index
    %c0_61 = arith.constant 0 : index
    %60 = vector.load %arg2[%c8, %c0_60, %c0_61] : memref<18x2x2xbf16, #tpu.memory_space<vmem>>, vector<1x2x2xbf16>
    %61 = vector.shape_cast %60 : vector<1x2x2xbf16> to vector<2x2xbf16>
    %cst_62 = arith.constant dense<0.000000e+00> : vector<64x2xf32>
    %62 = tpu.matmul %59, %61, %cst_62 {dimension_numbers = #tpu.dot_dimension_numbers<[1], [0], [0], [1], [0, 0, 1, 1], [], []>} : vector<64x2xbf16>, vector<2x2xbf16>, vector<64x2xf32> -> vector<64x2xf32>
    %63 = arith.addf %56, %62 : vector<64x2xf32>
    %cst_63 = arith.constant 0.000000e+00 : f32
    %64 = vector.broadcast %cst_63 : f32 to vector<64x2xf32>
    %c0_64 = arith.constant 0 : index
    %c0_65 = arith.constant 0 : index
    %c0_66 = arith.constant 0 : index
    %c2_67 = arith.constant 2 : index
    %65 = vector.load %arg1[%c0_64, %c0_65, %c0_66, %c2_67] : memref<4x9x9x128xbf16, #tpu.memory_space<vmem>>, vector<1x8x8x2xbf16>
    %66 = vector.shape_cast %65 : vector<1x8x8x2xbf16> to vector<8x8x2xbf16>
    %67 = vector.shape_cast %66 : vector<8x8x2xbf16> to vector<64x2xbf16>
    %c9 = arith.constant 9 : index
    %c0_68 = arith.constant 0 : index
    %c0_69 = arith.constant 0 : index
    %68 = vector.load %arg2[%c9, %c0_68, %c0_69] : memref<18x2x2xbf16, #tpu.memory_space<vmem>>, vector<1x2x2xbf16>
    %69 = vector.shape_cast %68 : vector<1x2x2xbf16> to vector<2x2xbf16>
    %cst_70 = arith.constant dense<0.000000e+00> : vector<64x2xf32>
    %70 = tpu.matmul %67, %69, %cst_70 {dimension_numbers = #tpu.dot_dimension_numbers<[1], [0], [0], [1], [0, 0, 1, 1], [], []>} : vector<64x2xbf16>, vector<2x2xbf16>, vector<64x2xf32> -> vector<64x2xf32>
    %71 = arith.addf %64, %70 : vector<64x2xf32>
    %c1_71 = arith.constant 1 : index
    %c0_72 = arith.constant 0 : index
    %c0_73 = arith.constant 0 : index
    %c2_74 = arith.constant 2 : index
    %72 = vector.load %arg1[%c1_71, %c0_72, %c0_73, %c2_74] : memref<4x9x9x128xbf16, #tpu.memory_space<vmem>>, vector<1x8x8x2xbf16>
    %73 = vector.shape_cast %72 : vector<1x8x8x2xbf16> to vector<8x8x2xbf16>
    %74 = vector.shape_cast %73 : vector<8x8x2xbf16> to vector<64x2xbf16>
    %c10 = arith.constant 10 : index
    %c0_75 = arith.constant 0 : index
    %c0_76 = arith.constant 0 : index
    %75 = vector.load %arg2[%c10, %c0_75, %c0_76] : memref<18x2x2xbf16, #tpu.memory_space<vmem>>, vector<1x2x2xbf16>
    %76 = vector.shape_cast %75 : vector<1x2x2xbf16> to vector<2x2xbf16>
    %cst_77 = arith.constant dense<0.000000e+00> : vector<64x2xf32>
    %77 = tpu.matmul %74, %76, %cst_77 {dimension_numbers = #tpu.dot_dimension_numbers<[1], [0], [0], [1], [0, 0, 1, 1], [], []>} : vector<64x2xbf16>, vector<2x2xbf16>, vector<64x2xf32> -> vector<64x2xf32>
    %78 = arith.addf %71, %77 : vector<64x2xf32>
    %c0_78 = arith.constant 0 : index
    %c0_79 = arith.constant 0 : index
    %c1_80 = arith.constant 1 : index
    %c2_81 = arith.constant 2 : index
    %79 = vector.load %arg1[%c0_78, %c0_79, %c1_80, %c2_81] : memref<4x9x9x128xbf16, #tpu.memory_space<vmem>>, vector<1x8x8x2xbf16>
    %80 = vector.shape_cast %79 : vector<1x8x8x2xbf16> to vector<8x8x2xbf16>
    %81 = vector.shape_cast %80 : vector<8x8x2xbf16> to vector<64x2xbf16>
    %c11 = arith.constant 11 : index
    %c0_82 = arith.constant 0 : index
    %c0_83 = arith.constant 0 : index
    %82 = vector.load %arg2[%c11, %c0_82, %c0_83] : memref<18x2x2xbf16, #tpu.memory_space<vmem>>, vector<1x2x2xbf16>
    %83 = vector.shape_cast %82 : vector<1x2x2xbf16> to vector<2x2xbf16>
    %cst_84 = arith.constant dense<0.000000e+00> : vector<64x2xf32>
    %84 = tpu.matmul %81, %83, %cst_84 {dimension_numbers = #tpu.dot_dimension_numbers<[1], [0], [0], [1], [0, 0, 1, 1], [], []>} : vector<64x2xbf16>, vector<2x2xbf16>, vector<64x2xf32> -> vector<64x2xf32>
    %85 = arith.addf %78, %84 : vector<64x2xf32>
    %c2_85 = arith.constant 2 : index
    %c0_86 = arith.constant 0 : index
    %c0_87 = arith.constant 0 : index
    %c2_88 = arith.constant 2 : index
    %86 = vector.load %arg1[%c2_85, %c0_86, %c0_87, %c2_88] : memref<4x9x9x128xbf16, #tpu.memory_space<vmem>>, vector<1x8x8x2xbf16>
    %87 = vector.shape_cast %86 : vector<1x8x8x2xbf16> to vector<8x8x2xbf16>
    %88 = vector.shape_cast %87 : vector<8x8x2xbf16> to vector<64x2xbf16>
    %c12 = arith.constant 12 : index
    %c0_89 = arith.constant 0 : index
    %c0_90 = arith.constant 0 : index
    %89 = vector.load %arg2[%c12, %c0_89, %c0_90] : memref<18x2x2xbf16, #tpu.memory_space<vmem>>, vector<1x2x2xbf16>
    %90 = vector.shape_cast %89 : vector<1x2x2xbf16> to vector<2x2xbf16>
    %cst_91 = arith.constant dense<0.000000e+00> : vector<64x2xf32>
    %91 = tpu.matmul %88, %90, %cst_91 {dimension_numbers = #tpu.dot_dimension_numbers<[1], [0], [0], [1], [0, 0, 1, 1], [], []>} : vector<64x2xbf16>, vector<2x2xbf16>, vector<64x2xf32> -> vector<64x2xf32>
    %92 = arith.addf %85, %91 : vector<64x2xf32>
    %c3_92 = arith.constant 3 : index
    %c0_93 = arith.constant 0 : index
    %c0_94 = arith.constant 0 : index
    %c2_95 = arith.constant 2 : index
    %93 = vector.load %arg1[%c3_92, %c0_93, %c0_94, %c2_95] : memref<4x9x9x128xbf16, #tpu.memory_space<vmem>>, vector<1x8x8x2xbf16>
    %94 = vector.shape_cast %93 : vector<1x8x8x2xbf16> to vector<8x8x2xbf16>
    %95 = vector.shape_cast %94 : vector<8x8x2xbf16> to vector<64x2xbf16>
    %c13 = arith.constant 13 : index
    %c0_96 = arith.constant 0 : index
    %c0_97 = arith.constant 0 : index
    %96 = vector.load %arg2[%c13, %c0_96, %c0_97] : memref<18x2x2xbf16, #tpu.memory_space<vmem>>, vector<1x2x2xbf16>
    %97 = vector.shape_cast %96 : vector<1x2x2xbf16> to vector<2x2xbf16>
    %cst_98 = arith.constant dense<0.000000e+00> : vector<64x2xf32>
    %98 = tpu.matmul %95, %97, %cst_98 {dimension_numbers = #tpu.dot_dimension_numbers<[1], [0], [0], [1], [0, 0, 1, 1], [], []>} : vector<64x2xbf16>, vector<2x2xbf16>, vector<64x2xf32> -> vector<64x2xf32>
    %99 = arith.addf %92, %98 : vector<64x2xf32>
    %c2_99 = arith.constant 2 : index
    %c0_100 = arith.constant 0 : index
    %c1_101 = arith.constant 1 : index
    %c2_102 = arith.constant 2 : index
    %100 = vector.load %arg1[%c2_99, %c0_100, %c1_101, %c2_102] : memref<4x9x9x128xbf16, #tpu.memory_space<vmem>>, vector<1x8x8x2xbf16>
    %101 = vector.shape_cast %100 : vector<1x8x8x2xbf16> to vector<8x8x2xbf16>
    %102 = vector.shape_cast %101 : vector<8x8x2xbf16> to vector<64x2xbf16>
    %c14 = arith.constant 14 : index
    %c0_103 = arith.constant 0 : index
    %c0_104 = arith.constant 0 : index
    %103 = vector.load %arg2[%c14, %c0_103, %c0_104] : memref<18x2x2xbf16, #tpu.memory_space<vmem>>, vector<1x2x2xbf16>
    %104 = vector.shape_cast %103 : vector<1x2x2xbf16> to vector<2x2xbf16>
    %cst_105 = arith.constant dense<0.000000e+00> : vector<64x2xf32>
    %105 = tpu.matmul %102, %104, %cst_105 {dimension_numbers = #tpu.dot_dimension_numbers<[1], [0], [0], [1], [0, 0, 1, 1], [], []>} : vector<64x2xbf16>, vector<2x2xbf16>, vector<64x2xf32> -> vector<64x2xf32>
    %106 = arith.addf %99, %105 : vector<64x2xf32>
    %c0_106 = arith.constant 0 : index
    %c1_107 = arith.constant 1 : index
    %c0_108 = arith.constant 0 : index
    %c2_109 = arith.constant 2 : index
    %107 = vector.load %arg1[%c0_106, %c1_107, %c0_108, %c2_109] : memref<4x9x9x128xbf16, #tpu.memory_space<vmem>>, vector<1x8x8x2xbf16>
    %108 = vector.shape_cast %107 : vector<1x8x8x2xbf16> to vector<8x8x2xbf16>
    %109 = vector.shape_cast %108 : vector<8x8x2xbf16> to vector<64x2xbf16>
    %c15 = arith.constant 15 : index
    %c0_110 = arith.constant 0 : index
    %c0_111 = arith.constant 0 : index
    %110 = vector.load %arg2[%c15, %c0_110, %c0_111] : memref<18x2x2xbf16, #tpu.memory_space<vmem>>, vector<1x2x2xbf16>
    %111 = vector.shape_cast %110 : vector<1x2x2xbf16> to vector<2x2xbf16>
    %cst_112 = arith.constant dense<0.000000e+00> : vector<64x2xf32>
    %112 = tpu.matmul %109, %111, %cst_112 {dimension_numbers = #tpu.dot_dimension_numbers<[1], [0], [0], [1], [0, 0, 1, 1], [], []>} : vector<64x2xbf16>, vector<2x2xbf16>, vector<64x2xf32> -> vector<64x2xf32>
    %113 = arith.addf %106, %112 : vector<64x2xf32>
    %c1_113 = arith.constant 1 : index
    %c1_114 = arith.constant 1 : index
    %c0_115 = arith.constant 0 : index
    %c2_116 = arith.constant 2 : index
    %114 = vector.load %arg1[%c1_113, %c1_114, %c0_115, %c2_116] : memref<4x9x9x128xbf16, #tpu.memory_space<vmem>>, vector<1x8x8x2xbf16>
    %115 = vector.shape_cast %114 : vector<1x8x8x2xbf16> to vector<8x8x2xbf16>
    %116 = vector.shape_cast %115 : vector<8x8x2xbf16> to vector<64x2xbf16>
    %c16 = arith.constant 16 : index
    %c0_117 = arith.constant 0 : index
    %c0_118 = arith.constant 0 : index
    %117 = vector.load %arg2[%c16, %c0_117, %c0_118] : memref<18x2x2xbf16, #tpu.memory_space<vmem>>, vector<1x2x2xbf16>
    %118 = vector.shape_cast %117 : vector<1x2x2xbf16> to vector<2x2xbf16>
    %cst_119 = arith.constant dense<0.000000e+00> : vector<64x2xf32>
    %119 = tpu.matmul %116, %118, %cst_119 {dimension_numbers = #tpu.dot_dimension_numbers<[1], [0], [0], [1], [0, 0, 1, 1], [], []>} : vector<64x2xbf16>, vector<2x2xbf16>, vector<64x2xf32> -> vector<64x2xf32>
    %120 = arith.addf %113, %119 : vector<64x2xf32>
    %c0_120 = arith.constant 0 : index
    %c1_121 = arith.constant 1 : index
    %c1_122 = arith.constant 1 : index
    %c2_123 = arith.constant 2 : index
    %121 = vector.load %arg1[%c0_120, %c1_121, %c1_122, %c2_123] : memref<4x9x9x128xbf16, #tpu.memory_space<vmem>>, vector<1x8x8x2xbf16>
    %122 = vector.shape_cast %121 : vector<1x8x8x2xbf16> to vector<8x8x2xbf16>
    %123 = vector.shape_cast %122 : vector<8x8x2xbf16> to vector<64x2xbf16>
    %c17 = arith.constant 17 : index
    %c0_124 = arith.constant 0 : index
    %c0_125 = arith.constant 0 : index
    %124 = vector.load %arg2[%c17, %c0_124, %c0_125] : memref<18x2x2xbf16, #tpu.memory_space<vmem>>, vector<1x2x2xbf16>
    %125 = vector.shape_cast %124 : vector<1x2x2xbf16> to vector<2x2xbf16>
    %cst_126 = arith.constant dense<0.000000e+00> : vector<64x2xf32>
    %126 = tpu.matmul %123, %125, %cst_126 {dimension_numbers = #tpu.dot_dimension_numbers<[1], [0], [0], [1], [0, 0, 1, 1], [], []>} : vector<64x2xbf16>, vector<2x2xbf16>, vector<64x2xf32> -> vector<64x2xf32>
    %127 = arith.addf %120, %126 : vector<64x2xf32>
    %128 = tpu.concatenate %63, %127 in 1 : vector<64x2xf32>, vector<64x2xf32> -> vector<64x4xf32>
    %c0_127 = arith.constant 0 : index
    %c0_128 = arith.constant 0 : index
    %129 = vector.load %arg3[%c0_127, %c0_128] : memref<1x4xf32, #tpu.memory_space<vmem>>, vector<1x4xf32>
    %130 = vector.broadcast %129 : vector<1x4xf32> to vector<64x4xf32>
    %131 = arith.addf %128, %130 : vector<64x4xf32>
    %cst_129 = arith.constant 0.000000e+00 : f32
    %132 = vector.broadcast %cst_129 : f32 to vector<64x4xf32>
    %133 = arith.maximumf %131, %132 : vector<64x4xf32>
    %cst_130 = arith.constant 0.000000e+00 : f32
    %134 = vector.broadcast %cst_130 : f32 to vector<64x124xf32>
    %135 = tpu.concatenate %133, %134 in 1 : vector<64x4xf32>, vector<64x124xf32> -> vector<64x128xf32>
    %136 = arith.truncf %135 : vector<64x128xf32> to vector<64x128xbf16>
    %c0_131 = arith.constant 0 : index
    %c0_132 = arith.constant 0 : index
    %c0_133 = arith.constant 0 : index
    %137 = vector.load %arg4[%c0_131, %c0_132, %c0_133] : memref<1x64x128xbf16, #tpu.memory_space<vmem>>, vector<1x64x128xbf16>
    %138 = vector.shape_cast %137 : vector<1x64x128xbf16> to vector<64x128xbf16>
    %139 = vector.shape_cast %136 : vector<64x128xbf16> to vector<1x64x128xbf16>
    tpu.vector_store %arg4[%c0_131, %c0_132, %c0_133], %139 {strides = array<i32>} : memref<1x64x128xbf16, #tpu.memory_space<vmem>>, vector<1x64x128xbf16>,
    return
  }
  func.func @transform_0(%arg0: i32) -> (i32, i32, i32, i32) {
    %c0_i32 = arith.constant 0 : i32
    %c0_i32_0 = arith.constant 0 : i32
    %c0_i32_1 = arith.constant 0 : i32
    %c0_i32_2 = arith.constant 0 : i32
    return %arg0, %c0_i32, %c0_i32_0, %c0_i32_1 : i32, i32, i32, i32
  }
  func.func @transform_1(%arg0: i32) -> (i32, i32, i32) {
    %c0_i32 = arith.constant 0 : i32
    %c0_i32_0 = arith.constant 0 : i32
    %c0_i32_1 = arith.constant 0 : i32
    %c0_i32_2 = arith.constant 0 : i32
    return %c0_i32, %c0_i32_0, %c0_i32_1 : i32, i32, i32
  }
  func.func @transform_2(%arg0: i32) -> (i32, i32) {
    %c0_i32 = arith.constant 0 : i32
    %c0_i32_0 = arith.constant 0 : i32
    %c0_i32_1 = arith.constant 0 : i32
    return %c0_i32, %c0_i32_0 : i32, i32
  }
  func.func @transform_3(%arg0: i32) -> (i32, i32, i32) {
    %c0_i32 = arith.constant 0 : i32
    %c0_i32_0 = arith.constant 0 : i32
    %c0_i32_1 = arith.constant 0 : i32
    return %arg0, %c0_i32, %c0_i32_0 : i32, i32, i32
  }
}

module attributes {stable_mosaic.version = 11 : i64} {
  func.func @_matmul_bias_act_kernel(%arg0: i32, %arg1: memref<128x4xbf16, #tpu.memory_space<vmem>>, %arg2: memref<4x128xbf16, #tpu.memory_space<vmem>>, %arg3: memref<1x128xf32, #tpu.memory_space<vmem>>, %arg4: memref<128x128xbf16, #tpu.memory_space<vmem>>) attributes {dimension_semantics = [#tpu.dimension_semantics<parallel>], iteration_bounds = array<i64: 1>, scalar_prefetch = 0 : i64, scratch_operands = 0 : i64, tpu.core_type = #tpu.core_type<tc>, window_params = [{transform_indices = @transform_0, window_bounds = array<i64: 128, 4>}, {pipeline_mode = #tpu.pipeline_mode<synchronous>, transform_indices = @transform_1, window_bounds = array<i64: 4, 128>}, {pipeline_mode = #tpu.pipeline_mode<synchronous>, transform_indices = @transform_2, window_bounds = array<i64: 1, 128>}, {transform_indices = @transform_3, window_bounds = array<i64: 128, 128>}]} {
    %c0 = arith.constant 0 : index
    %c0_0 = arith.constant 0 : index
    %0 = vector.load %arg1[%c0, %c0_0] : memref<128x4xbf16, #tpu.memory_space<vmem>>, vector<128x4xbf16>
    %c0_1 = arith.constant 0 : index
    %c0_2 = arith.constant 0 : index
    %1 = vector.load %arg2[%c0_1, %c0_2] : memref<4x128xbf16, #tpu.memory_space<vmem>>, vector<4x128xbf16>
    %cst = arith.constant dense<0.000000e+00> : vector<128x128xf32>
    %2 = tpu.matmul %0, %1, %cst {dimension_numbers = #tpu.dot_dimension_numbers<[1], [0], [0], [1], [0, 0, 1, 1], [], []>} : vector<128x4xbf16>, vector<4x128xbf16>, vector<128x128xf32> -> vector<128x128xf32>
    %c0_3 = arith.constant 0 : index
    %c0_4 = arith.constant 0 : index
    %3 = vector.load %arg3[%c0_3, %c0_4] : memref<1x128xf32, #tpu.memory_space<vmem>>, vector<1x128xf32>
    %4 = vector.broadcast %3 : vector<1x128xf32> to vector<128x128xf32>
    %5 = arith.addf %2, %4 : vector<128x128xf32>
    %6 = arith.truncf %5 : vector<128x128xf32> to vector<128x128xbf16>
    %c0_5 = arith.constant 0 : index
    %c0_6 = arith.constant 0 : index
    %7 = vector.load %arg4[%c0_5, %c0_6] : memref<128x128xbf16, #tpu.memory_space<vmem>>, vector<128x128xbf16>
    tpu.vector_store %arg4[%c0_5, %c0_6], %6 {strides = array<i32>} : memref<128x128xbf16, #tpu.memory_space<vmem>>, vector<128x128xbf16>,
    return
  }
  func.func @transform_0(%arg0: i32) -> (i32, i32) {
    %c0_i32 = arith.constant 0 : i32
    %c0_i32_0 = arith.constant 0 : i32
    return %arg0, %c0_i32 : i32, i32
  }
  func.func @transform_1(%arg0: i32) -> (i32, i32) {
    %c0_i32 = arith.constant 0 : i32
    %c0_i32_0 = arith.constant 0 : i32
    %c0_i32_1 = arith.constant 0 : i32
    return %c0_i32, %c0_i32_0 : i32, i32
  }
  func.func @transform_2(%arg0: i32) -> (i32, i32) {
    %c0_i32 = arith.constant 0 : i32
    %c0_i32_0 = arith.constant 0 : i32
    %c0_i32_1 = arith.constant 0 : i32
    return %c0_i32, %c0_i32_0 : i32, i32
  }
  func.func @transform_3(%arg0: i32) -> (i32, i32) {
    %c0_i32 = arith.constant 0 : i32
    %c0_i32_0 = arith.constant 0 : i32
    return %arg0, %c0_i32 : i32, i32
  }
}

module attributes {stable_mosaic.version = 11 : i64} {
  func.func @_matmul_bias_add_relu_kernel(%arg0: i32, %arg1: memref<128x128xbf16, #tpu.memory_space<vmem>>, %arg2: memref<128x128xbf16, #tpu.memory_space<vmem>>, %arg3: memref<1x128xf32, #tpu.memory_space<vmem>>, %arg4: memref<128x128xbf16, #tpu.memory_space<vmem>>, %arg5: memref<128x128xf32, #tpu.memory_space<vmem>>) attributes {dimension_semantics = [#tpu.dimension_semantics<parallel>], iteration_bounds = array<i64: 1>, scalar_prefetch = 0 : i64, scratch_operands = 0 : i64, tpu.core_type = #tpu.core_type<tc>, window_params = [{transform_indices = @transform_0, window_bounds = array<i64: 128, 128>}, {pipeline_mode = #tpu.pipeline_mode<synchronous>, transform_indices = @transform_1, window_bounds = array<i64: 128, 128>}, {pipeline_mode = #tpu.pipeline_mode<synchronous>, transform_indices = @transform_2, window_bounds = array<i64: 1, 128>}, {transform_indices = @transform_3, window_bounds = array<i64: 128, 128>}, {transform_indices = @transform_4, window_bounds = array<i64: 128, 128>}]} {
    %c0 = arith.constant 0 : index
    %c0_0 = arith.constant 0 : index
    %0 = vector.load %arg1[%c0, %c0_0] : memref<128x128xbf16, #tpu.memory_space<vmem>>, vector<128x128xbf16>
    %c0_1 = arith.constant 0 : index
    %c0_2 = arith.constant 0 : index
    %1 = vector.load %arg2[%c0_1, %c0_2] : memref<128x128xbf16, #tpu.memory_space<vmem>>, vector<128x128xbf16>
    %cst = arith.constant dense<0.000000e+00> : vector<128x128xf32>
    %2 = tpu.matmul %0, %1, %cst {dimension_numbers = #tpu.dot_dimension_numbers<[1], [0], [0], [1], [0, 0, 1, 1], [], []>} : vector<128x128xbf16>, vector<128x128xbf16>, vector<128x128xf32> -> vector<128x128xf32>
    %c0_3 = arith.constant 0 : index
    %c0_4 = arith.constant 0 : index
    %3 = vector.load %arg3[%c0_3, %c0_4] : memref<1x128xf32, #tpu.memory_space<vmem>>, vector<1x128xf32>
    %4 = vector.broadcast %3 : vector<1x128xf32> to vector<128x128xf32>
    %5 = arith.addf %2, %4 : vector<128x128xf32>
    %c0_5 = arith.constant 0 : index
    %c0_6 = arith.constant 0 : index
    %6 = vector.load %arg4[%c0_5, %c0_6] : memref<128x128xbf16, #tpu.memory_space<vmem>>, vector<128x128xbf16>
    %7 = arith.extf %6 : vector<128x128xbf16> to vector<128x128xf32>
    %8 = arith.addf %5, %7 : vector<128x128xf32>
    %cst_7 = arith.constant 0.000000e+00 : f32
    %9 = vector.broadcast %cst_7 : f32 to vector<128x128xf32>
    %10 = arith.maximumf %8, %9 : vector<128x128xf32>
    %c0_8 = arith.constant 0 : index
    %c0_9 = arith.constant 0 : index
    %11 = vector.load %arg5[%c0_8, %c0_9] : memref<128x128xf32, #tpu.memory_space<vmem>>, vector<128x128xf32>
    tpu.vector_store %arg5[%c0_8, %c0_9], %10 {strides = array<i32>} : memref<128x128xf32, #tpu.memory_space<vmem>>, vector<128x128xf32>,
    return
  }
  func.func @transform_0(%arg0: i32) -> (i32, i32) {
    %c0_i32 = arith.constant 0 : i32
    %c0_i32_0 = arith.constant 0 : i32
    return %arg0, %c0_i32 : i32, i32
  }
  func.func @transform_1(%arg0: i32) -> (i32, i32) {
    %c0_i32 = arith.constant 0 : i32
    %c0_i32_0 = arith.constant 0 : i32
    %c0_i32_1 = arith.constant 0 : i32
    return %c0_i32, %c0_i32_0 : i32, i32
  }
  func.func @transform_2(%arg0: i32) -> (i32, i32) {
    %c0_i32 = arith.constant 0 : i32
    %c0_i32_0 = arith.constant 0 : i32
    %c0_i32_1 = arith.constant 0 : i32
    return %c0_i32, %c0_i32_0 : i32, i32
  }
  func.func @transform_3(%arg0: i32) -> (i32, i32) {
    %c0_i32 = arith.constant 0 : i32
    %c0_i32_0 = arith.constant 0 : i32
    return %arg0, %c0_i32 : i32, i32
  }
  func.func @transform_4(%arg0: i32) -> (i32, i32) {
    %c0_i32 = arith.constant 0 : i32
    %c0_i32_0 = arith.constant 0 : i32
    return %arg0, %c0_i32 : i32, i32
  }
}

</mosaic_0001>

<llo_original>
// kernel: resnext_block_forward.4
$region0: #{resnext_block_forward.4}
  #allocation0 [shape = 'u32[]', space=smem, size = 0x4, offset = 0x4, fixed_abs, tag = 'smem constant byte address 0x4 - core index']
  #allocation1 [shape = 'u32[144,128]{1,0:T(1,128)}', space=vmem, size = 0x12000, scoped, tag = 'internal scratch']
  %s0 = inlined_call_operand.vmem [shape: bf16[512,4], index: 0, kind: input, shape index: {}]
  %s1 = inlined_call_operand.vmem [shape: bf16[4,128], index: 1, kind: input, shape index: {}]
  %s2 = inlined_call_operand.vmem [shape: f32[1,128], index: 2, kind: input, shape index: {}]
  %s3 = inlined_call_operand.vmem [shape: bf16[512,128], index: 3, kind: output, shape index: {}]
  %s4 = sld [smem:[#allocation0]]
  $region45: #{resnext_block_forward.4} parent=0
    _
  %s6 = ssub.s32 1, %s4
  %s7 = scalar_select 0, %s6, %s4
  loop: start=0, step=1, limit=4
  $region2: #{resnext_block_forward.4} parent=0 // loop_pre_header
    _
  $region3: #{resnext_block_forward.4} parent=0 // loop_header
    %s9 = sphi 0, %s13
    %p10 = scmp.ge.s32.totalorder %s9, 4
    %s19 = sphi 0, %s21
    %s22 = sphi 0, %s19
    %s23 = sphi 0, %s22
    %s39 = sphi 0, %s23
    %s43 = sphi 0, %s43
    %s45 = sphi 0, %s43
    %s46 = sphi 0, %s45
    %s60 = sphi 0, %s46
    %s64 = sphi 0, %s64
    %s66 = sphi 0, %s64
    %s67 = sphi 0, %s66
    %s81 = sphi 0, %s67
    %s87 = sphi 0, %s89
    %s90 = sphi 0, %s87
    %s91 = sphi 0, %s90
    %s107 = sphi 0, %s91
  $region4: #{resnext_block_forward.4} parent=0 // loop_header_branch
    %12 = sbr.rel (%p10) target = $region8
  $region5: #{resnext_block_forward.4} parent=0 // loop_body
    %s14 = ssub.s32 %s9, 1
    %s15 = ssub.s32 %s9, 2
    %s16 = sadd.s32 %s9, 1
    %s17 = ssub.s32 %s9, %s16
    %p18 = scmp.eq.s32.totalorder %s17, 0
    %s20 = sadd.s32 %s19, 1
    %s21 = scalar_select %p18, %s19, %s20
    %p24 = pneg %p18
    %p25 = scmp.eq.s32.totalorder %s9, 1
    %p26 = por %p24, %p25
    %p27 = scmp.ne.s32.totalorder %s19, %s22
    %p28 = scmp.eq.s32.totalorder %s9, 0
    %p29 = por %p27, %p28
    %p30 = scmp.ne.s32.totalorder %s19, %s22
    %p31 = scmp.eq.s32.totalorder %s14, 1
    %p32 = por %p30, %p31
    %p33 = scmp.ne.s32.totalorder %s22, %s23
    %p34 = scmp.eq.s32.totalorder %s14, 0
    %p35 = por %p33, %p34
    %p36 = scmp.ne.s32.totalorder %s22, %s23
    %p37 = scmp.eq.s32.totalorder %s15, 1
    %p38 = por %p36, %p37
    %p40 = scmp.ne.s32.totalorder %s23, %s39
    %p41 = scmp.eq.s32.totalorder %s15, 0
    %p42 = por %p40, %p41
    %s44 = sadd.s32 %s43, 1
    %p47 = scmp.eq.s32.totalorder %s9, 1
    %p48 = scmp.ne.s32.totalorder %s43, %s45
    %p49 = scmp.eq.s32.totalorder %s9, 0
    %p50 = por %p48, %p49
    %p51 = scmp.ne.s32.totalorder %s43, %s45
    %p52 = scmp.eq.s32.totalorder %s14, 1
    %p53 = por %p51, %p52
    %p54 = scmp.ne.s32.totalorder %s45, %s46
    %p55 = scmp.eq.s32.totalorder %s14, 0
    %p56 = por %p54, %p55
    %p57 = scmp.ne.s32.totalorder %s45, %s46
    %p58 = scmp.eq.s32.totalorder %s15, 1
    %p59 = por %p57, %p58
    %p61 = scmp.ne.s32.totalorder %s46, %s60
    %p62 = scmp.eq.s32.totalorder %s15, 0
    %p63 = por %p61, %p62
    %s65 = sadd.s32 %s64, 1
    %p68 = scmp.eq.s32.totalorder %s9, 1
    %p69 = scmp.ne.s32.totalorder %s64, %s66
    %p70 = scmp.eq.s32.totalorder %s9, 0
    %p71 = por %p69, %p70
    %p72 = scmp.ne.s32.totalorder %s64, %s66
    %p73 = scmp.eq.s32.totalorder %s14, 1
    %p74 = por %p72, %p73
    %p75 = scmp.ne.s32.totalorder %s66, %s67
    %p76 = scmp.eq.s32.totalorder %s14, 0
    %p77 = por %p75, %p76
    %p78 = scmp.ne.s32.totalorder %s66, %s67
    %p79 = scmp.eq.s32.totalorder %s15, 1
    %p80 = por %p78, %p79
    %p82 = scmp.ne.s32.totalorder %s67, %s81
    %p83 = scmp.eq.s32.totalorder %s15, 0
    %p84 = por %p82, %p83
    %s85 = ssub.s32 %s9, %s16
    %p86 = scmp.eq.s32.totalorder %s85, 0
    %s88 = sadd.s32 %s87, 1
    %s89 = scalar_select %p86, %s87, %s88
    %p92 = pneg %p86
    %p93 = scmp.eq.s32.totalorder %s9, 1
    %p94 = por %p92, %p93
    %p95 = scmp.ne.s32.totalorder %s87, %s90
    %p96 = scmp.eq.s32.totalorder %s9, 0
    %p97 = por %p95, %p96
    %p98 = scmp.ne.s32.totalorder %s87, %s90
    %p99 = scmp.eq.s32.totalorder %s14, 1
    %p100 = por %p98, %p99
    %p101 = scmp.ne.s32.totalorder %s90, %s91
    %p102 = scmp.eq.s32.totalorder %s14, 0
    %p103 = por %p101, %p102
    %p104 = scmp.ne.s32.totalorder %s90, %s91
    %p105 = scmp.eq.s32.totalorder %s15, 1
    %p106 = por %p104, %p105
    %p108 = scmp.ne.s32.totalorder %s91, %s107
    %p109 = scmp.eq.s32.totalorder %s15, 0
    %p110 = por %p108, %p109
    %p111 = scmp.le.s32.totalorder 1, %s9
    %p112 = scmp.lt.s32.totalorder %s9, 3
    %p113 = pnand %p111, %p112
    %p114 = pneg %p113
    // Predicated region
    $region9: #{resnext_block_forward.4} parent=5 // pred_check
      _
    $region10: #{resnext_block_forward.4} parent=5 // pred_check_branch
      %116 = sbr.rel (%p113) target = $region12
    $region11: #{resnext_block_forward.4} parent=5 // pred_region
      %s117 = ssub.s32 %s9, 1
      // Predicated region
      $region13: #{resnext_block_forward.4} parent=11 // pred_check
        %p118 = pneg %p56
      $region14: #{resnext_block_forward.4} parent=11 // pred_check_branch
        %120 = sbr.rel (%p118) target = $region16
      $region15: #{resnext_block_forward.4} parent=11 // pred_region
        _
      $region16: #{resnext_block_forward.4} parent=11 // pred_fallthru
        _
      // Predicated region
      $region17: #{resnext_block_forward.4} parent=11 // pred_check
        %p121 = pneg %p77
      $region18: #{resnext_block_forward.4} parent=11 // pred_check_branch
        %123 = sbr.rel (%p121) target = $region20
      $region19: #{resnext_block_forward.4} parent=11 // pred_region
        _
      $region20: #{resnext_block_forward.4} parent=11 // pred_fallthru
        _
    $region12: #{resnext_block_forward.4} parent=5 // pred_fallthru
      _
    %p124 = scmp.lt.s32.totalorder %s9, 2
    // Predicated region
    $region21: #{resnext_block_forward.4} parent=5 // pred_check
      %p125 = pneg %p124
    $region22: #{resnext_block_forward.4} parent=5 // pred_check_branch
      %127 = sbr.rel (%p125) target = $region24
    $region23: #{resnext_block_forward.4} parent=5 // pred_region
      // Predicated region
      $region25: #{resnext_block_forward.4} parent=23 // pred_check
        %p128 = pneg %p29
      $region26: #{resnext_block_forward.4} parent=23 // pred_check_branch
        %130 = sbr.rel (%p128) target = $region28
      $region27: #{resnext_block_forward.4} parent=23 // pred_region
        %s131 = smul.u32 32, %s9
        %p132 = scmp.lt.s32.totalorder %s131, 63
        %s133 = scalar_select %p132, %s131, 63
        %s134 = smul.addr %s133, 4
        %s135 = scalar_lea.vmem %s0, %s134
        %s136 = smul.u32 32, %s9
      $region28: #{resnext_block_forward.4} parent=23 // pred_fallthru
        _
    $region24: #{resnext_block_forward.4} parent=5 // pred_fallthru
      _
    %p137 = scmp.le.s32.totalorder 1, %s9
    %p138 = scmp.lt.s32.totalorder %s9, 3
    %p139 = pnand %p137, %p138
    %p140 = pneg %p139
    // Predicated region
    $region29: #{resnext_block_forward.4} parent=5 // pred_check
      _
    $region30: #{resnext_block_forward.4} parent=5 // pred_check_branch
      %142 = sbr.rel (%p139) target = $region32
    $region31: #{resnext_block_forward.4} parent=5 // pred_region
      %s143 = ssub.s32 %s9, 1
      %s144 = smul.u32 32, %s14
      %p145 = scmp.lt.s32.totalorder %s144, 63
      %s146 = scalar_select %p145, %s144, 63
      %s147 = smul.addr %s146, 4
      %s148 = scalar_lea.vmem %s0, %s147
      %p149 = pneg %p35
      %p150 = pneg %p32
      %p151 = pneg %p56
      %p152 = pneg %p53
      %p153 = pneg %p77
      %p154 = pneg %p74
      %p155 = pneg %p103
      %p156 = pneg %p100
      %s157 = smul.u32 32, %s14
      %p158 = scmp.lt.s32.totalorder %s157, 63
      %s159 = scalar_select %p158, %s157, 63
      %s160 = smul.addr %s159, 4
      %s161 = scalar_lea.vmem %s3, %s160
      %s162 = smul.u32 32, %s14
      %p163 = scmp.lt.s32.totalorder %s162, 63
      %s164 = scalar_select %p163, %s162, 63
      %s165 = smul.addr %s164, 4
      %s166 = scalar_lea.vmem %s0, %s165
      %s167 = smul.u32 32, %s14
      %s168 = smul.u32 32, %s14
      %p169 = scmp.lt.s32.totalorder %s168, 63
      %s170 = scalar_select %p169, %s168, 63
      %s171 = smul.addr %s170, 4
      %s172 = scalar_lea.vmem %s3, %s171
      %s173 = smul.u32 32, %s14
      %v175 = vld [vmem:[%s166] sm:$0xf]
      %v176 = vld [vmem:[%s166 + $0x4] sm:$0xf]
      %v177 = vld [vmem:[%s166 + $0x8] sm:$0xf]
      %v178 = vld [vmem:[%s166 + $0xc] sm:$0xf]
      %v179 = vld [vmem:[%s166 + $0x10] sm:$0xf]
      %v180 = vld [vmem:[%s166 + $0x14] sm:$0xf]
      %v181 = vld [vmem:[%s166 + $0x18] sm:$0xf]
      %v182 = vld [vmem:[%s166 + $0x1c] sm:$0xf]
      %v183 = vld [vmem:[%s166 + $0x20] sm:$0xf]
      %v184 = vld [vmem:[%s166 + $0x24] sm:$0xf]
      %v185 = vld [vmem:[%s166 + $0x28] sm:$0xf]
      %v186 = vld [vmem:[%s166 + $0x2c] sm:$0xf]
      %v187 = vld [vmem:[%s166 + $0x30] sm:$0xf]
      %v188 = vld [vmem:[%s166 + $0x34] sm:$0xf]
      %v189 = vld [vmem:[%s166 + $0x38] sm:$0xf]
      %v190 = vld [vmem:[%s166 + $0x3c] sm:$0xf]
      %v191 = vld [vmem:[%s166 + $0x40] sm:$0xf]
      %v192 = vld [vmem:[%s166 + $0x44] sm:$0xf]
      %v193 = vld [vmem:[%s166 + $0x48] sm:$0xf]
      %v194 = vld [vmem:[%s166 + $0x4c] sm:$0xf]
      %v195 = vld [vmem:[%s166 + $0x50] sm:$0xf]
      %v196 = vld [vmem:[%s166 + $0x54] sm:$0xf]
      %v197 = vld [vmem:[%s166 + $0x58] sm:$0xf]
      %v198 = vld [vmem:[%s166 + $0x5c] sm:$0xf]
      %v199 = vld [vmem:[%s166 + $0x60] sm:$0xf]
      %v200 = vld [vmem:[%s166 + $0x64] sm:$0xf]
      %v201 = vld [vmem:[%s166 + $0x68] sm:$0xf]
      %v202 = vld [vmem:[%s166 + $0x6c] sm:$0xf]
      %v203 = vld [vmem:[%s166 + $0x70] sm:$0xf]
      %v204 = vld [vmem:[%s166 + $0x74] sm:$0xf]
      %v205 = vld [vmem:[%s166 + $0x78] sm:$0xf]
      %v206 = vld [vmem:[%s166 + $0x7c] sm:$0xf]
      %v207 = vld [vmem:[%s1] sm:$0x3]
      %v208 = vld [vmem:[%s2] sm:$0x1]
      %v210 = vlaneseq
      %v211 = vshrl.u32 %v210, 7
      %v212 = vsub.s32 0, %v211
      %v213 = vrot.slane %v208, %v212
      %v247 = vunpack.c.l.b16 %v175
      %v248 = vunpack.c.l.b16 %v176
      %v249 = vunpack.c.l.b16 %v177
      %v250 = vunpack.c.l.b16 %v178
      %v251 = vunpack.c.l.b16 %v179
      %v252 = vunpack.c.l.b16 %v180
      %v253 = vunpack.c.l.b16 %v181
      %v254 = vunpack.c.l.b16 %v182
      %v255 = vunpack.c.l.b16 %v183
      %v256 = vunpack.c.l.b16 %v184
      %v257 = vunpack.c.l.b16 %v185
      %v258 = vunpack.c.l.b16 %v186
      %v259 = vunpack.c.l.b16 %v187
      %v260 = vunpack.c.l.b16 %v188
      %v261 = vunpack.c.l.b16 %v189
      %v262 = vunpack.c.l.b16 %v190
      %v263 = vunpack.c.l.b16 %v191
      %v264 = vunpack.c.l.b16 %v192
      %v265 = vunpack.c.l.b16 %v193
      %v266 = vunpack.c.l.b16 %v194
      %v267 = vunpack.c.l.b16 %v195
      %v268 = vunpack.c.l.b16 %v196
      %v269 = vunpack.c.l.b16 %v197
      %v270 = vunpack.c.l.b16 %v198
      %v271 = vunpack.c.l.b16 %v199
      %v272 = vunpack.c.l.b16 %v200
      %v273 = vunpack.c.l.b16 %v201
      %v274 = vunpack.c.l.b16 %v202
      %v275 = vunpack.c.l.b16 %v203
      %v276 = vunpack.c.l.b16 %v204
      %v277 = vunpack.c.l.b16 %v205
      %v278 = vunpack.c.l.b16 %v206
      %v279 = vpack.c.b16 %v248, %v247
      %v280 = vpack.c.b16 %v250, %v249
      %v281 = vpack.c.b16 %v252, %v251
      %v282 = vpack.c.b16 %v254, %v253
      %v283 = vpack.c.b16 %v256, %v255
      %v284 = vpack.c.b16 %v258, %v257
      %v285 = vpack.c.b16 %v260, %v259
      %v286 = vpack.c.b16 %v262, %v261
      %v287 = vpack.c.b16 %v264, %v263
      %v288 = vpack.c.b16 %v266, %v265
      %v289 = vpack.c.b16 %v268, %v267
      %v290 = vpack.c.b16 %v270, %v269
      %v291 = vpack.c.b16 %v272, %v271
      %v292 = vpack.c.b16 %v274, %v273
      %v293 = vpack.c.b16 %v276, %v275
      %v294 = vpack.c.b16 %v278, %v277
      %vm295 = vcmask 31744
      %v297 = vsel %vm295, %v279, 0
      %v300 = vsel %vm295, %v280, 0
      %v303 = vsel %vm295, %v281, 0
      %v306 = vsel %vm295, %v282, 0
      %v309 = vsel %vm295, %v283, 0
      %v312 = vsel %vm295, %v284, 0
      %v315 = vsel %vm295, %v285, 0
      %v318 = vsel %vm295, %v286, 0
      %v321 = vsel %vm295, %v287, 0
      %v324 = vsel %vm295, %v288, 0
      %v327 = vsel %vm295, %v289, 0
      %v330 = vsel %vm295, %v290, 0
      %v333 = vsel %vm295, %v291, 0
      %v336 = vsel %vm295, %v292, 0
      %v339 = vsel %vm295, %v293, 0
      %v342 = vsel %vm295, %v294, 0
      %vm344 = vcmask 1041408
      %v346 = vsel %vm344, %v207, 0
      %348 = vmatprep.subr.bf16.mxu0 0
      %349 = vmatpush1.bf16.msra.mxu0 %v346
      %350 = vmatprep.subr.bf16.mxu0 0
      %351 = vmatpush1.bf16.msra.mxu0 0
      %352 = vmatprep.subr.bf16.mxu0 0
      %353 = vmatpush1.bf16.msra.mxu0 0
      %354 = vmatprep.subr.bf16.mxu0 0
      %355 = vmatpush1.bf16.msra.mxu0 0
      %356 = vmatprep.subr.bf16.mxu0 0
      %357 = vmatpush1.bf16.msra.mxu0 0
      %358 = vmatprep.subr.bf16.mxu0 0
      %359 = vmatpush1.bf16.msra.mxu0 0
      %360 = vmatprep.subr.bf16.mxu0 0
      %361 = vmatpush1.bf16.msra.mxu0 0
      %362 = vmatprep.subr.bf16.mxu0 0
      %363 = vmatpush1.bf16.msra.mxu0 0
      %364 = vmatprep.subr.bf16.mxu0 0
      %365 = vmatpush1.bf16.msra.mxu0 0
      %366 = vmatprep.subr.bf16.mxu0 0
      %367 = vmatpush1.bf16.msra.mxu0 0
      %368 = vmatprep.subr.bf16.mxu0 0
      %369 = vmatpush1.bf16.msra.mxu0 0
      %370 = vmatprep.subr.bf16.mxu0 0
      %371 = vmatpush1.bf16.msra.mxu0 0
      %372 = vmatprep.subr.bf16.mxu0 0
      %373 = vmatpush1.bf16.msra.mxu0 0
      %374 = vmatprep.subr.bf16.mxu0 0
      %375 = vmatpush1.bf16.msra.mxu0 0
      %376 = vmatprep.subr.bf16.mxu0 0
      %377 = vmatpush1.bf16.msra.mxu0 0
      %378 = vmatprep.subr.bf16.mxu0 0
      %379 = vmatpush1.bf16.msra.mxu0 0
      %380 = vmatprep.mubr.bf16.mxu0 0
      %381 = vmatmul.mubr.bf16.gmra.mrb[0].mxu0 %v297
      %v382 = vpop.f32.mrb[0].mxu0
      %v383 = vadd.f32 %v213, %v382
      %v384 = vpop.f32.mrb[0].mxu0
      %v385 = vpop.f32.mrb[0].mxu0
      %v386 = vadd.f32 %v213, %v385
      %v387 = vpop.f32.mrb[0].mxu0
      %388 = vmatprep.mubr.bf16.mxu0 0
      %389 = vmatmul.mubr.bf16.gmra.mrb[0].mxu0 %v300
      %v390 = vpop.f32.mrb[0].mxu0
      %v391 = vadd.f32 %v213, %v390
      %v392 = vpop.f32.mrb[0].mxu0
      %v393 = vpop.f32.mrb[0].mxu0
      %v394 = vadd.f32 %v213, %v393
      %v395 = vpop.f32.mrb[0].mxu0
      %396 = vmatprep.mubr.bf16.mxu0 0
      %397 = vmatmul.mubr.bf16.gmra.mrb[0].mxu0 %v303
      %v398 = vpop.f32.mrb[0].mxu0
      %v399 = vadd.f32 %v213, %v398
      %v400 = vpop.f32.mrb[0].mxu0
      %v401 = vpop.f32.mrb[0].mxu0
      %v402 = vadd.f32 %v213, %v401
      %v403 = vpop.f32.mrb[0].mxu0
      %404 = vmatprep.mubr.bf16.mxu0 0
      %405 = vmatmul.mubr.bf16.gmra.mrb[0].mxu0 %v306
      %v406 = vpop.f32.mrb[0].mxu0
      %v407 = vadd.f32 %v213, %v406
      %v408 = vpop.f32.mrb[0].mxu0
      %v409 = vpop.f32.mrb[0].mxu0
      %v410 = vadd.f32 %v213, %v409
      %v411 = vpop.f32.mrb[0].mxu0
      %412 = vmatprep.mubr.bf16.mxu0 0
      %413 = vmatmul.mubr.bf16.gmra.mrb[0].mxu0 %v309
      %v414 = vpop.f32.mrb[0].mxu0
      %v415 = vadd.f32 %v213, %v414
      %v416 = vpop.f32.mrb[0].mxu0
      %v417 = vpop.f32.mrb[0].mxu0
      %v418 = vadd.f32 %v213, %v417
      %v419 = vpop.f32.mrb[0].mxu0
      %420 = vmatprep.mubr.bf16.mxu0 0
      %421 = vmatmul.mubr.bf16.gmra.mrb[0].mxu0 %v312
      %v422 = vpop.f32.mrb[0].mxu0
      %v423 = vadd.f32 %v213, %v422
      %v424 = vpop.f32.mrb[0].mxu0
      %v425 = vpop.f32.mrb[0].mxu0
      %v426 = vadd.f32 %v213, %v425
      %v427 = vpop.f32.mrb[0].mxu0
      %428 = vmatprep.mubr.bf16.mxu0 0
      %429 = vmatmul.mubr.bf16.gmra.mrb[0].mxu0 %v315
      %v430 = vpop.f32.mrb[0].mxu0
      %v431 = vadd.f32 %v213, %v430
      %v432 = vpop.f32.mrb[0].mxu0
      %v433 = vpop.f32.mrb[0].mxu0
      %v434 = vadd.f32 %v213, %v433
      %v435 = vpop.f32.mrb[0].mxu0
      %436 = vmatprep.mubr.bf16.mxu0 0
      %437 = vmatmul.mubr.bf16.gmra.mrb[0].mxu0 %v318
      %v438 = vpop.f32.mrb[0].mxu0
      %v439 = vadd.f32 %v213, %v438
      %v440 = vpop.f32.mrb[0].mxu0
      %v441 = vpop.f32.mrb[0].mxu0
      %v442 = vadd.f32 %v213, %v441
      %v443 = vpop.f32.mrb[0].mxu0
      %444 = vmatprep.mubr.bf16.mxu0 0
      %445 = vmatmul.mubr.bf16.gmra.mrb[0].mxu0 %v321
      %v446 = vpop.f32.mrb[0].mxu0
      %v447 = vadd.f32 %v213, %v446
      %v448 = vpop.f32.mrb[0].mxu0
      %v449 = vpop.f32.mrb[0].mxu0
      %v450 = vadd.f32 %v213, %v449
      %v451 = vpop.f32.mrb[0].mxu0
      %452 = vmatprep.mubr.bf16.mxu0 0
      %453 = vmatmul.mubr.bf16.gmra.mrb[0].mxu0 %v324
      %v454 = vpop.f32.mrb[0].mxu0
      %v455 = vadd.f32 %v213, %v454
      %v456 = vpop.f32.mrb[0].mxu0
      %v457 = vpop.f32.mrb[0].mxu0
      %v458 = vadd.f32 %v213, %v457
      %v459 = vpop.f32.mrb[0].mxu0
      %460 = vmatprep.mubr.bf16.mxu0 0
      %461 = vmatmul.mubr.bf16.gmra.mrb[0].mxu0 %v327
      %v462 = vpop.f32.mrb[0].mxu0
      %v463 = vadd.f32 %v213, %v462
      %v464 = vpop.f32.mrb[0].mxu0
      %v465 = vpop.f32.mrb[0].mxu0
      %v466 = vadd.f32 %v213, %v465
      %v467 = vpop.f32.mrb[0].mxu0
      %468 = vmatprep.mubr.bf16.mxu0 0
      %469 = vmatmul.mubr.bf16.gmra.mrb[0].mxu0 %v330
      %v470 = vpop.f32.mrb[0].mxu0
      %v471 = vadd.f32 %v213, %v470
      %v472 = vpop.f32.mrb[0].mxu0
      %v473 = vpop.f32.mrb[0].mxu0
      %v474 = vadd.f32 %v213, %v473
      %v475 = vpop.f32.mrb[0].mxu0
      %476 = vmatprep.mubr.bf16.mxu0 0
      %477 = vmatmul.mubr.bf16.gmra.mrb[0].mxu0 %v333
      %v478 = vpop.f32.mrb[0].mxu0
      %v479 = vadd.f32 %v213, %v478
      %v480 = vpop.f32.mrb[0].mxu0
      %v481 = vpop.f32.mrb[0].mxu0
      %v482 = vadd.f32 %v213, %v481
      %v483 = vpop.f32.mrb[0].mxu0
      %484 = vmatprep.mubr.bf16.mxu0 0
      %485 = vmatmul.mubr.bf16.gmra.mrb[0].mxu0 %v336
      %v486 = vpop.f32.mrb[0].mxu0
      %v487 = vadd.f32 %v213, %v486
      %v488 = vpop.f32.mrb[0].mxu0
      %v489 = vpop.f32.mrb[0].mxu0
      %v490 = vadd.f32 %v213, %v489
      %v491 = vpop.f32.mrb[0].mxu0
      %492 = vmatprep.mubr.bf16.mxu0 0
      %493 = vmatmul.mubr.bf16.gmra.mrb[0].mxu0 %v339
      %v494 = vpop.f32.mrb[0].mxu0
      %v495 = vadd.f32 %v213, %v494
      %v496 = vpop.f32.mrb[0].mxu0
      %v497 = vpop.f32.mrb[0].mxu0
      %v498 = vadd.f32 %v213, %v497
      %v499 = vpop.f32.mrb[0].mxu0
      %500 = vmatprep.mubr.bf16.mxu0 0
      %501 = vmatmul.mubr.bf16.gmra.mrb[0].mxu0 %v342
      %v502 = vpop.f32.mrb[0].mxu0
      %v503 = vadd.f32 %v213, %v502
      %v504 = vpop.f32.mrb[0].mxu0
      %v505 = vpop.f32.mrb[0].mxu0
      %v506 = vadd.f32 %v213, %v505
      %v507 = vpop.f32.mrb[0].mxu0
      %508 = vdwg.mxu0
      %v509 = vmax.f32 %v383, 0.0
      %v510 = vmax.f32 %v386, 0.0
      %v511 = vmax.f32 %v391, 0.0
      %v512 = vmax.f32 %v394, 0.0
      %v513 = vmax.f32 %v399, 0.0
      %v514 = vmax.f32 %v402, 0.0
      %v515 = vmax.f32 %v407, 0.0
      %v516 = vmax.f32 %v410, 0.0
      %v517 = vmax.f32 %v415, 0.0
      %v518 = vmax.f32 %v418, 0.0
      %v519 = vmax.f32 %v423, 0.0
      %v520 = vmax.f32 %v426, 0.0
      %v521 = vmax.f32 %v431, 0.0
      %v522 = vmax.f32 %v434, 0.0
      %v523 = vmax.f32 %v439, 0.0
      %v524 = vmax.f32 %v442, 0.0
      %v525 = vmax.f32 %v447, 0.0
      %v526 = vmax.f32 %v450, 0.0
      %v527 = vmax.f32 %v455, 0.0
      %v528 = vmax.f32 %v458, 0.0
      %v529 = vmax.f32 %v463, 0.0
      %v530 = vmax.f32 %v466, 0.0
      %v531 = vmax.f32 %v471, 0.0
      %v532 = vmax.f32 %v474, 0.0
      %v533 = vmax.f32 %v479, 0.0
      %v534 = vmax.f32 %v482, 0.0
      %v535 = vmax.f32 %v487, 0.0
      %v536 = vmax.f32 %v490, 0.0
      %v537 = vmax.f32 %v495, 0.0
      %v538 = vmax.f32 %v498, 0.0
      %v539 = vmax.f32 %v503, 0.0
      %v540 = vmax.f32 %v506, 0.0
      %v541 = vpack.c.bf16 %v510, %v509
      %v542 = vpack.c.bf16 %v512, %v511
      %v543 = vpack.c.bf16 %v514, %v513
      %v544 = vpack.c.bf16 %v516, %v515
      %v545 = vpack.c.bf16 %v518, %v517
      %v546 = vpack.c.bf16 %v520, %v519
      %v547 = vpack.c.bf16 %v522, %v521
      %v548 = vpack.c.bf16 %v524, %v523
      %v549 = vpack.c.bf16 %v526, %v525
      %v550 = vpack.c.bf16 %v528, %v527
      %v551 = vpack.c.bf16 %v530, %v529
      %v552 = vpack.c.bf16 %v532, %v531
      %v553 = vpack.c.bf16 %v534, %v533
      %v554 = vpack.c.bf16 %v536, %v535
      %v555 = vpack.c.bf16 %v538, %v537
      %v556 = vpack.c.bf16 %v540, %v539
      %v573 = vunpack.c.l.b16 %v541
      %v574 = vunpack.c.h.b16 %v541
      %v575 = vunpack.c.l.b16 %v542
      %v576 = vunpack.c.h.b16 %v542
      %v577 = vunpack.c.l.b16 %v543
      %v578 = vunpack.c.h.b16 %v543
      %v579 = vunpack.c.l.b16 %v544
      %v580 = vunpack.c.h.b16 %v544
      %v581 = vunpack.c.l.b16 %v545
      %v582 = vunpack.c.h.b16 %v545
      %v583 = vunpack.c.l.b16 %v546
      %v584 = vunpack.c.h.b16 %v546
      %v585 = vunpack.c.l.b16 %v547
      %v586 = vunpack.c.h.b16 %v547
      %v587 = vunpack.c.l.b16 %v548
      %v588 = vunpack.c.h.b16 %v548
      %v589 = vunpack.c.l.b16 %v549
      %v590 = vunpack.c.h.b16 %v549
      %v591 = vunpack.c.l.b16 %v550
      %v592 = vunpack.c.h.b16 %v550
      %v593 = vunpack.c.l.b16 %v551
      %v594 = vunpack.c.h.b16 %v551
      %v595 = vunpack.c.l.b16 %v552
      %v596 = vunpack.c.h.b16 %v552
      %v597 = vunpack.c.l.b16 %v553
      %v598 = vunpack.c.h.b16 %v553
      %v599 = vunpack.c.l.b16 %v554
      %v600 = vunpack.c.h.b16 %v554
      %v601 = vunpack.c.l.b16 %v555
      %v602 = vunpack.c.h.b16 %v555
      %v603 = vunpack.c.l.b16 %v556
      %v604 = vunpack.c.h.b16 %v556
      %v605 = vpack.c.b16 %v573, %v573
      %v606 = vpack.c.b16 %v574, %v574
      %v607 = vpack.c.b16 %v575, %v575
      %v608 = vpack.c.b16 %v576, %v576
      %v609 = vpack.c.b16 %v577, %v577
      %v610 = vpack.c.b16 %v578, %v578
      %v611 = vpack.c.b16 %v579, %v579
      %v612 = vpack.c.b16 %v580, %v580
      %v613 = vpack.c.b16 %v581, %v581
      %v614 = vpack.c.b16 %v582, %v582
      %v615 = vpack.c.b16 %v583, %v583
      %v616 = vpack.c.b16 %v584, %v584
      %v617 = vpack.c.b16 %v585, %v585
      %v618 = vpack.c.b16 %v586, %v586
      %v619 = vpack.c.b16 %v587, %v587
      %v620 = vpack.c.b16 %v588, %v588
      %v621 = vpack.c.b16 %v589, %v589
      %v622 = vpack.c.b16 %v590, %v590
      %v623 = vpack.c.b16 %v591, %v591
      %v624 = vpack.c.b16 %v592, %v592
      %v625 = vpack.c.b16 %v593, %v593
      %v626 = vpack.c.b16 %v594, %v594
      %v627 = vpack.c.b16 %v595, %v595
      %v628 = vpack.c.b16 %v596, %v596
      %v629 = vpack.c.b16 %v597, %v597
      %v630 = vpack.c.b16 %v598, %v598
      %v631 = vpack.c.b16 %v599, %v599
      %v632 = vpack.c.b16 %v600, %v600
      %v633 = vpack.c.b16 %v601, %v601
      %v634 = vpack.c.b16 %v602, %v602
      %v635 = vpack.c.b16 %v603, %v603
      %v636 = vpack.c.b16 %v604, %v604
      %669 = vst [vmem:[%s172] sm:$0xf] %v605
      %670 = vst [vmem:[%s172 + $0x4] sm:$0xf] %v606
      %671 = vst [vmem:[%s172 + $0x8] sm:$0xf] %v607
      %672 = vst [vmem:[%s172 + $0xc] sm:$0xf] %v608
      %673 = vst [vmem:[%s172 + $0x10] sm:$0xf] %v609
      %674 = vst [vmem:[%s172 + $0x14] sm:$0xf] %v610
      %675 = vst [vmem:[%s172 + $0x18] sm:$0xf] %v611
      %676 = vst [vmem:[%s172 + $0x1c] sm:$0xf] %v612
      %677 = vst [vmem:[%s172 + $0x20] sm:$0xf] %v613
      %678 = vst [vmem:[%s172 + $0x24] sm:$0xf] %v614
      %679 = vst [vmem:[%s172 + $0x28] sm:$0xf] %v615
      %680 = vst [vmem:[%s172 + $0x2c] sm:$0xf] %v616
      %681 = vst [vmem:[%s172 + $0x30] sm:$0xf] %v617
      %682 = vst [vmem:[%s172 + $0x34] sm:$0xf] %v618
      %683 = vst [vmem:[%s172 + $0x38] sm:$0xf] %v619
      %684 = vst [vmem:[%s172 + $0x3c] sm:$0xf] %v620
      %685 = vst [vmem:[%s172 + $0x40] sm:$0xf] %v621
      %686 = vst [vmem:[%s172 + $0x44] sm:$0xf] %v622
      %687 = vst [vmem:[%s172 + $0x48] sm:$0xf] %v623
      %688 = vst [vmem:[%s172 + $0x4c] sm:$0xf] %v624
      %689 = vst [vmem:[%s172 + $0x50] sm:$0xf] %v625
      %690 = vst [vmem:[%s172 + $0x54] sm:$0xf] %v626
      %691 = vst [vmem:[%s172 + $0x58] sm:$0xf] %v627
      %692 = vst [vmem:[%s172 + $0x5c] sm:$0xf] %v628
      %693 = vst [vmem:[%s172 + $0x60] sm:$0xf] %v629
      %694 = vst [vmem:[%s172 + $0x64] sm:$0xf] %v630
      %695 = vst [vmem:[%s172 + $0x68] sm:$0xf] %v631
      %696 = vst [vmem:[%s172 + $0x6c] sm:$0xf] %v632
      %697 = vst [vmem:[%s172 + $0x70] sm:$0xf] %v633
      %698 = vst [vmem:[%s172 + $0x74] sm:$0xf] %v634
      %699 = vst [vmem:[%s172 + $0x78] sm:$0xf] %v635
      %700 = vst [vmem:[%s172 + $0x7c] sm:$0xf] %v636
      %s701 = smul.u32 32, %s14
      %p702 = scmp.lt.s32.totalorder %s701, 63
      %s703 = scalar_select %p702, %s701, 63
      %s704 = smul.addr %s703, 4
      %s705 = scalar_lea.vmem %s3, %s704
      // Predicated region
      $region33: #{resnext_block_forward.4} parent=31 // pred_check
        %p706 = pneg %p100
      $region34: #{resnext_block_forward.4} parent=31 // pred_check_branch
        %708 = sbr.rel (%p706) target = $region36
      $region35: #{resnext_block_forward.4} parent=31 // pred_region
        %s709 = smul.u32 32, %s14
      $region36: #{resnext_block_forward.4} parent=31 // pred_fallthru
        _
    $region32: #{resnext_block_forward.4} parent=5 // pred_fallthru
      _
    %p710 = scmp.le.s32.totalorder 2, %s9
    // Predicated region
    $region37: #{resnext_block_forward.4} parent=5 // pred_check
      %p711 = pneg %p710
    $region38: #{resnext_block_forward.4} parent=5 // pred_check_branch
      %713 = sbr.rel (%p711) target = $region40
    $region39: #{resnext_block_forward.4} parent=5 // pred_region
      %s714 = ssub.s32 %s9, 2
      // Predicated region
      $region41: #{resnext_block_forward.4} parent=39 // pred_check
        %p715 = pneg %p106
      $region42: #{resnext_block_forward.4} parent=39 // pred_check_branch
        %717 = sbr.rel (%p715) target = $region44
      $region43: #{resnext_block_forward.4} parent=39 // pred_region
        %s718 = smul.u32 32, %s15
        %p719 = scmp.lt.s32.totalorder %s718, 63
        %s720 = scalar_select %p719, %s718, 63
        %s721 = smul.addr %s720, 4
        %s722 = scalar_lea.vmem %s3, %s721
      $region44: #{resnext_block_forward.4} parent=39 // pred_fallthru
        _
    $region40: #{resnext_block_forward.4} parent=5 // pred_fallthru
      _
  $region6: #{resnext_block_forward.4} parent=0 // loop_footer
    %s13 = sadd.s32 1, %s9
  $region7: #{resnext_block_forward.4} parent=0 // loop_footer_branch
    %8 = sbr.rel target = $region3
  $region8: #{resnext_block_forward.4} parent=0 // loop_exit
    _

// kernel: resnext_block_forward.6
$region0: #{resnext_block_forward.6}
  #allocation0 [shape = 'u32[]', space=smem, size = 0x4, offset = 0x4, fixed_abs, tag = 'smem constant byte address 0x4 - core index']
  #allocation1 [shape = 'u32[144,128]{1,0:T(1,128)}', space=vmem, size = 0x12000, scoped, tag = 'internal scratch']
  %s0 = inlined_call_operand.vmem [shape: bf16[128,4], index: 0, kind: input, shape index: {}]
  %s1 = inlined_call_operand.vmem [shape: bf16[4,128], index: 1, kind: input, shape index: {}]
  %s2 = inlined_call_operand.vmem [shape: f32[1,128], index: 2, kind: input, shape index: {}]
  %s3 = inlined_call_operand.vmem [shape: bf16[128,128], index: 3, kind: output, shape index: {}]
  %s4 = sld [smem:[#allocation0]]
  $region22: #{resnext_block_forward.6} parent=0
    _
  %s6 = ssub.s32 1, %s4
  %s7 = scalar_select 0, %s6, %s4
  // Predicated region
  $region2: #{resnext_block_forward.6} parent=0 // pred_check
    _
  $region3: #{resnext_block_forward.6} parent=0 // pred_check_branch
    %9 = sbr.rel (0) target = $region5
  $region4: #{resnext_block_forward.6} parent=0 // pred_region
    _
  $region5: #{resnext_block_forward.6} parent=0 // pred_fallthru
    _
  // Predicated region
  $region6: #{resnext_block_forward.6} parent=0 // pred_check
    _
  $region7: #{resnext_block_forward.6} parent=0 // pred_check_branch
    %11 = sbr.rel (0) target = $region9
  $region8: #{resnext_block_forward.6} parent=0 // pred_region
    _
  $region9: #{resnext_block_forward.6} parent=0 // pred_fallthru
    _
  // Predicated region
  $region10: #{resnext_block_forward.6} parent=0 // pred_check
    _
  $region11: #{resnext_block_forward.6} parent=0 // pred_check_branch
    %13 = sbr.rel (0) target = $region13
  $region12: #{resnext_block_forward.6} parent=0 // pred_region
    _
  $region13: #{resnext_block_forward.6} parent=0 // pred_fallthru
    _
  %v15 = vld [vmem:[%s0] sm:$0xf]
  %v16 = vld [vmem:[%s0 + $0x4] sm:$0xf]
  %v17 = vld [vmem:[%s0 + $0x8] sm:$0xf]
  %v18 = vld [vmem:[%s0 + $0xc] sm:$0xf]
  %v19 = vld [vmem:[%s0 + $0x10] sm:$0xf]
  %v20 = vld [vmem:[%s0 + $0x14] sm:$0xf]
  %v21 = vld [vmem:[%s0 + $0x18] sm:$0xf]
  %v22 = vld [vmem:[%s0 + $0x1c] sm:$0xf]
  %v23 = vld [vmem:[%s0 + $0x20] sm:$0xf]
  %v24 = vld [vmem:[%s0 + $0x24] sm:$0xf]
  %v25 = vld [vmem:[%s0 + $0x28] sm:$0xf]
  %v26 = vld [vmem:[%s0 + $0x2c] sm:$0xf]
  %v27 = vld [vmem:[%s0 + $0x30] sm:$0xf]
  %v28 = vld [vmem:[%s0 + $0x34] sm:$0xf]
  %v29 = vld [vmem:[%s0 + $0x38] sm:$0xf]
  %v30 = vld [vmem:[%s0 + $0x3c] sm:$0xf]
  %v31 = vld [vmem:[%s1] sm:$0x3]
  %v32 = vld [vmem:[%s2] sm:$0x1]
  %v34 = vlaneseq
  %v35 = vshrl.u32 %v34, 7
  %v36 = vsub.s32 0, %v35
  %v37 = vrot.slane %v32, %v36
  %v55 = vunpack.c.l.b16 %v15
  %v56 = vunpack.c.l.b16 %v16
  %v57 = vunpack.c.l.b16 %v17
  %v58 = vunpack.c.l.b16 %v18
  %v59 = vunpack.c.l.b16 %v19
  %v60 = vunpack.c.l.b16 %v20
  %v61 = vunpack.c.l.b16 %v21
  %v62 = vunpack.c.l.b16 %v22
  %v63 = vunpack.c.l.b16 %v23
  %v64 = vunpack.c.l.b16 %v24
  %v65 = vunpack.c.l.b16 %v25
  %v66 = vunpack.c.l.b16 %v26
  %v67 = vunpack.c.l.b16 %v27
  %v68 = vunpack.c.l.b16 %v28
  %v69 = vunpack.c.l.b16 %v29
  %v70 = vunpack.c.l.b16 %v30
  %v71 = vpack.c.b16 %v56, %v55
  %v72 = vpack.c.b16 %v58, %v57
  %v73 = vpack.c.b16 %v60, %v59
  %v74 = vpack.c.b16 %v62, %v61
  %v75 = vpack.c.b16 %v64, %v63
  %v76 = vpack.c.b16 %v66, %v65
  %v77 = vpack.c.b16 %v68, %v67
  %v78 = vpack.c.b16 %v70, %v69
  %vm79 = vcmask 31744
  %v81 = vsel %vm79, %v71, 0
  %v84 = vsel %vm79, %v72, 0
  %v87 = vsel %vm79, %v73, 0
  %v90 = vsel %vm79, %v74, 0
  %v93 = vsel %vm79, %v75, 0
  %v96 = vsel %vm79, %v76, 0
  %v99 = vsel %vm79, %v77, 0
  %v102 = vsel %vm79, %v78, 0
  %vm104 = vcmask 1041408
  %v106 = vsel %vm104, %v31, 0
  %108 = vmatprep.subr.bf16.mxu0 0
  %109 = vmatpush1.bf16.msra.mxu0 %v106
  %110 = vmatprep.subr.bf16.mxu0 0
  %111 = vmatpush1.bf16.msra.mxu0 0
  %112 = vmatprep.subr.bf16.mxu0 0
  %113 = vmatpush1.bf16.msra.mxu0 0
  %114 = vmatprep.subr.bf16.mxu0 0
  %115 = vmatpush1.bf16.msra.mxu0 0
  %116 = vmatprep.subr.bf16.mxu0 0
  %117 = vmatpush1.bf16.msra.mxu0 0
  %118 = vmatprep.subr.bf16.mxu0 0
  %119 = vmatpush1.bf16.msra.mxu0 0
  %120 = vmatprep.subr.bf16.mxu0 0
  %121 = vmatpush1.bf16.msra.mxu0 0
  %122 = vmatprep.subr.bf16.mxu0 0
  %123 = vmatpush1.bf16.msra.mxu0 0
  %124 = vmatprep.subr.bf16.mxu0 0
  %125 = vmatpush1.bf16.msra.mxu0 0
  %126 = vmatprep.subr.bf16.mxu0 0
  %127 = vmatpush1.bf16.msra.mxu0 0
  %128 = vmatprep.subr.bf16.mxu0 0
  %129 = vmatpush1.bf16.msra.mxu0 0
  %130 = vmatprep.subr.bf16.mxu0 0
  %131 = vmatpush1.bf16.msra.mxu0 0
  %132 = vmatprep.subr.bf16.mxu0 0
  %133 = vmatpush1.bf16.msra.mxu0 0
  %134 = vmatprep.subr.bf16.mxu0 0
  %135 = vmatpush1.bf16.msra.mxu0 0
  %136 = vmatprep.subr.bf16.mxu0 0
  %137 = vmatpush1.bf16.msra.mxu0 0
  %138 = vmatprep.subr.bf16.mxu0 0
  %139 = vmatpush1.bf16.msra.mxu0 0
  %140 = vmatprep.mubr.bf16.mxu0 0
  %141 = vmatmul.mubr.bf16.gmra.mrb[0].mxu0 %v81
  %v142 = vpop.f32.mrb[0].mxu0
  %v143 = vadd.f32 %v37, %v142
  %v144 = vpop.f32.mrb[0].mxu0
  %v145 = vpop.f32.mrb[0].mxu0
  %v146 = vadd.f32 %v37, %v145
  %v147 = vpop.f32.mrb[0].mxu0
  %148 = vmatprep.mubr.bf16.mxu0 0
  %149 = vmatmul.mubr.bf16.gmra.mrb[0].mxu0 %v84
  %v150 = vpop.f32.mrb[0].mxu0
  %v151 = vadd.f32 %v37, %v150
  %v152 = vpop.f32.mrb[0].mxu0
  %v153 = vpop.f32.mrb[0].mxu0
  %v154 = vadd.f32 %v37, %v153
  %v155 = vpop.f32.mrb[0].mxu0
  %156 = vmatprep.mubr.bf16.mxu0 0
  %157 = vmatmul.mubr.bf16.gmra.mrb[0].mxu0 %v87
  %v158 = vpop.f32.mrb[0].mxu0
  %v159 = vadd.f32 %v37, %v158
  %v160 = vpop.f32.mrb[0].mxu0
  %v161 = vpop.f32.mrb[0].mxu0
  %v162 = vadd.f32 %v37, %v161
  %v163 = vpop.f32.mrb[0].mxu0
  %164 = vmatprep.mubr.bf16.mxu0 0
  %165 = vmatmul.mubr.bf16.gmra.mrb[0].mxu0 %v90
  %v166 = vpop.f32.mrb[0].mxu0
  %v167 = vadd.f32 %v37, %v166
  %v168 = vpop.f32.mrb[0].mxu0
  %v169 = vpop.f32.mrb[0].mxu0
  %v170 = vadd.f32 %v37, %v169
  %v171 = vpop.f32.mrb[0].mxu0
  %172 = vmatprep.mubr.bf16.mxu0 0
  %173 = vmatmul.mubr.bf16.gmra.mrb[0].mxu0 %v93
  %v174 = vpop.f32.mrb[0].mxu0
  %v175 = vadd.f32 %v37, %v174
  %v176 = vpop.f32.mrb[0].mxu0
  %v177 = vpop.f32.mrb[0].mxu0
  %v178 = vadd.f32 %v37, %v177
  %v179 = vpop.f32.mrb[0].mxu0
  %180 = vmatprep.mubr.bf16.mxu0 0
  %181 = vmatmul.mubr.bf16.gmra.mrb[0].mxu0 %v96
  %v182 = vpop.f32.mrb[0].mxu0
  %v183 = vadd.f32 %v37, %v182
  %v184 = vpop.f32.mrb[0].mxu0
  %v185 = vpop.f32.mrb[0].mxu0
  %v186 = vadd.f32 %v37, %v185
  %v187 = vpop.f32.mrb[0].mxu0
  %188 = vmatprep.mubr.bf16.mxu0 0
  %189 = vmatmul.mubr.bf16.gmra.mrb[0].mxu0 %v99
  %v190 = vpop.f32.mrb[0].mxu0
  %v191 = vadd.f32 %v37, %v190
  %v192 = vpop.f32.mrb[0].mxu0
  %v193 = vpop.f32.mrb[0].mxu0
  %v194 = vadd.f32 %v37, %v193
  %v195 = vpop.f32.mrb[0].mxu0
  %196 = vmatprep.mubr.bf16.mxu0 0
  %197 = vmatmul.mubr.bf16.gmra.mrb[0].mxu0 %v102
  %v198 = vpop.f32.mrb[0].mxu0
  %v199 = vadd.f32 %v37, %v198
  %v200 = vpop.f32.mrb[0].mxu0
  %v201 = vpop.f32.mrb[0].mxu0
  %v202 = vadd.f32 %v37, %v201
  %v203 = vpop.f32.mrb[0].mxu0
  %204 = vdwg.mxu0
  %v205 = vpack.c.bf16 %v146, %v143
  %v206 = vpack.c.bf16 %v154, %v151
  %v207 = vpack.c.bf16 %v162, %v159
  %v208 = vpack.c.bf16 %v170, %v167
  %v209 = vpack.c.bf16 %v178, %v175
  %v210 = vpack.c.bf16 %v186, %v183
  %v211 = vpack.c.bf16 %v194, %v191
  %v212 = vpack.c.bf16 %v202, %v199
  %v221 = vunpack.c.l.b16 %v205
  %v222 = vunpack.c.h.b16 %v205
  %v223 = vunpack.c.l.b16 %v206
  %v224 = vunpack.c.h.b16 %v206
  %v225 = vunpack.c.l.b16 %v207
  %v226 = vunpack.c.h.b16 %v207
  %v227 = vunpack.c.l.b16 %v208
  %v228 = vunpack.c.h.b16 %v208
  %v229 = vunpack.c.l.b16 %v209
  %v230 = vunpack.c.h.b16 %v209
  %v231 = vunpack.c.l.b16 %v210
  %v232 = vunpack.c.h.b16 %v210
  %v233 = vunpack.c.l.b16 %v211
  %v234 = vunpack.c.h.b16 %v211
  %v235 = vunpack.c.l.b16 %v212
  %v236 = vunpack.c.h.b16 %v212
  %v237 = vpack.c.b16 %v221, %v221
  %v238 = vpack.c.b16 %v222, %v222
  %v239 = vpack.c.b16 %v223, %v223
  %v240 = vpack.c.b16 %v224, %v224
  %v241 = vpack.c.b16 %v225, %v225
  %v242 = vpack.c.b16 %v226, %v226
  %v243 = vpack.c.b16 %v227, %v227
  %v244 = vpack.c.b16 %v228, %v228
  %v245 = vpack.c.b16 %v229, %v229
  %v246 = vpack.c.b16 %v230, %v230
  %v247 = vpack.c.b16 %v231, %v231
  %v248 = vpack.c.b16 %v232, %v232
  %v249 = vpack.c.b16 %v233, %v233
  %v250 = vpack.c.b16 %v234, %v234
  %v251 = vpack.c.b16 %v235, %v235
  %v252 = vpack.c.b16 %v236, %v236
  %269 = vst [vmem:[%s3] sm:$0xf] %v237
  %270 = vst [vmem:[%s3 + $0x4] sm:$0xf] %v238
  %271 = vst [vmem:[%s3 + $0x8] sm:$0xf] %v239
  %272 = vst [vmem:[%s3 + $0xc] sm:$0xf] %v240
  %273 = vst [vmem:[%s3 + $0x10] sm:$0xf] %v241
  %274 = vst [vmem:[%s3 + $0x14] sm:$0xf] %v242
  %275 = vst [vmem:[%s3 + $0x18] sm:$0xf] %v243
  %276 = vst [vmem:[%s3 + $0x1c] sm:$0xf] %v244
  %277 = vst [vmem:[%s3 + $0x20] sm:$0xf] %v245
  %278 = vst [vmem:[%s3 + $0x24] sm:$0xf] %v246
  %279 = vst [vmem:[%s3 + $0x28] sm:$0xf] %v247
  %280 = vst [vmem:[%s3 + $0x2c] sm:$0xf] %v248
  %281 = vst [vmem:[%s3 + $0x30] sm:$0xf] %v249
  %282 = vst [vmem:[%s3 + $0x34] sm:$0xf] %v250
  %283 = vst [vmem:[%s3 + $0x38] sm:$0xf] %v251
  %284 = vst [vmem:[%s3 + $0x3c] sm:$0xf] %v252
  // Predicated region
  $region14: #{resnext_block_forward.6} parent=0 // pred_check
    _
  $region15: #{resnext_block_forward.6} parent=0 // pred_check_branch
    %286 = sbr.rel (0) target = $region17
  $region16: #{resnext_block_forward.6} parent=0 // pred_region
    _
  $region17: #{resnext_block_forward.6} parent=0 // pred_fallthru
    _
  // Predicated region
  $region18: #{resnext_block_forward.6} parent=0 // pred_check
    _
  $region19: #{resnext_block_forward.6} parent=0 // pred_check_branch
    %288 = sbr.rel (0) target = $region21
  $region20: #{resnext_block_forward.6} parent=0 // pred_region
    _
  $region21: #{resnext_block_forward.6} parent=0 // pred_fallthru
    _

// kernel: resnext_block_forward.7
$region0: #{resnext_block_forward.7}
  #allocation0 [shape = 'u32[]', space=smem, size = 0x4, offset = 0x4, fixed_abs, tag = 'smem constant byte address 0x4 - core index']
  #allocation1 [shape = 'u32[144,128]{1,0:T(1,128)}', space=vmem, size = 0x12000, scoped, tag = 'internal scratch']
  %s0 = inlined_call_operand.vmem [shape: bf16[128,128], index: 0, kind: input, shape index: {}]
  %s1 = inlined_call_operand.vmem [shape: bf16[128,128], index: 1, kind: input, shape index: {}]
  %s2 = inlined_call_operand.vmem [shape: f32[1,128], index: 2, kind: input, shape index: {}]
  %s3 = inlined_call_operand.vmem [shape: bf16[128,128], index: 3, kind: input, shape index: {}]
  %s4 = inlined_call_operand.hbm [shape: f32[128,128], index: 4, kind: output, shape index: {}]
  %s5 = sld [smem:[#allocation0]]
  $region26: #{resnext_block_forward.7} parent=0
    _
  %s7 = ssub.s32 1, %s5
  %s8 = scalar_select 0, %s7, %s5
  $region1: #{resnext_block_forward.7} parent=0
    #allocation2 [shape = 'u8[65536]{0}', space=vmem, size = 0x10000, scoped, tag = 'output window, operand 0, single buffered']
    #allocation3 [shape = 's32[1]{0}', space=sflag, size = 0x4, scoped, tag = 'scoped memory for resnext_block_forward.7']
    %9 = vsyncpa [#allocation3], 0
    // Predicated region
    $region2: #{resnext_block_forward.7} parent=1 // pred_check
      _
    $region3: #{resnext_block_forward.7} parent=1 // pred_check_branch
      %11 = sbr.rel (0) target = $region5
    $region4: #{resnext_block_forward.7} parent=1 // pred_region
      _
    $region5: #{resnext_block_forward.7} parent=1 // pred_fallthru
      _
    // Predicated region
    $region6: #{resnext_block_forward.7} parent=1 // pred_check
      _
    $region7: #{resnext_block_forward.7} parent=1 // pred_check_branch
      %13 = sbr.rel (0) target = $region9
    $region8: #{resnext_block_forward.7} parent=1 // pred_region
      _
    $region9: #{resnext_block_forward.7} parent=1 // pred_fallthru
      _
    // Predicated region
    $region10: #{resnext_block_forward.7} parent=1 // pred_check
      _
    $region11: #{resnext_block_forward.7} parent=1 // pred_check_branch
      %15 = sbr.rel (0) target = $region13
    $region12: #{resnext_block_forward.7} parent=1 // pred_region
      _
    $region13: #{resnext_block_forward.7} parent=1 // pred_fallthru
      _
    // Predicated region
    $region14: #{resnext_block_forward.7} parent=1 // pred_check
      _
    $region15: #{resnext_block_forward.7} parent=1 // pred_check_branch
      %17 = sbr.rel (0) target = $region17
    $region16: #{resnext_block_forward.7} parent=1 // pred_region
      _
    $region17: #{resnext_block_forward.7} parent=1 // pred_fallthru
      _
    %v19 = vld [vmem:[%s0] sm:$0xf]
    %v20 = vld [vmem:[%s0 + $0x4] sm:$0xf]
    %v21 = vld [vmem:[%s0 + $0x8] sm:$0xf]
    %v22 = vld [vmem:[%s0 + $0xc] sm:$0xf]
    %v23 = vld [vmem:[%s0 + $0x10] sm:$0xf]
    %v24 = vld [vmem:[%s0 + $0x14] sm:$0xf]
    %v25 = vld [vmem:[%s0 + $0x18] sm:$0xf]
    %v26 = vld [vmem:[%s0 + $0x1c] sm:$0xf]
    %v27 = vld [vmem:[%s0 + $0x20] sm:$0xf]
    %v28 = vld [vmem:[%s0 + $0x24] sm:$0xf]
    %v29 = vld [vmem:[%s0 + $0x28] sm:$0xf]
    %v30 = vld [vmem:[%s0 + $0x2c] sm:$0xf]
    %v31 = vld [vmem:[%s0 + $0x30] sm:$0xf]
    %v32 = vld [vmem:[%s0 + $0x34] sm:$0xf]
    %v33 = vld [vmem:[%s0 + $0x38] sm:$0xf]
    %v34 = vld [vmem:[%s0 + $0x3c] sm:$0xf]
    %v35 = vld [vmem:[%s1] sm:$0xf]
    %v36 = vld [vmem:[%s1 + $0x4] sm:$0xf]
    %v37 = vld [vmem:[%s1 + $0x8] sm:$0xf]
    %v38 = vld [vmem:[%s1 + $0xc] sm:$0xf]
    %v39 = vld [vmem:[%s1 + $0x10] sm:$0xf]
    %v40 = vld [vmem:[%s1 + $0x14] sm:$0xf]
    %v41 = vld [vmem:[%s1 + $0x18] sm:$0xf]
    %v42 = vld [vmem:[%s1 + $0x1c] sm:$0xf]
    %v43 = vld [vmem:[%s1 + $0x20] sm:$0xf]
    %v44 = vld [vmem:[%s1 + $0x24] sm:$0xf]
    %v45 = vld [vmem:[%s1 + $0x28] sm:$0xf]
    %v46 = vld [vmem:[%s1 + $0x2c] sm:$0xf]
    %v47 = vld [vmem:[%s1 + $0x30] sm:$0xf]
    %v48 = vld [vmem:[%s1 + $0x34] sm:$0xf]
    %v49 = vld [vmem:[%s1 + $0x38] sm:$0xf]
    %v50 = vld [vmem:[%s1 + $0x3c] sm:$0xf]
    %v51 = vld [vmem:[%s2] sm:$0x1]
    %v53 = vlaneseq
    %v54 = vshrl.u32 %v53, 7
    %v55 = vsub.s32 0, %v54
    %v56 = vrot.slane %v51, %v55
    %v74 = vunpack.c.l.b16 %v19
    %v75 = vunpack.c.l.b16 %v20
    %v76 = vunpack.c.l.b16 %v21
    %v77 = vunpack.c.l.b16 %v22
    %v78 = vunpack.c.l.b16 %v23
    %v79 = vunpack.c.l.b16 %v24
    %v80 = vunpack.c.l.b16 %v25
    %v81 = vunpack.c.l.b16 %v26
    %v82 = vunpack.c.l.b16 %v27
    %v83 = vunpack.c.l.b16 %v28
    %v84 = vunpack.c.l.b16 %v29
    %v85 = vunpack.c.l.b16 %v30
    %v86 = vunpack.c.l.b16 %v31
    %v87 = vunpack.c.l.b16 %v32
    %v88 = vunpack.c.l.b16 %v33
    %v89 = vunpack.c.l.b16 %v34
    %v90 = vpack.c.b16 %v75, %v74
    %v91 = vpack.c.b16 %v77, %v76
    %v92 = vpack.c.b16 %v79, %v78
    %v93 = vpack.c.b16 %v81, %v80
    %v94 = vpack.c.b16 %v83, %v82
    %v95 = vpack.c.b16 %v85, %v84
    %v96 = vpack.c.b16 %v87, %v86
    %v97 = vpack.c.b16 %v89, %v88
    %v122 = vunpack.c.l.b16 %v35
    %v123 = vunpack.c.l.b16 %v36
    %v124 = vunpack.c.l.b16 %v37
    %v125 = vunpack.c.l.b16 %v38
    %v126 = vunpack.c.l.b16 %v39
    %v127 = vunpack.c.l.b16 %v40
    %v128 = vunpack.c.l.b16 %v41
    %v129 = vunpack.c.l.b16 %v42
    %v130 = vunpack.c.l.b16 %v43
    %v131 = vunpack.c.l.b16 %v44
    %v132 = vunpack.c.l.b16 %v45
    %v133 = vunpack.c.l.b16 %v46
    %v134 = vunpack.c.l.b16 %v47
    %v135 = vunpack.c.l.b16 %v48
    %v136 = vunpack.c.l.b16 %v49
    %v137 = vunpack.c.l.b16 %v50
    %v138 = vpack.c.b16 %v123, %v122
    %v139 = vpack.c.b16 %v125, %v124
    %v140 = vpack.c.b16 %v127, %v126
    %v141 = vpack.c.b16 %v129, %v128
    %v142 = vpack.c.b16 %v131, %v130
    %v143 = vpack.c.b16 %v133, %v132
    %v144 = vpack.c.b16 %v135, %v134
    %v145 = vpack.c.b16 %v137, %v136
    %154 = vmatprep.subr.bf16.mxu0 0
    %155 = vmatpush1.bf16.msra.mxu0 %v138
    %156 = vmatprep.subr.bf16.mxu0 0
    %157 = vmatpush1.bf16.msra.mxu0 %v139
    %158 = vmatprep.subr.bf16.mxu0 0
    %159 = vmatpush1.bf16.msra.mxu0 %v140
    %160 = vmatprep.subr.bf16.mxu0 0
    %161 = vmatpush1.bf16.msra.mxu0 %v141
    %162 = vmatprep.subr.bf16.mxu0 0
    %163 = vmatpush1.bf16.msra.mxu0 %v142
    %164 = vmatprep.subr.bf16.mxu0 0
    %165 = vmatpush1.bf16.msra.mxu0 %v143
    %166 = vmatprep.subr.bf16.mxu0 0
    %167 = vmatpush1.bf16.msra.mxu0 %v144
    %168 = vmatprep.subr.bf16.mxu0 0
    %169 = vmatpush1.bf16.msra.mxu0 %v145
    %170 = vmatprep.subr.bf16.mxu0 0
    %171 = vmatpush1.bf16.msra.mxu0 0
    %172 = vmatprep.subr.bf16.mxu0 0
    %173 = vmatpush1.bf16.msra.mxu0 0
    %174 = vmatprep.subr.bf16.mxu0 0
    %175 = vmatpush1.bf16.msra.mxu0 0
    %176 = vmatprep.subr.bf16.mxu0 0
    %177 = vmatpush1.bf16.msra.mxu0 0
    %178 = vmatprep.subr.bf16.mxu0 0
    %179 = vmatpush1.bf16.msra.mxu0 0
    %180 = vmatprep.subr.bf16.mxu0 0
    %181 = vmatpush1.bf16.msra.mxu0 0
    %182 = vmatprep.subr.bf16.mxu0 0
    %183 = vmatpush1.bf16.msra.mxu0 0
    %184 = vmatprep.subr.bf16.mxu0 0
    %185 = vmatpush1.bf16.msra.mxu0 0
    %186 = vmatprep.mubr.bf16.mxu0 0
    %187 = vmatmul.mubr.bf16.gmra.mrb[0].mxu0 %v90
    %v188 = vpop.f32.mrb[0].mxu0
    %v189 = vadd.f32 %v56, %v188
    %v190 = vpop.f32.mrb[0].mxu0
    %v191 = vpop.f32.mrb[0].mxu0
    %v192 = vadd.f32 %v56, %v191
    %v193 = vpop.f32.mrb[0].mxu0
    %194 = vmatprep.mubr.bf16.mxu0 0
    %195 = vmatmul.mubr.bf16.gmra.mrb[0].mxu0 %v91
    %v196 = vpop.f32.mrb[0].mxu0
    %v197 = vadd.f32 %v56, %v196
    %v198 = vpop.f32.mrb[0].mxu0
    %v199 = vpop.f32.mrb[0].mxu0
    %v200 = vadd.f32 %v56, %v199
    %v201 = vpop.f32.mrb[0].mxu0
    %202 = vmatprep.mubr.bf16.mxu0 0
    %203 = vmatmul.mubr.bf16.gmra.mrb[0].mxu0 %v92
    %v204 = vpop.f32.mrb[0].mxu0
    %v205 = vadd.f32 %v56, %v204
    %v206 = vpop.f32.mrb[0].mxu0
    %v207 = vpop.f32.mrb[0].mxu0
    %v208 = vadd.f32 %v56, %v207
    %v209 = vpop.f32.mrb[0].mxu0
    %210 = vmatprep.mubr.bf16.mxu0 0
    %211 = vmatmul.mubr.bf16.gmra.mrb[0].mxu0 %v93
    %v212 = vpop.f32.mrb[0].mxu0
    %v213 = vadd.f32 %v56, %v212
    %v214 = vpop.f32.mrb[0].mxu0
    %v215 = vpop.f32.mrb[0].mxu0
    %v216 = vadd.f32 %v56, %v215
    %v217 = vpop.f32.mrb[0].mxu0
    %218 = vmatprep.mubr.bf16.mxu0 0
    %219 = vmatmul.mubr.bf16.gmra.mrb[0].mxu0 %v94
    %v220 = vpop.f32.mrb[0].mxu0
    %v221 = vadd.f32 %v56, %v220
    %v222 = vpop.f32.mrb[0].mxu0
    %v223 = vpop.f32.mrb[0].mxu0
    %v224 = vadd.f32 %v56, %v223
    %v225 = vpop.f32.mrb[0].mxu0
    %226 = vmatprep.mubr.bf16.mxu0 0
    %227 = vmatmul.mubr.bf16.gmra.mrb[0].mxu0 %v95
    %v228 = vpop.f32.mrb[0].mxu0
    %v229 = vadd.f32 %v56, %v228
    %v230 = vpop.f32.mrb[0].mxu0
    %v231 = vpop.f32.mrb[0].mxu0
    %v232 = vadd.f32 %v56, %v231
    %v233 = vpop.f32.mrb[0].mxu0
    %234 = vmatprep.mubr.bf16.mxu0 0
    %235 = vmatmul.mubr.bf16.gmra.mrb[0].mxu0 %v96
    %v236 = vpop.f32.mrb[0].mxu0
    %v237 = vadd.f32 %v56, %v236
    %v238 = vpop.f32.mrb[0].mxu0
    %v239 = vpop.f32.mrb[0].mxu0
    %v240 = vadd.f32 %v56, %v239
    %v241 = vpop.f32.mrb[0].mxu0
    %242 = vmatprep.mubr.bf16.mxu0 0
    %243 = vmatmul.mubr.bf16.gmra.mrb[0].mxu0 %v97
    %v244 = vpop.f32.mrb[0].mxu0
    %v245 = vadd.f32 %v56, %v244
    %v246 = vpop.f32.mrb[0].mxu0
    %v247 = vpop.f32.mrb[0].mxu0
    %v248 = vadd.f32 %v56, %v247
    %v249 = vpop.f32.mrb[0].mxu0
    %250 = vdwg.mxu0
    %v251 = vld [vmem:[%s3] sm:$0xf]
    %v252 = vld [vmem:[%s3 + $0x4] sm:$0xf]
    %v253 = vld [vmem:[%s3 + $0x8] sm:$0xf]
    %v254 = vld [vmem:[%s3 + $0xc] sm:$0xf]
    %v255 = vld [vmem:[%s3 + $0x10] sm:$0xf]
    %v256 = vld [vmem:[%s3 + $0x14] sm:$0xf]
    %v257 = vld [vmem:[%s3 + $0x18] sm:$0xf]
    %v258 = vld [vmem:[%s3 + $0x1c] sm:$0xf]
    %v259 = vld [vmem:[%s3 + $0x20] sm:$0xf]
    %v260 = vld [vmem:[%s3 + $0x24] sm:$0xf]
    %v261 = vld [vmem:[%s3 + $0x28] sm:$0xf]
    %v262 = vld [vmem:[%s3 + $0x2c] sm:$0xf]
    %v263 = vld [vmem:[%s3 + $0x30] sm:$0xf]
    %v264 = vld [vmem:[%s3 + $0x34] sm:$0xf]
    %v265 = vld [vmem:[%s3 + $0x38] sm:$0xf]
    %v266 = vld [vmem:[%s3 + $0x3c] sm:$0xf]
    %v267 = vunpack.c.l.bf16 %v251
    %v268 = vunpack.c.l.bf16 %v252
    %v269 = vunpack.c.l.bf16 %v253
    %v270 = vunpack.c.l.bf16 %v254
    %v271 = vunpack.c.l.bf16 %v255
    %v272 = vunpack.c.l.bf16 %v256
    %v273 = vunpack.c.l.bf16 %v257
    %v274 = vunpack.c.l.bf16 %v258
    %v275 = vunpack.c.l.bf16 %v259
    %v276 = vunpack.c.l.bf16 %v260
    %v277 = vunpack.c.l.bf16 %v261
    %v278 = vunpack.c.l.bf16 %v262
    %v279 = vunpack.c.l.bf16 %v263
    %v280 = vunpack.c.l.bf16 %v264
    %v281 = vunpack.c.l.bf16 %v265
    %v282 = vunpack.c.l.bf16 %v266
    %v283 = vadd.f32 %v189, %v267
    %v284 = vadd.f32 %v192, %v268
    %v285 = vadd.f32 %v197, %v269
    %v286 = vadd.f32 %v200, %v270
    %v287 = vadd.f32 %v205, %v271
    %v288 = vadd.f32 %v208, %v272
    %v289 = vadd.f32 %v213, %v273
    %v290 = vadd.f32 %v216, %v274
    %v291 = vadd.f32 %v221, %v275
    %v292 = vadd.f32 %v224, %v276
    %v293 = vadd.f32 %v229, %v277
    %v294 = vadd.f32 %v232, %v278
    %v295 = vadd.f32 %v237, %v279
    %v296 = vadd.f32 %v240, %v280
    %v297 = vadd.f32 %v245, %v281
    %v298 = vadd.f32 %v248, %v282
    %v299 = vmax.f32 %v283, 0.0
    %v300 = vmax.f32 %v284, 0.0
    %v301 = vmax.f32 %v285, 0.0
    %v302 = vmax.f32 %v286, 0.0
    %v303 = vmax.f32 %v287, 0.0
    %v304 = vmax.f32 %v288, 0.0
    %v305 = vmax.f32 %v289, 0.0
    %v306 = vmax.f32 %v290, 0.0
    %v307 = vmax.f32 %v291, 0.0
    %v308 = vmax.f32 %v292, 0.0
    %v309 = vmax.f32 %v293, 0.0
    %v310 = vmax.f32 %v294, 0.0
    %v311 = vmax.f32 %v295, 0.0
    %v312 = vmax.f32 %v296, 0.0
    %v313 = vmax.f32 %v297, 0.0
    %v314 = vmax.f32 %v298, 0.0
    %315 = vst [vmem:[#allocation2] sm:$0xff] %v299
    %316 = vst [vmem:[#allocation2 + $0x8] sm:$0xff] %v300
    %317 = vst [vmem:[#allocation2 + $0x10] sm:$0xff] %v301
    %318 = vst [vmem:[#allocation2 + $0x18] sm:$0xff] %v302
    %319 = vst [vmem:[#allocation2 + $0x20] sm:$0xff] %v303
    %320 = vst [vmem:[#allocation2 + $0x28] sm:$0xff] %v304
    %321 = vst [vmem:[#allocation2 + $0x30] sm:$0xff] %v305
    %322 = vst [vmem:[#allocation2 + $0x38] sm:$0xff] %v306
    %323 = vst [vmem:[#allocation2 + $0x40] sm:$0xff] %v307
    %324 = vst [vmem:[#allocation2 + $0x48] sm:$0xff] %v308
    %325 = vst [vmem:[#allocation2 + $0x50] sm:$0xff] %v309
    %326 = vst [vmem:[#allocation2 + $0x58] sm:$0xff] %v310
    %327 = vst [vmem:[#allocation2 + $0x60] sm:$0xff] %v311
    %328 = vst [vmem:[#allocation2 + $0x68] sm:$0xff] %v312
    %329 = vst [vmem:[#allocation2 + $0x70] sm:$0xff] %v313
    %330 = vst [vmem:[#allocation2 + $0x78] sm:$0xff] %v314
    // Predicated region
    $region18: #{resnext_block_forward.7} parent=1 // pred_check
      _
    $region19: #{resnext_block_forward.7} parent=1 // pred_check_branch
      %332 = sbr.rel (0) target = $region21
    $region20: #{resnext_block_forward.7} parent=1 // pred_region
      %s334 = ssub.s32 2048, 2048
      %335 = vsyncadd [#allocation3], %s334
      %s336 = sshll.u32 [#allocation2], 4
      %s337 = int_to_ptr.vmem [resolvable:$true] %s336
      %342 = dma.vmem_to_hbm [thread:$0]  %s337, 2048, %s4, [#allocation3], 128, 128, 8
    $region21: #{resnext_block_forward.7} parent=1 // pred_fallthru
      _
    // Predicated region
    $region22: #{resnext_block_forward.7} parent=1 // pred_check
      _
    $region23: #{resnext_block_forward.7} parent=1 // pred_check_branch
      %344 = sbr.rel (0) target = $region25
    $region24: #{resnext_block_forward.7} parent=1 // pred_region
      %345 = dma.done [#allocation3], 2048
    $region25: #{resnext_block_forward.7} parent=1 // pred_fallthru
      _
    %346 = vsyncpa [#allocation3], 1

// kernel: resnext_block_forward.5
$region0: #{resnext_block_forward.5}
  #allocation0 [shape = 'u32[]', space=smem, size = 0x4, offset = 0x4, fixed_abs, tag = 'smem constant byte address 0x4 - core index']
  #allocation1 [shape = 'u32[144,128]{1,0:T(1,128)}', space=vmem, size = 0x12000, scoped, tag = 'internal scratch']
  %s0 = inlined_call_operand.vmem [shape: bf16[8,9,9,128], index: 0, kind: input, shape index: {}]
  %s1 = inlined_call_operand.vmem [shape: bf16[18,2,2], index: 1, kind: input, shape index: {}]
  %s2 = inlined_call_operand.vmem [shape: f32[1,4], index: 2, kind: input, shape index: {}]
  %s3 = inlined_call_operand.vmem [shape: bf16[2,64,128], index: 3, kind: output, shape index: {}]
  %s4 = sld [smem:[#allocation0]]
  $region45: #{resnext_block_forward.5} parent=0
    _
  %s6 = ssub.s32 1, %s4
  %s7 = scalar_select 0, %s6, %s4
  loop: start=0, step=1, limit=4
  $region2: #{resnext_block_forward.5} parent=0 // loop_pre_header
    _
  $region3: #{resnext_block_forward.5} parent=0 // loop_header
    %s9 = sphi 0, %s13
    %p10 = scmp.ge.s32.totalorder %s9, 4
    %s19 = sphi 0, %s21
    %s22 = sphi 0, %s19
    %s23 = sphi 0, %s22
    %s39 = sphi 0, %s23
    %s43 = sphi 0, %s43
    %s45 = sphi 0, %s43
    %s46 = sphi 0, %s45
    %s60 = sphi 0, %s46
    %s64 = sphi 0, %s64
    %s66 = sphi 0, %s64
    %s67 = sphi 0, %s66
    %s81 = sphi 0, %s67
    %s87 = sphi 0, %s89
    %s90 = sphi 0, %s87
    %s91 = sphi 0, %s90
    %s107 = sphi 0, %s91
  $region4: #{resnext_block_forward.5} parent=0 // loop_header_branch
    %12 = sbr.rel (%p10) target = $region8
  $region5: #{resnext_block_forward.5} parent=0 // loop_body
    %s14 = ssub.s32 %s9, 1
    %s15 = ssub.s32 %s9, 2
    %s16 = sadd.s32 %s9, 1
    %s17 = ssub.s32 %s9, %s16
    %p18 = scmp.eq.s32.totalorder %s17, 0
    %s20 = sadd.s32 %s19, 1
    %s21 = scalar_select %p18, %s19, %s20
    %p24 = pneg %p18
    %p25 = scmp.eq.s32.totalorder %s9, 1
    %p26 = por %p24, %p25
    %p27 = scmp.ne.s32.totalorder %s19, %s22
    %p28 = scmp.eq.s32.totalorder %s9, 0
    %p29 = por %p27, %p28
    %p30 = scmp.ne.s32.totalorder %s19, %s22
    %p31 = scmp.eq.s32.totalorder %s14, 1
    %p32 = por %p30, %p31
    %p33 = scmp.ne.s32.totalorder %s22, %s23
    %p34 = scmp.eq.s32.totalorder %s14, 0
    %p35 = por %p33, %p34
    %p36 = scmp.ne.s32.totalorder %s22, %s23
    %p37 = scmp.eq.s32.totalorder %s15, 1
    %p38 = por %p36, %p37
    %p40 = scmp.ne.s32.totalorder %s23, %s39
    %p41 = scmp.eq.s32.totalorder %s15, 0
    %p42 = por %p40, %p41
    %s44 = sadd.s32 %s43, 1
    %p47 = scmp.eq.s32.totalorder %s9, 1
    %p48 = scmp.ne.s32.totalorder %s43, %s45
    %p49 = scmp.eq.s32.totalorder %s9, 0
    %p50 = por %p48, %p49
    %p51 = scmp.ne.s32.totalorder %s43, %s45
    %p52 = scmp.eq.s32.totalorder %s14, 1
    %p53 = por %p51, %p52
    %p54 = scmp.ne.s32.totalorder %s45, %s46
    %p55 = scmp.eq.s32.totalorder %s14, 0
    %p56 = por %p54, %p55
    %p57 = scmp.ne.s32.totalorder %s45, %s46
    %p58 = scmp.eq.s32.totalorder %s15, 1
    %p59 = por %p57, %p58
    %p61 = scmp.ne.s32.totalorder %s46, %s60
    %p62 = scmp.eq.s32.totalorder %s15, 0
    %p63 = por %p61, %p62
    %s65 = sadd.s32 %s64, 1
    %p68 = scmp.eq.s32.totalorder %s9, 1
    %p69 = scmp.ne.s32.totalorder %s64, %s66
    %p70 = scmp.eq.s32.totalorder %s9, 0
    %p71 = por %p69, %p70
    %p72 = scmp.ne.s32.totalorder %s64, %s66
    %p73 = scmp.eq.s32.totalorder %s14, 1
    %p74 = por %p72, %p73
    %p75 = scmp.ne.s32.totalorder %s66, %s67
    %p76 = scmp.eq.s32.totalorder %s14, 0
    %p77 = por %p75, %p76
    %p78 = scmp.ne.s32.totalorder %s66, %s67
    %p79 = scmp.eq.s32.totalorder %s15, 1
    %p80 = por %p78, %p79
    %p82 = scmp.ne.s32.totalorder %s67, %s81
    %p83 = scmp.eq.s32.totalorder %s15, 0
    %p84 = por %p82, %p83
    %s85 = ssub.s32 %s9, %s16
    %p86 = scmp.eq.s32.totalorder %s85, 0
    %s88 = sadd.s32 %s87, 1
    %s89 = scalar_select %p86, %s87, %s88
    %p92 = pneg %p86
    %p93 = scmp.eq.s32.totalorder %s9, 1
    %p94 = por %p92, %p93
    %p95 = scmp.ne.s32.totalorder %s87, %s90
    %p96 = scmp.eq.s32.totalorder %s9, 0
    %p97 = por %p95, %p96
    %p98 = scmp.ne.s32.totalorder %s87, %s90
    %p99 = scmp.eq.s32.totalorder %s14, 1
    %p100 = por %p98, %p99
    %p101 = scmp.ne.s32.totalorder %s90, %s91
    %p102 = scmp.eq.s32.totalorder %s14, 0
    %p103 = por %p101, %p102
    %p104 = scmp.ne.s32.totalorder %s90, %s91
    %p105 = scmp.eq.s32.totalorder %s15, 1
    %p106 = por %p104, %p105
    %p108 = scmp.ne.s32.totalorder %s91, %s107
    %p109 = scmp.eq.s32.totalorder %s15, 0
    %p110 = por %p108, %p109
    %p111 = scmp.le.s32.totalorder 1, %s9
    %p112 = scmp.lt.s32.totalorder %s9, 3
    %p113 = pnand %p111, %p112
    %p114 = pneg %p113
    // Predicated region
    $region9: #{resnext_block_forward.5} parent=5 // pred_check
      _
    $region10: #{resnext_block_forward.5} parent=5 // pred_check_branch
      %116 = sbr.rel (%p113) target = $region12
    $region11: #{resnext_block_forward.5} parent=5 // pred_region
      %s117 = ssub.s32 %s9, 1
      // Predicated region
      $region13: #{resnext_block_forward.5} parent=11 // pred_check
        %p118 = pneg %p56
      $region14: #{resnext_block_forward.5} parent=11 // pred_check_branch
        %120 = sbr.rel (%p118) target = $region16
      $region15: #{resnext_block_forward.5} parent=11 // pred_region
        _
      $region16: #{resnext_block_forward.5} parent=11 // pred_fallthru
        _
      // Predicated region
      $region17: #{resnext_block_forward.5} parent=11 // pred_check
        %p121 = pneg %p77
      $region18: #{resnext_block_forward.5} parent=11 // pred_check_branch
        %123 = sbr.rel (%p121) target = $region20
      $region19: #{resnext_block_forward.5} parent=11 // pred_region
        _
      $region20: #{resnext_block_forward.5} parent=11 // pred_fallthru
        _
    $region12: #{resnext_block_forward.5} parent=5 // pred_fallthru
      _
    %p124 = scmp.lt.s32.totalorder %s9, 2
    // Predicated region
    $region21: #{resnext_block_forward.5} parent=5 // pred_check
      %p125 = pneg %p124
    $region22: #{resnext_block_forward.5} parent=5 // pred_check_branch
      %127 = sbr.rel (%p125) target = $region24
    $region23: #{resnext_block_forward.5} parent=5 // pred_region
      // Predicated region
      $region25: #{resnext_block_forward.5} parent=23 // pred_check
        %p128 = pneg %p29
      $region26: #{resnext_block_forward.5} parent=23 // pred_check_branch
        %130 = sbr.rel (%p128) target = $region28
      $region27: #{resnext_block_forward.5} parent=23 // pred_region
        %s131 = smul.u32 4, %s9
        %p132 = scmp.lt.s32.totalorder %s131, 7
        %s133 = scalar_select %p132, %s131, 7
        %s134 = smul.addr %s133, 18
        %s135 = smul.addr %s134, 4
        %s136 = scalar_lea.vmem %s0, %s135
        %s137 = smul.u32 4, %s9
      $region28: #{resnext_block_forward.5} parent=23 // pred_fallthru
        _
    $region24: #{resnext_block_forward.5} parent=5 // pred_fallthru
      _
    %p138 = scmp.le.s32.totalorder 1, %s9
    %p139 = scmp.lt.s32.totalorder %s9, 3
    %p140 = pnand %p138, %p139
    %p141 = pneg %p140
    // Predicated region
    $region29: #{resnext_block_forward.5} parent=5 // pred_check
      _
    $region30: #{resnext_block_forward.5} parent=5 // pred_check_branch
      %143 = sbr.rel (%p140) target = $region32
    $region31: #{resnext_block_forward.5} parent=5 // pred_region
      %s144 = ssub.s32 %s9, 1
      %s145 = smul.u32 4, %s14
      %p146 = scmp.lt.s32.totalorder %s145, 7
      %s147 = scalar_select %p146, %s145, 7
      %s148 = smul.addr %s147, 18
      %s149 = smul.addr %s148, 4
      %s150 = scalar_lea.vmem %s0, %s149
      %p151 = pneg %p35
      %p152 = pneg %p32
      %p153 = pneg %p56
      %p154 = pneg %p53
      %p155 = pneg %p77
      %p156 = pneg %p74
      %p157 = pneg %p103
      %p158 = pneg %p100
      %p159 = scmp.lt.s32.totalorder %s14, 1
      %s160 = scalar_select %p159, %s14, 1
      %s161 = smul.addr %s160, 8
      %s162 = smul.addr %s161, 4
      %s163 = scalar_lea.vmem %s3, %s162
      %s164 = smul.u32 4, %s14
      %p165 = scmp.lt.s32.totalorder %s164, 7
      %s166 = scalar_select %p165, %s164, 7
      %s167 = smul.addr %s166, 18
      %s168 = smul.addr %s167, 4
      %s169 = scalar_lea.vmem %s0, %s168
      %s170 = smul.u32 4, %s14
      %p171 = scmp.lt.s32.totalorder %s14, 1
      %s172 = scalar_select %p171, %s14, 1
      %s173 = smul.addr %s172, 8
      %s174 = smul.addr %s173, 4
      %s175 = scalar_lea.vmem %s3, %s174
      %v177 = vld [vmem:[%s169] sm:$0xf]
      %v178 = vld [vmem:[%s169 + $0x8] sm:$0xf]
      %v179 = vld [vmem:[%s169 + $0x10] sm:$0xf]
      %v180 = vld [vmem:[%s169 + $0x18] sm:$0xf]
      %v181 = vld [vmem:[%s169 + $0x20] sm:$0xf]
      %v182 = vld [vmem:[%s169 + $0x28] sm:$0xf]
      %v183 = vld [vmem:[%s169 + $0x30] sm:$0xf]
      %v184 = vld [vmem:[%s169 + $0x38] sm:$0xf]
      %v185 = vld [vmem:[%s1] sm:$0x1]
      %s186 = scalar_lea.vmem %s169, 72
      %v187 = vld [vmem:[%s186] sm:$0xf]
      %v188 = vld [vmem:[%s186 + $0x8] sm:$0xf]
      %v189 = vld [vmem:[%s186 + $0x10] sm:$0xf]
      %v190 = vld [vmem:[%s186 + $0x18] sm:$0xf]
      %v191 = vld [vmem:[%s186 + $0x20] sm:$0xf]
      %v192 = vld [vmem:[%s186 + $0x28] sm:$0xf]
      %v193 = vld [vmem:[%s186 + $0x30] sm:$0xf]
      %v194 = vld [vmem:[%s186 + $0x38] sm:$0xf]
      %s195 = scalar_lea.vmem %s1, 1
      %v196 = vld [vmem:[%s195] sm:$0x1]
      %v205 = vunpack.c.l.b16 %v187
      %v206 = vunpack.c.l.b16 %v188
      %v207 = vunpack.c.l.b16 %v189
      %v208 = vunpack.c.l.b16 %v190
      %v209 = vunpack.c.l.b16 %v191
      %v210 = vunpack.c.l.b16 %v192
      %v211 = vunpack.c.l.b16 %v193
      %v212 = vunpack.c.l.b16 %v194
      %v213 = vpack.c.b16 %v206, %v205
      %v214 = vpack.c.b16 %v208, %v207
      %v215 = vpack.c.b16 %v210, %v209
      %v216 = vpack.c.b16 %v212, %v211
      %vm217 = vcmask 15360
      %v219 = vsel %vm217, %v213, 0
      %v222 = vsel %vm217, %v214, 0
      %v225 = vsel %vm217, %v215, 0
      %v228 = vsel %vm217, %v216, 0
      %vm230 = vcmask 1040384
      %v232 = vsel %vm230, %v196, 0
      %234 = vmatprep.subr.bf16.mxu0 0
      %235 = vmatpush1.bf16.msra.mxu0 %v232
      %236 = vmatprep.subr.bf16.mxu0 0
      %237 = vmatpush1.bf16.msra.mxu0 0
      %238 = vmatprep.subr.bf16.mxu0 0
      %239 = vmatpush1.bf16.msra.mxu0 0
      %240 = vmatprep.subr.bf16.mxu0 0
      %241 = vmatpush1.bf16.msra.mxu0 0
      %242 = vmatprep.subr.bf16.mxu0 0
      %243 = vmatpush1.bf16.msra.mxu0 0
      %244 = vmatprep.subr.bf16.mxu0 0
      %245 = vmatpush1.bf16.msra.mxu0 0
      %246 = vmatprep.subr.bf16.mxu0 0
      %247 = vmatpush1.bf16.msra.mxu0 0
      %248 = vmatprep.subr.bf16.mxu0 0
      %249 = vmatpush1.bf16.msra.mxu0 0
      %250 = vmatprep.subr.bf16.mxu0 0
      %251 = vmatpush1.bf16.msra.mxu0 0
      %252 = vmatprep.subr.bf16.mxu0 0
      %253 = vmatpush1.bf16.msra.mxu0 0
      %254 = vmatprep.subr.bf16.mxu0 0
      %255 = vmatpush1.bf16.msra.mxu0 0
      %256 = vmatprep.subr.bf16.mxu0 0
      %257 = vmatpush1.bf16.msra.mxu0 0
      %258 = vmatprep.subr.bf16.mxu0 0
      %259 = vmatpush1.bf16.msra.mxu0 0
      %260 = vmatprep.subr.bf16.mxu0 0
      %261 = vmatpush1.bf16.msra.mxu0 0
      %262 = vmatprep.subr.bf16.mxu0 0
      %263 = vmatpush1.bf16.msra.mxu0 0
      %264 = vmatprep.subr.bf16.mxu0 0
      %265 = vmatpush1.bf16.msra.mxu0 0
      %266 = vmatprep.mubr.bf16.mxu0 0
      %267 = vmatmul.mubr.bf16.gmra.mrb[0].mxu0 %v219
      %v268 = vpop.f32.mrb[0].mxu0
      %v269 = vadd.f32 0.0, %v268
      %v270 = vpop.f32.mrb[0].mxu0
      %v271 = vpop.f32.mrb[0].mxu0
      %v272 = vadd.f32 0.0, %v271
      %v273 = vpop.f32.mrb[0].mxu0
      %274 = vmatprep.mubr.bf16.mxu0 0
      %275 = vmatmul.mubr.bf16.gmra.mrb[0].mxu0 %v222
      %v276 = vpop.f32.mrb[0].mxu0
      %v277 = vadd.f32 0.0, %v276
      %v278 = vpop.f32.mrb[0].mxu0
      %v279 = vpop.f32.mrb[0].mxu0
      %v280 = vadd.f32 0.0, %v279
      %v281 = vpop.f32.mrb[0].mxu0
      %282 = vmatprep.mubr.bf16.mxu0 0
      %283 = vmatmul.mubr.bf16.gmra.mrb[0].mxu0 %v225
      %v284 = vpop.f32.mrb[0].mxu0
      %v285 = vadd.f32 0.0, %v284
      %v286 = vpop.f32.mrb[0].mxu0
      %v287 = vpop.f32.mrb[0].mxu0
      %v288 = vadd.f32 0.0, %v287
      %v289 = vpop.f32.mrb[0].mxu0
      %290 = vmatprep.mubr.bf16.mxu0 0
      %291 = vmatmul.mubr.bf16.gmra.mrb[0].mxu0 %v228
      %v292 = vpop.f32.mrb[0].mxu0
      %v293 = vadd.f32 0.0, %v292
      %v294 = vpop.f32.mrb[0].mxu0
      %v295 = vpop.f32.mrb[0].mxu0
      %v296 = vadd.f32 0.0, %v295
      %v297 = vpop.f32.mrb[0].mxu0
      %298 = vdwg.mxu0
      %v307 = vunpack.c.l.b16 %v177
      %v308 = vunpack.c.l.b16 %v178
      %v309 = vunpack.c.l.b16 %v179
      %v310 = vunpack.c.l.b16 %v180
      %v311 = vunpack.c.l.b16 %v181
      %v312 = vunpack.c.l.b16 %v182
      %v313 = vunpack.c.l.b16 %v183
      %v314 = vunpack.c.l.b16 %v184
      %v315 = vpack.c.b16 %v308, %v307
      %v316 = vpack.c.b16 %v310, %v309
      %v317 = vpack.c.b16 %v312, %v311
      %v318 = vpack.c.b16 %v314, %v313
      %v320 = vsel %vm217, %v315, 0
      %v323 = vsel %vm217, %v316, 0
      %v326 = vsel %vm217, %v317, 0
      %v329 = vsel %vm217, %v318, 0
      %v332 = vsel %vm230, %v185, 0
      %334 = vmatprep.subr.bf16.mxu0 0
      %335 = vmatpush1.bf16.msra.mxu0 %v332
      %336 = vmatprep.subr.bf16.mxu0 0
      %337 = vmatpush1.bf16.msra.mxu0 0
      %338 = vmatprep.subr.bf16.mxu0 0
      %339 = vmatpush1.bf16.msra.mxu0 0
      %340 = vmatprep.subr.bf16.mxu0 0
      %341 = vmatpush1.bf16.msra.mxu0 0
      %342 = vmatprep.subr.bf16.mxu0 0
      %343 = vmatpush1.bf16.msra.mxu0 0
      %344 = vmatprep.subr.bf16.mxu0 0
      %345 = vmatpush1.bf16.msra.mxu0 0
      %346 = vmatprep.subr.bf16.mxu0 0
      %347 = vmatpush1.bf16.msra.mxu0 0
      %348 = vmatprep.subr.bf16.mxu0 0
      %349 = vmatpush1.bf16.msra.mxu0 0
      %350 = vmatprep.subr.bf16.mxu0 0
      %351 = vmatpush1.bf16.msra.mxu0 0
      %352 = vmatprep.subr.bf16.mxu0 0
      %353 = vmatpush1.bf16.msra.mxu0 0
      %354 = vmatprep.subr.bf16.mxu0 0
      %355 = vmatpush1.bf16.msra.mxu0 0
      %356 = vmatprep.subr.bf16.mxu0 0
      %357 = vmatpush1.bf16.msra.mxu0 0
      %358 = vmatprep.subr.bf16.mxu0 0
      %359 = vmatpush1.bf16.msra.mxu0 0
      %360 = vmatprep.subr.bf16.mxu0 0
      %361 = vmatpush1.bf16.msra.mxu0 0
      %362 = vmatprep.subr.bf16.mxu0 0
      %363 = vmatpush1.bf16.msra.mxu0 0
      %364 = vmatprep.subr.bf16.mxu0 0
      %365 = vmatpush1.bf16.msra.mxu0 0
      %366 = vmatprep.mubr.bf16.mxu0 0
      %367 = vmatmul.mubr.bf16.gmra.mrb[0].mxu0 %v320
      %v368 = vpop.f32.mrb[0].mxu0
      %v369 = vadd.f32 %v269, %v368
      %v370 = vpop.f32.mrb[0].mxu0
      %v371 = vpop.f32.mrb[0].mxu0
      %v372 = vadd.f32 %v272, %v371
      %v373 = vpop.f32.mrb[0].mxu0
      %374 = vmatprep.mubr.bf16.mxu0 0
      %375 = vmatmul.mubr.bf16.gmra.mrb[0].mxu0 %v323
      %v376 = vpop.f32.mrb[0].mxu0
      %v377 = vadd.f32 %v277, %v376
      %v378 = vpop.f32.mrb[0].mxu0
      %v379 = vpop.f32.mrb[0].mxu0
      %v380 = vadd.f32 %v280, %v379
      %v381 = vpop.f32.mrb[0].mxu0
      %382 = vmatprep.mubr.bf16.mxu0 0
      %383 = vmatmul.mubr.bf16.gmra.mrb[0].mxu0 %v326
      %v384 = vpop.f32.mrb[0].mxu0
      %v385 = vadd.f32 %v285, %v384
      %v386 = vpop.f32.mrb[0].mxu0
      %v387 = vpop.f32.mrb[0].mxu0
      %v388 = vadd.f32 %v288, %v387
      %v389 = vpop.f32.mrb[0].mxu0
      %390 = vmatprep.mubr.bf16.mxu0 0
      %391 = vmatmul.mubr.bf16.gmra.mrb[0].mxu0 %v329
      %v392 = vpop.f32.mrb[0].mxu0
      %v393 = vadd.f32 %v293, %v392
      %v394 = vpop.f32.mrb[0].mxu0
      %v395 = vpop.f32.mrb[0].mxu0
      %v396 = vadd.f32 %v296, %v395
      %v397 = vpop.f32.mrb[0].mxu0
      %398 = vdwg.mxu0
      %v399 = vld [vmem:[%s169] sm:$0xf]
      %v400 = vld [vmem:[%s169 + $0x4] sm:$0x1]
      %v401 = vld [vmem:[%s169 + $0x8] sm:$0xf]
      %v402 = vld [vmem:[%s169 + $0xc] sm:$0x1]
      %v403 = vld [vmem:[%s169 + $0x10] sm:$0xf]
      %v404 = vld [vmem:[%s169 + $0x14] sm:$0x1]
      %v405 = vld [vmem:[%s169 + $0x18] sm:$0xf]
      %v406 = vld [vmem:[%s169 + $0x1c] sm:$0x1]
      %v407 = vld [vmem:[%s169 + $0x20] sm:$0xf]
      %v408 = vld [vmem:[%s169 + $0x24] sm:$0x1]
      %v409 = vld [vmem:[%s169 + $0x28] sm:$0xf]
      %v410 = vld [vmem:[%s169 + $0x2c] sm:$0x1]
      %v411 = vld [vmem:[%s169 + $0x30] sm:$0xf]
      %v412 = vld [vmem:[%s169 + $0x34] sm:$0x1]
      %v413 = vld [vmem:[%s169 + $0x38] sm:$0xf]
      %v414 = vld [vmem:[%s169 + $0x3c] sm:$0x1]
      %vm415 = vsmask.f32 3328
      %vm416 = vsmask.f32 7440
      %vm417 = vmor %vm415, %vm416
      %v419 = vshrl.u32 %v399, 16
      %v421 = vrot.slane %v419, 4
      %v422 = vshll.u32 %v399, 16
      %v424 = vrot.slane %v422, 5
      %v425 = vor.u32 %v421, %v424
      %v426 = vrot.slane %v425, 4
      %v428 = vshll.u32 %v400, 16
      %v430 = vrot.slane %v428, 5
      %v431 = vsel %vm417, %v426, %v430
      %v433 = vshrl.u32 %v401, 16
      %v435 = vrot.slane %v433, 4
      %v436 = vshll.u32 %v401, 16
      %v438 = vrot.slane %v436, 5
      %v439 = vor.u32 %v435, %v438
      %v440 = vrot.slane %v439, 4
      %v442 = vshll.u32 %v402, 16
      %v444 = vrot.slane %v442, 5
      %v445 = vsel %vm417, %v440, %v444
      %v447 = vshrl.u32 %v403, 16
      %v449 = vrot.slane %v447, 4
      %v450 = vshll.u32 %v403, 16
      %v452 = vrot.slane %v450, 5
      %v453 = vor.u32 %v449, %v452
      %v454 = vrot.slane %v453, 4
      %v456 = vshll.u32 %v404, 16
      %v458 = vrot.slane %v456, 5
      %v459 = vsel %vm417, %v454, %v458
      %v461 = vshrl.u32 %v405, 16
      %v463 = vrot.slane %v461, 4
      %v464 = vshll.u32 %v405, 16
      %v466 = vrot.slane %v464, 5
      %v467 = vor.u32 %v463, %v466
      %v468 = vrot.slane %v467, 4
      %v470 = vshll.u32 %v406, 16
      %v472 = vrot.slane %v470, 5
      %v473 = vsel %vm417, %v468, %v472
      %v475 = vshrl.u32 %v407, 16
      %v477 = vrot.slane %v475, 4
      %v478 = vshll.u32 %v407, 16
      %v480 = vrot.slane %v478, 5
      %v481 = vor.u32 %v477, %v480
      %v482 = vrot.slane %v481, 4
      %v484 = vshll.u32 %v408, 16
      %v486 = vrot.slane %v484, 5
      %v487 = vsel %vm417, %v482, %v486
      %v489 = vshrl.u32 %v409, 16
      %v491 = vrot.slane %v489, 4
      %v492 = vshll.u32 %v409, 16
      %v494 = vrot.slane %v492, 5
      %v495 = vor.u32 %v491, %v494
      %v496 = vrot.slane %v495, 4
      %v498 = vshll.u32 %v410, 16
      %v500 = vrot.slane %v498, 5
      %v501 = vsel %vm417, %v496, %v500
      %v503 = vshrl.u32 %v411, 16
      %v505 = vrot.slane %v503, 4
      %v506 = vshll.u32 %v411, 16
      %v508 = vrot.slane %v506, 5
      %v509 = vor.u32 %v505, %v508
      %v510 = vrot.slane %v509, 4
      %v512 = vshll.u32 %v412, 16
      %v514 = vrot.slane %v512, 5
      %v515 = vsel %vm417, %v510, %v514
      %v517 = vshrl.u32 %v413, 16
      %v519 = vrot.slane %v517, 4
      %v520 = vshll.u32 %v413, 16
      %v522 = vrot.slane %v520, 5
      %v523 = vor.u32 %v519, %v522
      %v524 = vrot.slane %v523, 4
      %v526 = vshll.u32 %v414, 16
      %v528 = vrot.slane %v526, 5
      %v529 = vsel %vm417, %v524, %v528
      %s530 = scalar_lea.vmem %s1, 2
      %v531 = vld [vmem:[%s530] sm:$0x1]
      %v532 = vunpack.c.l.b16 %v431
      %v533 = vunpack.c.l.b16 %v445
      %v534 = vunpack.c.l.b16 %v459
      %v535 = vunpack.c.l.b16 %v473
      %v536 = vunpack.c.l.b16 %v487
      %v537 = vunpack.c.l.b16 %v501
      %v538 = vunpack.c.l.b16 %v515
      %v539 = vunpack.c.l.b16 %v529
      %v540 = vpack.c.b16 %v533, %v532
      %v541 = vpack.c.b16 %v535, %v534
      %v542 = vpack.c.b16 %v537, %v536
      %v543 = vpack.c.b16 %v539, %v538
      %v545 = vsel %vm217, %v540, 0
      %v548 = vsel %vm217, %v541, 0
      %v551 = vsel %vm217, %v542, 0
      %v554 = vsel %vm217, %v543, 0
      %v557 = vsel %vm230, %v531, 0
      %559 = vmatprep.subr.bf16.mxu0 0
      %560 = vmatpush1.bf16.msra.mxu0 %v557
      %561 = vmatprep.subr.bf16.mxu0 0
      %562 = vmatpush1.bf16.msra.mxu0 0
      %563 = vmatprep.subr.bf16.mxu0 0
      %564 = vmatpush1.bf16.msra.mxu0 0
      %565 = vmatprep.subr.bf16.mxu0 0
      %566 = vmatpush1.bf16.msra.mxu0 0
      %567 = vmatprep.subr.bf16.mxu0 0
      %568 = vmatpush1.bf16.msra.mxu0 0
      %569 = vmatprep.subr.bf16.mxu0 0
      %570 = vmatpush1.bf16.msra.mxu0 0
      %571 = vmatprep.subr.bf16.mxu0 0
      %572 = vmatpush1.bf16.msra.mxu0 0
      %573 = vmatprep.subr.bf16.mxu0 0
      %574 = vmatpush1.bf16.msra.mxu0 0
      %575 = vmatprep.subr.bf16.mxu0 0
      %576 = vmatpush1.bf16.msra.mxu0 0
      %577 = vmatprep.subr.bf16.mxu0 0
      %578 = vmatpush1.bf16.msra.mxu0 0
      %579 = vmatprep.subr.bf16.mxu0 0
      %580 = vmatpush1.bf16.msra.mxu0 0
      %581 = vmatprep.subr.bf16.mxu0 0
      %582 = vmatpush1.bf16.msra.mxu0 0
      %583 = vmatprep.subr.bf16.mxu0 0
      %584 = vmatpush1.bf16.msra.mxu0 0
      %585 = vmatprep.subr.bf16.mxu0 0
      %586 = vmatpush1.bf16.msra.mxu0 0
      %587 = vmatprep.subr.bf16.mxu0 0
      %588 = vmatpush1.bf16.msra.mxu0 0
      %589 = vmatprep.subr.bf16.mxu0 0
      %590 = vmatpush1.bf16.msra.mxu0 0
      %591 = vmatprep.mubr.bf16.mxu0 0
      %592 = vmatmul.mubr.bf16.gmra.mrb[0].mxu0 %v545
      %v593 = vpop.f32.mrb[0].mxu0
      %v594 = vadd.f32 0.0, %v593
      %v595 = vpop.f32.mrb[0].mxu0
      %v596 = vpop.f32.mrb[0].mxu0
      %v597 = vadd.f32 0.0, %v596
      %v598 = vpop.f32.mrb[0].mxu0
      %599 = vmatprep.mubr.bf16.mxu0 0
      %600 = vmatmul.mubr.bf16.gmra.mrb[0].mxu0 %v548
      %v601 = vpop.f32.mrb[0].mxu0
      %v602 = vadd.f32 0.0, %v601
      %v603 = vpop.f32.mrb[0].mxu0
      %v604 = vpop.f32.mrb[0].mxu0
      %v605 = vadd.f32 0.0, %v604
      %v606 = vpop.f32.mrb[0].mxu0
      %607 = vmatprep.mubr.bf16.mxu0 0
      %608 = vmatmul.mubr.bf16.gmra.mrb[0].mxu0 %v551
      %v609 = vpop.f32.mrb[0].mxu0
      %v610 = vadd.f32 0.0, %v609
      %v611 = vpop.f32.mrb[0].mxu0
      %v612 = vpop.f32.mrb[0].mxu0
      %v613 = vadd.f32 0.0, %v612
      %v614 = vpop.f32.mrb[0].mxu0
      %615 = vmatprep.mubr.bf16.mxu0 0
      %616 = vmatmul.mubr.bf16.gmra.mrb[0].mxu0 %v554
      %v617 = vpop.f32.mrb[0].mxu0
      %v618 = vadd.f32 0.0, %v617
      %v619 = vpop.f32.mrb[0].mxu0
      %v620 = vpop.f32.mrb[0].mxu0
      %v621 = vadd.f32 0.0, %v620
      %v622 = vpop.f32.mrb[0].mxu0
      %623 = vdwg.mxu0
      %v624 = vadd.f32 %v369, %v594
      %v625 = vadd.f32 %v372, %v597
      %v626 = vadd.f32 %v377, %v602
      %v627 = vadd.f32 %v380, %v605
      %v628 = vadd.f32 %v385, %v610
      %v629 = vadd.f32 %v388, %v613
      %v630 = vadd.f32 %v393, %v618
      %v631 = vadd.f32 %v396, %v621
      %s632 = scalar_lea.vmem %s169, 144
      %v633 = vld [vmem:[%s632] sm:$0xf]
      %v634 = vld [vmem:[%s632 + $0x8] sm:$0xf]
      %v635 = vld [vmem:[%s632 + $0x10] sm:$0xf]
      %v636 = vld [vmem:[%s632 + $0x18] sm:$0xf]
      %v637 = vld [vmem:[%s632 + $0x20] sm:$0xf]
      %v638 = vld [vmem:[%s632 + $0x28] sm:$0xf]
      %v639 = vld [vmem:[%s632 + $0x30] sm:$0xf]
      %v640 = vld [vmem:[%s632 + $0x38] sm:$0xf]
      %s641 = scalar_lea.vmem %s1, 3
      %v642 = vld [vmem:[%s641] sm:$0x1]
      %v651 = vunpack.c.l.b16 %v633
      %v652 = vunpack.c.l.b16 %v634
      %v653 = vunpack.c.l.b16 %v635
      %v654 = vunpack.c.l.b16 %v636
      %v655 = vunpack.c.l.b16 %v637
      %v656 = vunpack.c.l.b16 %v638
      %v657 = vunpack.c.l.b16 %v639
      %v658 = vunpack.c.l.b16 %v640
      %v659 = vpack.c.b16 %v652, %v651
      %v660 = vpack.c.b16 %v654, %v653
      %v661 = vpack.c.b16 %v656, %v655
      %v662 = vpack.c.b16 %v658, %v657
      %v664 = vsel %vm217, %v659, 0
      %v667 = vsel %vm217, %v660, 0
      %v670 = vsel %vm217, %v661, 0
      %v673 = vsel %vm217, %v662, 0
      %v676 = vsel %vm230, %v642, 0
      %678 = vmatprep.subr.bf16.mxu0 0
      %679 = vmatpush1.bf16.msra.mxu0 %v676
      %680 = vmatprep.subr.bf16.mxu0 0
      %681 = vmatpush1.bf16.msra.mxu0 0
      %682 = vmatprep.subr.bf16.mxu0 0
      %683 = vmatpush1.bf16.msra.mxu0 0
      %684 = vmatprep.subr.bf16.mxu0 0
      %685 = vmatpush1.bf16.msra.mxu0 0
      %686 = vmatprep.subr.bf16.mxu0 0
      %687 = vmatpush1.bf16.msra.mxu0 0
      %688 = vmatprep.subr.bf16.mxu0 0
      %689 = vmatpush1.bf16.msra.mxu0 0
      %690 = vmatprep.subr.bf16.mxu0 0
      %691 = vmatpush1.bf16.msra.mxu0 0
      %692 = vmatprep.subr.bf16.mxu0 0
      %693 = vmatpush1.bf16.msra.mxu0 0
      %694 = vmatprep.subr.bf16.mxu0 0
      %695 = vmatpush1.bf16.msra.mxu0 0
      %696 = vmatprep.subr.bf16.mxu0 0
      %697 = vmatpush1.bf16.msra.mxu0 0
      %698 = vmatprep.subr.bf16.mxu0 0
      %699 = vmatpush1.bf16.msra.mxu0 0
      %700 = vmatprep.subr.bf16.mxu0 0
      %701 = vmatpush1.bf16.msra.mxu0 0
      %702 = vmatprep.subr.bf16.mxu0 0
      %703 = vmatpush1.bf16.msra.mxu0 0
      %704 = vmatprep.subr.bf16.mxu0 0
      %705 = vmatpush1.bf16.msra.mxu0 0
      %706 = vmatprep.subr.bf16.mxu0 0
      %707 = vmatpush1.bf16.msra.mxu0 0
      %708 = vmatprep.subr.bf16.mxu0 0
      %709 = vmatpush1.bf16.msra.mxu0 0
      %710 = vmatprep.mubr.bf16.mxu0 0
      %711 = vmatmul.mubr.bf16.gmra.mrb[0].mxu0 %v664
      %v712 = vpop.f32.mrb[0].mxu0
      %v713 = vadd.f32 0.0, %v712
      %v714 = vpop.f32.mrb[0].mxu0
      %v715 = vpop.f32.mrb[0].mxu0
      %v716 = vadd.f32 0.0, %v715
      %v717 = vpop.f32.mrb[0].mxu0
      %718 = vmatprep.mubr.bf16.mxu0 0
      %719 = vmatmul.mubr.bf16.gmra.mrb[0].mxu0 %v667
      %v720 = vpop.f32.mrb[0].mxu0
      %v721 = vadd.f32 0.0, %v720
      %v722 = vpop.f32.mrb[0].mxu0
      %v723 = vpop.f32.mrb[0].mxu0
      %v724 = vadd.f32 0.0, %v723
      %v725 = vpop.f32.mrb[0].mxu0
      %726 = vmatprep.mubr.bf16.mxu0 0
      %727 = vmatmul.mubr.bf16.gmra.mrb[0].mxu0 %v670
      %v728 = vpop.f32.mrb[0].mxu0
      %v729 = vadd.f32 0.0, %v728
      %v730 = vpop.f32.mrb[0].mxu0
      %v731 = vpop.f32.mrb[0].mxu0
      %v732 = vadd.f32 0.0, %v731
      %v733 = vpop.f32.mrb[0].mxu0
      %734 = vmatprep.mubr.bf16.mxu0 0
      %735 = vmatmul.mubr.bf16.gmra.mrb[0].mxu0 %v673
      %v736 = vpop.f32.mrb[0].mxu0
      %v737 = vadd.f32 0.0, %v736
      %v738 = vpop.f32.mrb[0].mxu0
      %v739 = vpop.f32.mrb[0].mxu0
      %v740 = vadd.f32 0.0, %v739
      %v741 = vpop.f32.mrb[0].mxu0
      %742 = vdwg.mxu0
      %v743 = vadd.f32 %v624, %v713
      %v744 = vadd.f32 %v625, %v716
      %v745 = vadd.f32 %v626, %v721
      %v746 = vadd.f32 %v627, %v724
      %v747 = vadd.f32 %v628, %v729
      %v748 = vadd.f32 %v629, %v732
      %v749 = vadd.f32 %v630, %v737
      %v750 = vadd.f32 %v631, %v740
      %s751 = scalar_lea.vmem %s169, 216
      %v752 = vld [vmem:[%s751] sm:$0xf]
      %v753 = vld [vmem:[%s751 + $0x8] sm:$0xf]
      %v754 = vld [vmem:[%s751 + $0x10] sm:$0xf]
      %v755 = vld [vmem:[%s751 + $0x18] sm:$0xf]
      %v756 = vld [vmem:[%s751 + $0x20] sm:$0xf]
      %v757 = vld [vmem:[%s751 + $0x28] sm:$0xf]
      %v758 = vld [vmem:[%s751 + $0x30] sm:$0xf]
      %v759 = vld [vmem:[%s751 + $0x38] sm:$0xf]
      %s760 = scalar_lea.vmem %s1, 4
      %v761 = vld [vmem:[%s760] sm:$0x1]
      %v770 = vunpack.c.l.b16 %v752
      %v771 = vunpack.c.l.b16 %v753
      %v772 = vunpack.c.l.b16 %v754
      %v773 = vunpack.c.l.b16 %v755
      %v774 = vunpack.c.l.b16 %v756
      %v775 = vunpack.c.l.b16 %v757
      %v776 = vunpack.c.l.b16 %v758
      %v777 = vunpack.c.l.b16 %v759
      %v778 = vpack.c.b16 %v771, %v770
      %v779 = vpack.c.b16 %v773, %v772
      %v780 = vpack.c.b16 %v775, %v774
      %v781 = vpack.c.b16 %v777, %v776
      %v783 = vsel %vm217, %v778, 0
      %v786 = vsel %vm217, %v779, 0
      %v789 = vsel %vm217, %v780, 0
      %v792 = vsel %vm217, %v781, 0
      %v795 = vsel %vm230, %v761, 0
      %797 = vmatprep.subr.bf16.mxu0 0
      %798 = vmatpush1.bf16.msra.mxu0 %v795
      %799 = vmatprep.subr.bf16.mxu0 0
      %800 = vmatpush1.bf16.msra.mxu0 0
      %801 = vmatprep.subr.bf16.mxu0 0
      %802 = vmatpush1.bf16.msra.mxu0 0
      %803 = vmatprep.subr.bf16.mxu0 0
      %804 = vmatpush1.bf16.msra.mxu0 0
      %805 = vmatprep.subr.bf16.mxu0 0
      %806 = vmatpush1.bf16.msra.mxu0 0
      %807 = vmatprep.subr.bf16.mxu0 0
      %808 = vmatpush1.bf16.msra.mxu0 0
      %809 = vmatprep.subr.bf16.mxu0 0
      %810 = vmatpush1.bf16.msra.mxu0 0
      %811 = vmatprep.subr.bf16.mxu0 0
      %812 = vmatpush1.bf16.msra.mxu0 0
      %813 = vmatprep.subr.bf16.mxu0 0
      %814 = vmatpush1.bf16.msra.mxu0 0
      %815 = vmatprep.subr.bf16.mxu0 0
      %816 = vmatpush1.bf16.msra.mxu0 0
      %817 = vmatprep.subr.bf16.mxu0 0
      %818 = vmatpush1.bf16.msra.mxu0 0
      %819 = vmatprep.subr.bf16.mxu0 0
      %820 = vmatpush1.bf16.msra.mxu0 0
      %821 = vmatprep.subr.bf16.mxu0 0
      %822 = vmatpush1.bf16.msra.mxu0 0
      %823 = vmatprep.subr.bf16.mxu0 0
      %824 = vmatpush1.bf16.msra.mxu0 0
      %825 = vmatprep.subr.bf16.mxu0 0
      %826 = vmatpush1.bf16.msra.mxu0 0
      %827 = vmatprep.subr.bf16.mxu0 0
      %828 = vmatpush1.bf16.msra.mxu0 0
      %829 = vmatprep.mubr.bf16.mxu0 0
      %830 = vmatmul.mubr.bf16.gmra.mrb[0].mxu0 %v783
      %v831 = vpop.f32.mrb[0].mxu0
      %v832 = vadd.f32 0.0, %v831
      %v833 = vpop.f32.mrb[0].mxu0
      %v834 = vpop.f32.mrb[0].mxu0
      %v835 = vadd.f32 0.0, %v834
      %v836 = vpop.f32.mrb[0].mxu0
      %837 = vmatprep.mubr.bf16.mxu0 0
      %838 = vmatmul.mubr.bf16.gmra.mrb[0].mxu0 %v786
      %v839 = vpop.f32.mrb[0].mxu0
      %v840 = vadd.f32 0.0, %v839
      %v841 = vpop.f32.mrb[0].mxu0
      %v842 = vpop.f32.mrb[0].mxu0
      %v843 = vadd.f32 0.0, %v842
      %v844 = vpop.f32.mrb[0].mxu0
      %845 = vmatprep.mubr.bf16.mxu0 0
      %846 = vmatmul.mubr.bf16.gmra.mrb[0].mxu0 %v789
      %v847 = vpop.f32.mrb[0].mxu0
      %v848 = vadd.f32 0.0, %v847
      %v849 = vpop.f32.mrb[0].mxu0
      %v850 = vpop.f32.mrb[0].mxu0
      %v851 = vadd.f32 0.0, %v850
      %v852 = vpop.f32.mrb[0].mxu0
      %853 = vmatprep.mubr.bf16.mxu0 0
      %854 = vmatmul.mubr.bf16.gmra.mrb[0].mxu0 %v792
      %v855 = vpop.f32.mrb[0].mxu0
      %v856 = vadd.f32 0.0, %v855
      %v857 = vpop.f32.mrb[0].mxu0
      %v858 = vpop.f32.mrb[0].mxu0
      %v859 = vadd.f32 0.0, %v858
      %v860 = vpop.f32.mrb[0].mxu0
      %861 = vdwg.mxu0
      %v862 = vadd.f32 %v743, %v832
      %v863 = vadd.f32 %v744, %v835
      %v864 = vadd.f32 %v745, %v840
      %v865 = vadd.f32 %v746, %v843
      %v866 = vadd.f32 %v747, %v848
      %v867 = vadd.f32 %v748, %v851
      %v868 = vadd.f32 %v749, %v856
      %v869 = vadd.f32 %v750, %v859
      %v870 = vld [vmem:[%s632] sm:$0xf]
      %v871 = vld [vmem:[%s632 + $0x4] sm:$0x1]
      %v872 = vld [vmem:[%s632 + $0x8] sm:$0xf]
      %v873 = vld [vmem:[%s632 + $0xc] sm:$0x1]
      %v874 = vld [vmem:[%s632 + $0x10] sm:$0xf]
      %v875 = vld [vmem:[%s632 + $0x14] sm:$0x1]
      %v876 = vld [vmem:[%s632 + $0x18] sm:$0xf]
      %v877 = vld [vmem:[%s632 + $0x1c] sm:$0x1]
      %v878 = vld [vmem:[%s632 + $0x20] sm:$0xf]
      %v879 = vld [vmem:[%s632 + $0x24] sm:$0x1]
      %v880 = vld [vmem:[%s632 + $0x28] sm:$0xf]
      %v881 = vld [vmem:[%s632 + $0x2c] sm:$0x1]
      %v882 = vld [vmem:[%s632 + $0x30] sm:$0xf]
      %v883 = vld [vmem:[%s632 + $0x34] sm:$0x1]
      %v884 = vld [vmem:[%s632 + $0x38] sm:$0xf]
      %v885 = vld [vmem:[%s632 + $0x3c] sm:$0x1]
      %v887 = vshrl.u32 %v870, 16
      %v889 = vrot.slane %v887, 4
      %v890 = vshll.u32 %v870, 16
      %v892 = vrot.slane %v890, 5
      %v893 = vor.u32 %v889, %v892
      %v894 = vrot.slane %v893, 4
      %v896 = vshll.u32 %v871, 16
      %v898 = vrot.slane %v896, 5
      %v899 = vsel %vm417, %v894, %v898
      %v901 = vshrl.u32 %v872, 16
      %v903 = vrot.slane %v901, 4
      %v904 = vshll.u32 %v872, 16
      %v906 = vrot.slane %v904, 5
      %v907 = vor.u32 %v903, %v906
      %v908 = vrot.slane %v907, 4
      %v910 = vshll.u32 %v873, 16
      %v912 = vrot.slane %v910, 5
      %v913 = vsel %vm417, %v908, %v912
      %v915 = vshrl.u32 %v874, 16
      %v917 = vrot.slane %v915, 4
      %v918 = vshll.u32 %v874, 16
      %v920 = vrot.slane %v918, 5
      %v921 = vor.u32 %v917, %v920
      %v922 = vrot.slane %v921, 4
      %v924 = vshll.u32 %v875, 16
      %v926 = vrot.slane %v924, 5
      %v927 = vsel %vm417, %v922, %v926
      %v929 = vshrl.u32 %v876, 16
      %v931 = vrot.slane %v929, 4
      %v932 = vshll.u32 %v876, 16
      %v934 = vrot.slane %v932, 5
      %v935 = vor.u32 %v931, %v934
      %v936 = vrot.slane %v935, 4
      %v938 = vshll.u32 %v877, 16
      %v940 = vrot.slane %v938, 5
      %v941 = vsel %vm417, %v936, %v940
      %v943 = vshrl.u32 %v878, 16
      %v945 = vrot.slane %v943, 4
      %v946 = vshll.u32 %v878, 16
      %v948 = vrot.slane %v946, 5
      %v949 = vor.u32 %v945, %v948
      %v950 = vrot.slane %v949, 4
      %v952 = vshll.u32 %v879, 16
      %v954 = vrot.slane %v952, 5
      %v955 = vsel %vm417, %v950, %v954
      %v957 = vshrl.u32 %v880, 16
      %v959 = vrot.slane %v957, 4
      %v960 = vshll.u32 %v880, 16
      %v962 = vrot.slane %v960, 5
      %v963 = vor.u32 %v959, %v962
      %v964 = vrot.slane %v963, 4
      %v966 = vshll.u32 %v881, 16
      %v968 = vrot.slane %v966, 5
      %v969 = vsel %vm417, %v964, %v968
      %v971 = vshrl.u32 %v882, 16
      %v973 = vrot.slane %v971, 4
      %v974 = vshll.u32 %v882, 16
      %v976 = vrot.slane %v974, 5
      %v977 = vor.u32 %v973, %v976
      %v978 = vrot.slane %v977, 4
      %v980 = vshll.u32 %v883, 16
      %v982 = vrot.slane %v980, 5
      %v983 = vsel %vm417, %v978, %v982
      %v985 = vshrl.u32 %v884, 16
      %v987 = vrot.slane %v985, 4
      %v988 = vshll.u32 %v884, 16
      %v990 = vrot.slane %v988, 5
      %v991 = vor.u32 %v987, %v990
      %v992 = vrot.slane %v991, 4
      %v994 = vshll.u32 %v885, 16
      %v996 = vrot.slane %v994, 5
      %v997 = vsel %vm417, %v992, %v996
      %s998 = scalar_lea.vmem %s1, 5
      %v999 = vld [vmem:[%s998] sm:$0x1]
      %v1000 = vunpack.c.l.b16 %v899
      %v1001 = vunpack.c.l.b16 %v913
      %v1002 = vunpack.c.l.b16 %v927
      %v1003 = vunpack.c.l.b16 %v941
      %v1004 = vunpack.c.l.b16 %v955
      %v1005 = vunpack.c.l.b16 %v969
      %v1006 = vunpack.c.l.b16 %v983
      %v1007 = vunpack.c.l.b16 %v997
      %v1008 = vpack.c.b16 %v1001, %v1000
      %v1009 = vpack.c.b16 %v1003, %v1002
      %v1010 = vpack.c.b16 %v1005, %v1004
      %v1011 = vpack.c.b16 %v1007, %v1006
      %v1013 = vsel %vm217, %v1008, 0
      %v1016 = vsel %vm217, %v1009, 0
      %v1019 = vsel %vm217, %v1010, 0
      %v1022 = vsel %vm217, %v1011, 0
      %v1025 = vsel %vm230, %v999, 0
      %1027 = vmatprep.subr.bf16.mxu0 0
      %1028 = vmatpush1.bf16.msra.mxu0 %v1025
      %1029 = vmatprep.subr.bf16.mxu0 0
      %1030 = vmatpush1.bf16.msra.mxu0 0
      %1031 = vmatprep.subr.bf16.mxu0 0
      %1032 = vmatpush1.bf16.msra.mxu0 0
      %1033 = vmatprep.subr.bf16.mxu0 0
      %1034 = vmatpush1.bf16.msra.mxu0 0
      %1035 = vmatprep.subr.bf16.mxu0 0
      %1036 = vmatpush1.bf16.msra.mxu0 0
      %1037 = vmatprep.subr.bf16.mxu0 0
      %1038 = vmatpush1.bf16.msra.mxu0 0
      %1039 = vmatprep.subr.bf16.mxu0 0
      %1040 = vmatpush1.bf16.msra.mxu0 0
      %1041 = vmatprep.subr.bf16.mxu0 0
      %1042 = vmatpush1.bf16.msra.mxu0 0
      %1043 = vmatprep.subr.bf16.mxu0 0
      %1044 = vmatpush1.bf16.msra.mxu0 0
      %1045 = vmatprep.subr.bf16.mxu0 0
      %1046 = vmatpush1.bf16.msra.mxu0 0
      %1047 = vmatprep.subr.bf16.mxu0 0
      %1048 = vmatpush1.bf16.msra.mxu0 0
      %1049 = vmatprep.subr.bf16.mxu0 0
      %1050 = vmatpush1.bf16.msra.mxu0 0
      %1051 = vmatprep.subr.bf16.mxu0 0
      %1052 = vmatpush1.bf16.msra.mxu0 0
      %1053 = vmatprep.subr.bf16.mxu0 0
      %1054 = vmatpush1.bf16.msra.mxu0 0
      %1055 = vmatprep.subr.bf16.mxu0 0
      %1056 = vmatpush1.bf16.msra.mxu0 0
      %1057 = vmatprep.subr.bf16.mxu0 0
      %1058 = vmatpush1.bf16.msra.mxu0 0
      %1059 = vmatprep.mubr.bf16.mxu0 0
      %1060 = vmatmul.mubr.bf16.gmra.mrb[0].mxu0 %v1013
      %v1061 = vpop.f32.mrb[0].mxu0
      %v1062 = vadd.f32 0.0, %v1061
      %v1063 = vpop.f32.mrb[0].mxu0
      %v1064 = vpop.f32.mrb[0].mxu0
      %v1065 = vadd.f32 0.0, %v1064
      %v1066 = vpop.f32.mrb[0].mxu0
      %1067 = vmatprep.mubr.bf16.mxu0 0
      %1068 = vmatmul.mubr.bf16.gmra.mrb[0].mxu0 %v1016
      %v1069 = vpop.f32.mrb[0].mxu0
      %v1070 = vadd.f32 0.0, %v1069
      %v1071 = vpop.f32.mrb[0].mxu0
      %v1072 = vpop.f32.mrb[0].mxu0
      %v1073 = vadd.f32 0.0, %v1072
      %v1074 = vpop.f32.mrb[0].mxu0
      %1075 = vmatprep.mubr.bf16.mxu0 0
      %1076 = vmatmul.mubr.bf16.gmra.mrb[0].mxu0 %v1019
      %v1077 = vpop.f32.mrb[0].mxu0
      %v1078 = vadd.f32 0.0, %v1077
      %v1079 = vpop.f32.mrb[0].mxu0
      %v1080 = vpop.f32.mrb[0].mxu0
      %v1081 = vadd.f32 0.0, %v1080
      %v1082 = vpop.f32.mrb[0].mxu0
      %1083 = vmatprep.mubr.bf16.mxu0 0
      %1084 = vmatmul.mubr.bf16.gmra.mrb[0].mxu0 %v1022
      %v1085 = vpop.f32.mrb[0].mxu0
      %v1086 = vadd.f32 0.0, %v1085
      %v1087 = vpop.f32.mrb[0].mxu0
      %v1088 = vpop.f32.mrb[0].mxu0
      %v1089 = vadd.f32 0.0, %v1088
      %v1090 = vpop.f32.mrb[0].mxu0
      %1091 = vdwg.mxu0
      %v1092 = vadd.f32 %v862, %v1062
      %v1093 = vadd.f32 %v863, %v1065
      %v1094 = vadd.f32 %v864, %v1070
      %v1095 = vadd.f32 %v865, %v1073
      %v1096 = vadd.f32 %v866, %v1078
      %v1097 = vadd.f32 %v867, %v1081
      %v1098 = vadd.f32 %v868, %v1086
      %v1099 = vadd.f32 %v869, %v1089
      %s1100 = scalar_lea.vmem %s169, 8
      %v1101 = vld [vmem:[%s1100] sm:$0xf]
      %v1102 = vld [vmem:[%s1100 + $0x8] sm:$0xf]
      %v1103 = vld [vmem:[%s1100 + $0x10] sm:$0xf]
      %v1104 = vld [vmem:[%s1100 + $0x18] sm:$0xf]
      %v1105 = vld [vmem:[%s1100 + $0x20] sm:$0xf]
      %v1106 = vld [vmem:[%s1100 + $0x28] sm:$0xf]
      %v1107 = vld [vmem:[%s1100 + $0x30] sm:$0xf]
      %v1108 = vld [vmem:[%s1100 + $0x38] sm:$0xf]
      %s1109 = scalar_lea.vmem %s1, 6
      %v1110 = vld [vmem:[%s1109] sm:$0x1]
      %v1119 = vunpack.c.l.b16 %v1101
      %v1120 = vunpack.c.l.b16 %v1102
      %v1121 = vunpack.c.l.b16 %v1103
      %v1122 = vunpack.c.l.b16 %v1104
      %v1123 = vunpack.c.l.b16 %v1105
      %v1124 = vunpack.c.l.b16 %v1106
      %v1125 = vunpack.c.l.b16 %v1107
      %v1126 = vunpack.c.l.b16 %v1108
      %v1127 = vpack.c.b16 %v1120, %v1119
      %v1128 = vpack.c.b16 %v1122, %v1121
      %v1129 = vpack.c.b16 %v1124, %v1123
      %v1130 = vpack.c.b16 %v1126, %v1125
      %v1132 = vsel %vm217, %v1127, 0
      %v1135 = vsel %vm217, %v1128, 0
      %v1138 = vsel %vm217, %v1129, 0
      %v1141 = vsel %vm217, %v1130, 0
      %v1144 = vsel %vm230, %v1110, 0
      %1146 = vmatprep.subr.bf16.mxu0 0
      %1147 = vmatpush1.bf16.msra.mxu0 %v1144
      %1148 = vmatprep.subr.bf16.mxu0 0
      %1149 = vmatpush1.bf16.msra.mxu0 0
      %1150 = vmatprep.subr.bf16.mxu0 0
      %1151 = vmatpush1.bf16.msra.mxu0 0
      %1152 = vmatprep.subr.bf16.mxu0 0
      %1153 = vmatpush1.bf16.msra.mxu0 0
      %1154 = vmatprep.subr.bf16.mxu0 0
      %1155 = vmatpush1.bf16.msra.mxu0 0
      %1156 = vmatprep.subr.bf16.mxu0 0
      %1157 = vmatpush1.bf16.msra.mxu0 0
      %1158 = vmatprep.subr.bf16.mxu0 0
      %1159 = vmatpush1.bf16.msra.mxu0 0
      %1160 = vmatprep.subr.bf16.mxu0 0
      %1161 = vmatpush1.bf16.msra.mxu0 0
      %1162 = vmatprep.subr.bf16.mxu0 0
      %1163 = vmatpush1.bf16.msra.mxu0 0
      %1164 = vmatprep.subr.bf16.mxu0 0
      %1165 = vmatpush1.bf16.msra.mxu0 0
      %1166 = vmatprep.subr.bf16.mxu0 0
      %1167 = vmatpush1.bf16.msra.mxu0 0
      %1168 = vmatprep.subr.bf16.mxu0 0
      %1169 = vmatpush1.bf16.msra.mxu0 0
      %1170 = vmatprep.subr.bf16.mxu0 0
      %1171 = vmatpush1.bf16.msra.mxu0 0
      %1172 = vmatprep.subr.bf16.mxu0 0
      %1173 = vmatpush1.bf16.msra.mxu0 0
      %1174 = vmatprep.subr.bf16.mxu0 0
      %1175 = vmatpush1.bf16.msra.mxu0 0
      %1176 = vmatprep.subr.bf16.mxu0 0
      %1177 = vmatpush1.bf16.msra.mxu0 0
      %1178 = vmatprep.mubr.bf16.mxu0 0
      %1179 = vmatmul.mubr.bf16.gmra.mrb[0].mxu0 %v1132
      %v1180 = vpop.f32.mrb[0].mxu0
      %v1181 = vadd.f32 0.0, %v1180
      %v1182 = vpop.f32.mrb[0].mxu0
      %v1183 = vpop.f32.mrb[0].mxu0
      %v1184 = vadd.f32 0.0, %v1183
      %v1185 = vpop.f32.mrb[0].mxu0
      %1186 = vmatprep.mubr.bf16.mxu0 0
      %1187 = vmatmul.mubr.bf16.gmra.mrb[0].mxu0 %v1135
      %v1188 = vpop.f32.mrb[0].mxu0
      %v1189 = vadd.f32 0.0, %v1188
      %v1190 = vpop.f32.mrb[0].mxu0
      %v1191 = vpop.f32.mrb[0].mxu0
      %v1192 = vadd.f32 0.0, %v1191
      %v1193 = vpop.f32.mrb[0].mxu0
      %1194 = vmatprep.mubr.bf16.mxu0 0
      %1195 = vmatmul.mubr.bf16.gmra.mrb[0].mxu0 %v1138
      %v1196 = vpop.f32.mrb[0].mxu0
      %v1197 = vadd.f32 0.0, %v1196
      %v1198 = vpop.f32.mrb[0].mxu0
      %v1199 = vpop.f32.mrb[0].mxu0
      %v1200 = vadd.f32 0.0, %v1199
      %v1201 = vpop.f32.mrb[0].mxu0
      %1202 = vmatprep.mubr.bf16.mxu0 0
      %1203 = vmatmul.mubr.bf16.gmra.mrb[0].mxu0 %v1141
      %v1204 = vpop.f32.mrb[0].mxu0
      %v1205 = vadd.f32 0.0, %v1204
      %v1206 = vpop.f32.mrb[0].mxu0
      %v1207 = vpop.f32.mrb[0].mxu0
      %v1208 = vadd.f32 0.0, %v1207
      %v1209 = vpop.f32.mrb[0].mxu0
      %1210 = vdwg.mxu0
      %v1211 = vadd.f32 %v1092, %v1181
      %v1212 = vadd.f32 %v1093, %v1184
      %v1213 = vadd.f32 %v1094, %v1189
      %v1214 = vadd.f32 %v1095, %v1192
      %v1215 = vadd.f32 %v1096, %v1197
      %v1216 = vadd.f32 %v1097, %v1200
      %v1217 = vadd.f32 %v1098, %v1205
      %v1218 = vadd.f32 %v1099, %v1208
      %s1219 = scalar_lea.vmem %s169, 80
      %v1220 = vld [vmem:[%s1219] sm:$0xf]
      %v1221 = vld [vmem:[%s1219 + $0x8] sm:$0xf]
      %v1222 = vld [vmem:[%s1219 + $0x10] sm:$0xf]
      %v1223 = vld [vmem:[%s1219 + $0x18] sm:$0xf]
      %v1224 = vld [vmem:[%s1219 + $0x20] sm:$0xf]
      %v1225 = vld [vmem:[%s1219 + $0x28] sm:$0xf]
      %v1226 = vld [vmem:[%s1219 + $0x30] sm:$0xf]
      %v1227 = vld [vmem:[%s1219 + $0x38] sm:$0xf]
      %s1228 = scalar_lea.vmem %s1, 7
      %v1229 = vld [vmem:[%s1228] sm:$0x1]
      %v1238 = vunpack.c.l.b16 %v1220
      %v1239 = vunpack.c.l.b16 %v1221
      %v1240 = vunpack.c.l.b16 %v1222
      %v1241 = vunpack.c.l.b16 %v1223
      %v1242 = vunpack.c.l.b16 %v1224
      %v1243 = vunpack.c.l.b16 %v1225
      %v1244 = vunpack.c.l.b16 %v1226
      %v1245 = vunpack.c.l.b16 %v1227
      %v1246 = vpack.c.b16 %v1239, %v1238
      %v1247 = vpack.c.b16 %v1241, %v1240
      %v1248 = vpack.c.b16 %v1243, %v1242
      %v1249 = vpack.c.b16 %v1245, %v1244
      %v1251 = vsel %vm217, %v1246, 0
      %v1254 = vsel %vm217, %v1247, 0
      %v1257 = vsel %vm217, %v1248, 0
      %v1260 = vsel %vm217, %v1249, 0
      %v1263 = vsel %vm230, %v1229, 0
      %1265 = vmatprep.subr.bf16.mxu0 0
      %1266 = vmatpush1.bf16.msra.mxu0 %v1263
      %1267 = vmatprep.subr.bf16.mxu0 0
      %1268 = vmatpush1.bf16.msra.mxu0 0
      %1269 = vmatprep.subr.bf16.mxu0 0
      %1270 = vmatpush1.bf16.msra.mxu0 0
      %1271 = vmatprep.subr.bf16.mxu0 0
      %1272 = vmatpush1.bf16.msra.mxu0 0
      %1273 = vmatprep.subr.bf16.mxu0 0
      %1274 = vmatpush1.bf16.msra.mxu0 0
      %1275 = vmatprep.subr.bf16.mxu0 0
      %1276 = vmatpush1.bf16.msra.mxu0 0
      %1277 = vmatprep.subr.bf16.mxu0 0
      %1278 = vmatpush1.bf16.msra.mxu0 0
      %1279 = vmatprep.subr.bf16.mxu0 0
      %1280 = vmatpush1.bf16.msra.mxu0 0
      %1281 = vmatprep.subr.bf16.mxu0 0
      %1282 = vmatpush1.bf16.msra.mxu0 0
      %1283 = vmatprep.subr.bf16.mxu0 0
      %1284 = vmatpush1.bf16.msra.mxu0 0
      %1285 = vmatprep.subr.bf16.mxu0 0
      %1286 = vmatpush1.bf16.msra.mxu0 0
      %1287 = vmatprep.subr.bf16.mxu0 0
      %1288 = vmatpush1.bf16.msra.mxu0 0
      %1289 = vmatprep.subr.bf16.mxu0 0
      %1290 = vmatpush1.bf16.msra.mxu0 0
      %1291 = vmatprep.subr.bf16.mxu0 0
      %1292 = vmatpush1.bf16.msra.mxu0 0
      %1293 = vmatprep.subr.bf16.mxu0 0
      %1294 = vmatpush1.bf16.msra.mxu0 0
      %1295 = vmatprep.subr.bf16.mxu0 0
      %1296 = vmatpush1.bf16.msra.mxu0 0
      %1297 = vmatprep.mubr.bf16.mxu0 0
      %1298 = vmatmul.mubr.bf16.gmra.mrb[0].mxu0 %v1251
      %v1299 = vpop.f32.mrb[0].mxu0
      %v1300 = vadd.f32 0.0, %v1299
      %v1301 = vpop.f32.mrb[0].mxu0
      %v1302 = vpop.f32.mrb[0].mxu0
      %v1303 = vadd.f32 0.0, %v1302
      %v1304 = vpop.f32.mrb[0].mxu0
      %1305 = vmatprep.mubr.bf16.mxu0 0
      %1306 = vmatmul.mubr.bf16.gmra.mrb[0].mxu0 %v1254
      %v1307 = vpop.f32.mrb[0].mxu0
      %v1308 = vadd.f32 0.0, %v1307
      %v1309 = vpop.f32.mrb[0].mxu0
      %v1310 = vpop.f32.mrb[0].mxu0
      %v1311 = vadd.f32 0.0, %v1310
      %v1312 = vpop.f32.mrb[0].mxu0
      %1313 = vmatprep.mubr.bf16.mxu0 0
      %1314 = vmatmul.mubr.bf16.gmra.mrb[0].mxu0 %v1257
      %v1315 = vpop.f32.mrb[0].mxu0
      %v1316 = vadd.f32 0.0, %v1315
      %v1317 = vpop.f32.mrb[0].mxu0
      %v1318 = vpop.f32.mrb[0].mxu0
      %v1319 = vadd.f32 0.0, %v1318
      %v1320 = vpop.f32.mrb[0].mxu0
      %1321 = vmatprep.mubr.bf16.mxu0 0
      %1322 = vmatmul.mubr.bf16.gmra.mrb[0].mxu0 %v1260
      %v1323 = vpop.f32.mrb[0].mxu0
      %v1324 = vadd.f32 0.0, %v1323
      %v1325 = vpop.f32.mrb[0].mxu0
      %v1326 = vpop.f32.mrb[0].mxu0
      %v1327 = vadd.f32 0.0, %v1326
      %v1328 = vpop.f32.mrb[0].mxu0
      %1329 = vdwg.mxu0
      %v1330 = vadd.f32 %v1211, %v1300
      %v1331 = vadd.f32 %v1212, %v1303
      %v1332 = vadd.f32 %v1213, %v1308
      %v1333 = vadd.f32 %v1214, %v1311
      %v1334 = vadd.f32 %v1215, %v1316
      %v1335 = vadd.f32 %v1216, %v1319
      %v1336 = vadd.f32 %v1217, %v1324
      %v1337 = vadd.f32 %v1218, %v1327
      %v1338 = vld [vmem:[%s1100] sm:$0xf]
      %v1339 = vld [vmem:[%s1100 + $0x4] sm:$0x1]
      %v1340 = vld [vmem:[%s1100 + $0x8] sm:$0xf]
      %v1341 = vld [vmem:[%s1100 + $0xc] sm:$0x1]
      %v1342 = vld [vmem:[%s1100 + $0x10] sm:$0xf]
      %v1343 = vld [vmem:[%s1100 + $0x14] sm:$0x1]
      %v1344 = vld [vmem:[%s1100 + $0x18] sm:$0xf]
      %v1345 = vld [vmem:[%s1100 + $0x1c] sm:$0x1]
      %v1346 = vld [vmem:[%s1100 + $0x20] sm:$0xf]
      %v1347 = vld [vmem:[%s1100 + $0x24] sm:$0x1]
      %v1348 = vld [vmem:[%s1100 + $0x28] sm:$0xf]
      %v1349 = vld [vmem:[%s1100 + $0x2c] sm:$0x1]
      %v1350 = vld [vmem:[%s1100 + $0x30] sm:$0xf]
      %v1351 = vld [vmem:[%s1100 + $0x34] sm:$0x1]
      %v1352 = vld [vmem:[%s1100 + $0x38] sm:$0xf]
      %v1353 = vld [vmem:[%s1100 + $0x3c] sm:$0x1]
      %v1355 = vshrl.u32 %v1338, 16
      %v1357 = vrot.slane %v1355, 4
      %v1358 = vshll.u32 %v1338, 16
      %v1360 = vrot.slane %v1358, 5
      %v1361 = vor.u32 %v1357, %v1360
      %v1362 = vrot.slane %v1361, 4
      %v1364 = vshll.u32 %v1339, 16
      %v1366 = vrot.slane %v1364, 5
      %v1367 = vsel %vm417, %v1362, %v1366
      %v1369 = vshrl.u32 %v1340, 16
      %v1371 = vrot.slane %v1369, 4
      %v1372 = vshll.u32 %v1340, 16
      %v1374 = vrot.slane %v1372, 5
      %v1375 = vor.u32 %v1371, %v1374
      %v1376 = vrot.slane %v1375, 4
      %v1378 = vshll.u32 %v1341, 16
      %v1380 = vrot.slane %v1378, 5
      %v1381 = vsel %vm417, %v1376, %v1380
      %v1383 = vshrl.u32 %v1342, 16
      %v1385 = vrot.slane %v1383, 4
      %v1386 = vshll.u32 %v1342, 16
      %v1388 = vrot.slane %v1386, 5
      %v1389 = vor.u32 %v1385, %v1388
      %v1390 = vrot.slane %v1389, 4
      %v1392 = vshll.u32 %v1343, 16
      %v1394 = vrot.slane %v1392, 5
      %v1395 = vsel %vm417, %v1390, %v1394
      %v1397 = vshrl.u32 %v1344, 16
      %v1399 = vrot.slane %v1397, 4
      %v1400 = vshll.u32 %v1344, 16
      %v1402 = vrot.slane %v1400, 5
      %v1403 = vor.u32 %v1399, %v1402
      %v1404 = vrot.slane %v1403, 4
      %v1406 = vshll.u32 %v1345, 16
      %v1408 = vrot.slane %v1406, 5
      %v1409 = vsel %vm417, %v1404, %v1408
      %v1411 = vshrl.u32 %v1346, 16
      %v1413 = vrot.slane %v1411, 4
      %v1414 = vshll.u32 %v1346, 16
      %v1416 = vrot.slane %v1414, 5
      %v1417 = vor.u32 %v1413, %v1416
      %v1418 = vrot.slane %v1417, 4
      %v1420 = vshll.u32 %v1347, 16
      %v1422 = vrot.slane %v1420, 5
      %v1423 = vsel %vm417, %v1418, %v1422
      %v1425 = vshrl.u32 %v1348, 16
      %v1427 = vrot.slane %v1425, 4
      %v1428 = vshll.u32 %v1348, 16
      %v1430 = vrot.slane %v1428, 5
      %v1431 = vor.u32 %v1427, %v1430
      %v1432 = vrot.slane %v1431, 4
      %v1434 = vshll.u32 %v1349, 16
      %v1436 = vrot.slane %v1434, 5
      %v1437 = vsel %vm417, %v1432, %v1436
      %v1439 = vshrl.u32 %v1350, 16
      %v1441 = vrot.slane %v1439, 4
      %v1442 = vshll.u32 %v1350, 16
      %v1444 = vrot.slane %v1442, 5
      %v1445 = vor.u32 %v1441, %v1444
      %v1446 = vrot.slane %v1445, 4
      %v1448 = vshll.u32 %v1351, 16
      %v1450 = vrot.slane %v1448, 5
      %v1451 = vsel %vm417, %v1446, %v1450
      %v1453 = vshrl.u32 %v1352, 16
      %v1455 = vrot.slane %v1453, 4
      %v1456 = vshll.u32 %v1352, 16
      %v1458 = vrot.slane %v1456, 5
      %v1459 = vor.u32 %v1455, %v1458
      %v1460 = vrot.slane %v1459, 4
      %v1462 = vshll.u32 %v1353, 16
      %v1464 = vrot.slane %v1462, 5
      %v1465 = vsel %vm417, %v1460, %v1464
      %s1466 = scalar_lea.vmem %s1, 8
      %v1467 = vld [vmem:[%s1466] sm:$0x1]
      %v1468 = vunpack.c.l.b16 %v1367
      %v1469 = vunpack.c.l.b16 %v1381
      %v1470 = vunpack.c.l.b16 %v1395
      %v1471 = vunpack.c.l.b16 %v1409
      %v1472 = vunpack.c.l.b16 %v1423
      %v1473 = vunpack.c.l.b16 %v1437
      %v1474 = vunpack.c.l.b16 %v1451
      %v1475 = vunpack.c.l.b16 %v1465
      %v1476 = vpack.c.b16 %v1469, %v1468
      %v1477 = vpack.c.b16 %v1471, %v1470
      %v1478 = vpack.c.b16 %v1473, %v1472
      %v1479 = vpack.c.b16 %v1475, %v1474
      %v1481 = vsel %vm217, %v1476, 0
      %v1484 = vsel %vm217, %v1477, 0
      %v1487 = vsel %vm217, %v1478, 0
      %v1490 = vsel %vm217, %v1479, 0
      %v1493 = vsel %vm230, %v1467, 0
      %1495 = vmatprep.subr.bf16.mxu0 0
      %1496 = vmatpush1.bf16.msra.mxu0 %v1493
      %1497 = vmatprep.subr.bf16.mxu0 0
      %1498 = vmatpush1.bf16.msra.mxu0 0
      %1499 = vmatprep.subr.bf16.mxu0 0
      %1500 = vmatpush1.bf16.msra.mxu0 0
      %1501 = vmatprep.subr.bf16.mxu0 0
      %1502 = vmatpush1.bf16.msra.mxu0 0
      %1503 = vmatprep.subr.bf16.mxu0 0
      %1504 = vmatpush1.bf16.msra.mxu0 0
      %1505 = vmatprep.subr.bf16.mxu0 0
      %1506 = vmatpush1.bf16.msra.mxu0 0
      %1507 = vmatprep.subr.bf16.mxu0 0
      %1508 = vmatpush1.bf16.msra.mxu0 0
      %1509 = vmatprep.subr.bf16.mxu0 0
      %1510 = vmatpush1.bf16.msra.mxu0 0
      %1511 = vmatprep.subr.bf16.mxu0 0
      %1512 = vmatpush1.bf16.msra.mxu0 0
      %1513 = vmatprep.subr.bf16.mxu0 0
      %1514 = vmatpush1.bf16.msra.mxu0 0
      %1515 = vmatprep.subr.bf16.mxu0 0
      %1516 = vmatpush1.bf16.msra.mxu0 0
      %1517 = vmatprep.subr.bf16.mxu0 0
      %1518 = vmatpush1.bf16.msra.mxu0 0
      %1519 = vmatprep.subr.bf16.mxu0 0
      %1520 = vmatpush1.bf16.msra.mxu0 0
      %1521 = vmatprep.subr.bf16.mxu0 0
      %1522 = vmatpush1.bf16.msra.mxu0 0
      %1523 = vmatprep.subr.bf16.mxu0 0
      %1524 = vmatpush1.bf16.msra.mxu0 0
      %1525 = vmatprep.subr.bf16.mxu0 0
      %1526 = vmatpush1.bf16.msra.mxu0 0
      %1527 = vmatprep.mubr.bf16.mxu0 0
      %1528 = vmatmul.mubr.bf16.gmra.mrb[0].mxu0 %v1481
      %v1529 = vpop.f32.mrb[0].mxu0
      %v1530 = vadd.f32 0.0, %v1529
      %v1531 = vpop.f32.mrb[0].mxu0
      %v1532 = vpop.f32.mrb[0].mxu0
      %v1533 = vadd.f32 0.0, %v1532
      %v1534 = vpop.f32.mrb[0].mxu0
      %1535 = vmatprep.mubr.bf16.mxu0 0
      %1536 = vmatmul.mubr.bf16.gmra.mrb[0].mxu0 %v1484
      %v1537 = vpop.f32.mrb[0].mxu0
      %v1538 = vadd.f32 0.0, %v1537
      %v1539 = vpop.f32.mrb[0].mxu0
      %v1540 = vpop.f32.mrb[0].mxu0
      %v1541 = vadd.f32 0.0, %v1540
      %v1542 = vpop.f32.mrb[0].mxu0
      %1543 = vmatprep.mubr.bf16.mxu0 0
      %1544 = vmatmul.mubr.bf16.gmra.mrb[0].mxu0 %v1487
      %v1545 = vpop.f32.mrb[0].mxu0
      %v1546 = vadd.f32 0.0, %v1545
      %v1547 = vpop.f32.mrb[0].mxu0
      %v1548 = vpop.f32.mrb[0].mxu0
      %v1549 = vadd.f32 0.0, %v1548
      %v1550 = vpop.f32.mrb[0].mxu0
      %1551 = vmatprep.mubr.bf16.mxu0 0
      %1552 = vmatmul.mubr.bf16.gmra.mrb[0].mxu0 %v1490
      %v1553 = vpop.f32.mrb[0].mxu0
      %v1554 = vadd.f32 0.0, %v1553
      %v1555 = vpop.f32.mrb[0].mxu0
      %v1556 = vpop.f32.mrb[0].mxu0
      %v1557 = vadd.f32 0.0, %v1556
      %v1558 = vpop.f32.mrb[0].mxu0
      %1559 = vdwg.mxu0
      %v1560 = vadd.f32 %v1330, %v1530
      %v1561 = vadd.f32 %v1331, %v1533
      %v1562 = vadd.f32 %v1332, %v1538
      %v1563 = vadd.f32 %v1333, %v1541
      %v1564 = vadd.f32 %v1334, %v1546
      %v1565 = vadd.f32 %v1335, %v1549
      %v1566 = vadd.f32 %v1336, %v1554
      %v1567 = vadd.f32 %v1337, %v1557
      %s1568 = scalar_lea.vmem %s1, 9
      %v1569 = vld [vmem:[%s1568] sm:$0x1]
      %s1570 = scalar_lea.vmem %s1, 10
      %v1571 = vld [vmem:[%s1570] sm:$0x1]
      %1572 = vrot.lane.b32.xlu0 %v213, 126
      %v1573 = vpop.permute.xlu0 %1572
      %1574 = vrot.lane.b32.xlu0 %v214, 126
      %v1575 = vpop.permute.xlu0 %1574
      %1576 = vrot.lane.b32.xlu0 %v215, 126
      %v1577 = vpop.permute.xlu0 %1576
      %1578 = vrot.lane.b32.xlu0 %v216, 126
      %v1579 = vpop.permute.xlu0 %1578
      %v1581 = vsel %vm217, %v1573, 0
      %v1584 = vsel %vm217, %v1575, 0
      %v1587 = vsel %vm217, %v1577, 0
      %v1590 = vsel %vm217, %v1579, 0
      %v1593 = vsel %vm230, %v1571, 0
      %1595 = vmatprep.subr.bf16.mxu0 0
      %1596 = vmatpush1.bf16.msra.mxu0 %v1593
      %1597 = vmatprep.subr.bf16.mxu0 0
      %1598 = vmatpush1.bf16.msra.mxu0 0
      %1599 = vmatprep.subr.bf16.mxu0 0
      %1600 = vmatpush1.bf16.msra.mxu0 0
      %1601 = vmatprep.subr.bf16.mxu0 0
      %1602 = vmatpush1.bf16.msra.mxu0 0
      %1603 = vmatprep.subr.bf16.mxu0 0
      %1604 = vmatpush1.bf16.msra.mxu0 0
      %1605 = vmatprep.subr.bf16.mxu0 0
      %1606 = vmatpush1.bf16.msra.mxu0 0
      %1607 = vmatprep.subr.bf16.mxu0 0
      %1608 = vmatpush1.bf16.msra.mxu0 0
      %1609 = vmatprep.subr.bf16.mxu0 0
      %1610 = vmatpush1.bf16.msra.mxu0 0
      %1611 = vmatprep.subr.bf16.mxu0 0
      %1612 = vmatpush1.bf16.msra.mxu0 0
      %1613 = vmatprep.subr.bf16.mxu0 0
      %1614 = vmatpush1.bf16.msra.mxu0 0
      %1615 = vmatprep.subr.bf16.mxu0 0
      %1616 = vmatpush1.bf16.msra.mxu0 0
      %1617 = vmatprep.subr.bf16.mxu0 0
      %1618 = vmatpush1.bf16.msra.mxu0 0
      %1619 = vmatprep.subr.bf16.mxu0 0
      %1620 = vmatpush1.bf16.msra.mxu0 0
      %1621 = vmatprep.subr.bf16.mxu0 0
      %1622 = vmatpush1.bf16.msra.mxu0 0
      %1623 = vmatprep.subr.bf16.mxu0 0
      %1624 = vmatpush1.bf16.msra.mxu0 0
      %1625 = vmatprep.subr.bf16.mxu0 0
      %1626 = vmatpush1.bf16.msra.mxu0 0
      %1627 = vmatprep.mubr.bf16.mxu0 0
      %1628 = vmatmul.mubr.bf16.gmra.mrb[0].mxu0 %v1581
      %v1629 = vpop.f32.mrb[0].mxu0
      %v1630 = vadd.f32 0.0, %v1629
      %v1631 = vpop.f32.mrb[0].mxu0
      %v1632 = vpop.f32.mrb[0].mxu0
      %v1633 = vadd.f32 0.0, %v1632
      %v1634 = vpop.f32.mrb[0].mxu0
      %1635 = vmatprep.mubr.bf16.mxu0 0
      %1636 = vmatmul.mubr.bf16.gmra.mrb[0].mxu0 %v1584
      %v1637 = vpop.f32.mrb[0].mxu0
      %v1638 = vadd.f32 0.0, %v1637
      %v1639 = vpop.f32.mrb[0].mxu0
      %v1640 = vpop.f32.mrb[0].mxu0
      %v1641 = vadd.f32 0.0, %v1640
      %v1642 = vpop.f32.mrb[0].mxu0
      %1643 = vmatprep.mubr.bf16.mxu0 0
      %1644 = vmatmul.mubr.bf16.gmra.mrb[0].mxu0 %v1587
      %v1645 = vpop.f32.mrb[0].mxu0
      %v1646 = vadd.f32 0.0, %v1645
      %v1647 = vpop.f32.mrb[0].mxu0
      %v1648 = vpop.f32.mrb[0].mxu0
      %v1649 = vadd.f32 0.0, %v1648
      %v1650 = vpop.f32.mrb[0].mxu0
      %1651 = vmatprep.mubr.bf16.mxu0 0
      %1652 = vmatmul.mubr.bf16.gmra.mrb[0].mxu0 %v1590
      %v1653 = vpop.f32.mrb[0].mxu0
      %v1654 = vadd.f32 0.0, %v1653
      %v1655 = vpop.f32.mrb[0].mxu0
      %v1656 = vpop.f32.mrb[0].mxu0
      %v1657 = vadd.f32 0.0, %v1656
      %v1658 = vpop.f32.mrb[0].mxu0
      %1659 = vdwg.mxu0
      %1660 = vrot.lane.b32.xlu0 %v315, 126
      %v1661 = vpop.permute.xlu0 %1660
      %1662 = vrot.lane.b32.xlu0 %v316, 126
      %v1663 = vpop.permute.xlu0 %1662
      %1664 = vrot.lane.b32.xlu0 %v317, 126
      %v1665 = vpop.permute.xlu0 %1664
      %1666 = vrot.lane.b32.xlu0 %v318, 126
      %v1667 = vpop.permute.xlu0 %1666
      %v1669 = vsel %vm217, %v1661, 0
      %v1672 = vsel %vm217, %v1663, 0
      %v1675 = vsel %vm217, %v1665, 0
      %v1678 = vsel %vm217, %v1667, 0
      %v1681 = vsel %vm230, %v1569, 0
      %1683 = vmatprep.subr.bf16.mxu0 0
      %1684 = vmatpush1.bf16.msra.mxu0 %v1681
      %1685 = vmatprep.subr.bf16.mxu0 0
      %1686 = vmatpush1.bf16.msra.mxu0 0
      %1687 = vmatprep.subr.bf16.mxu0 0
      %1688 = vmatpush1.bf16.msra.mxu0 0
      %1689 = vmatprep.subr.bf16.mxu0 0
      %1690 = vmatpush1.bf16.msra.mxu0 0
      %1691 = vmatprep.subr.bf16.mxu0 0
      %1692 = vmatpush1.bf16.msra.mxu0 0
      %1693 = vmatprep.subr.bf16.mxu0 0
      %1694 = vmatpush1.bf16.msra.mxu0 0
      %1695 = vmatprep.subr.bf16.mxu0 0
      %1696 = vmatpush1.bf16.msra.mxu0 0
      %1697 = vmatprep.subr.bf16.mxu0 0
      %1698 = vmatpush1.bf16.msra.mxu0 0
      %1699 = vmatprep.subr.bf16.mxu0 0
      %1700 = vmatpush1.bf16.msra.mxu0 0
      %1701 = vmatprep.subr.bf16.mxu0 0
      %1702 = vmatpush1.bf16.msra.mxu0 0
      %1703 = vmatprep.subr.bf16.mxu0 0
      %1704 = vmatpush1.bf16.msra.mxu0 0
      %1705 = vmatprep.subr.bf16.mxu0 0
      %1706 = vmatpush1.bf16.msra.mxu0 0
      %1707 = vmatprep.subr.bf16.mxu0 0
      %1708 = vmatpush1.bf16.msra.mxu0 0
      %1709 = vmatprep.subr.bf16.mxu0 0
      %1710 = vmatpush1.bf16.msra.mxu0 0
      %1711 = vmatprep.subr.bf16.mxu0 0
      %1712 = vmatpush1.bf16.msra.mxu0 0
      %1713 = vmatprep.subr.bf16.mxu0 0
      %1714 = vmatpush1.bf16.msra.mxu0 0
      %1715 = vmatprep.mubr.bf16.mxu0 0
      %1716 = vmatmul.mubr.bf16.gmra.mrb[0].mxu0 %v1669
      %v1717 = vpop.f32.mrb[0].mxu0
      %v1718 = vadd.f32 %v1630, %v1717
      %v1719 = vpop.f32.mrb[0].mxu0
      %v1720 = vpop.f32.mrb[0].mxu0
      %v1721 = vadd.f32 %v1633, %v1720
      %v1722 = vpop.f32.mrb[0].mxu0
      %1723 = vmatprep.mubr.bf16.mxu0 0
      %1724 = vmatmul.mubr.bf16.gmra.mrb[0].mxu0 %v1672
      %v1725 = vpop.f32.mrb[0].mxu0
      %v1726 = vadd.f32 %v1638, %v1725
      %v1727 = vpop.f32.mrb[0].mxu0
      %v1728 = vpop.f32.mrb[0].mxu0
      %v1729 = vadd.f32 %v1641, %v1728
      %v1730 = vpop.f32.mrb[0].mxu0
      %1731 = vmatprep.mubr.bf16.mxu0 0
      %1732 = vmatmul.mubr.bf16.gmra.mrb[0].mxu0 %v1675
      %v1733 = vpop.f32.mrb[0].mxu0
      %v1734 = vadd.f32 %v1646, %v1733
      %v1735 = vpop.f32.mrb[0].mxu0
      %v1736 = vpop.f32.mrb[0].mxu0
      %v1737 = vadd.f32 %v1649, %v1736
      %v1738 = vpop.f32.mrb[0].mxu0
      %1739 = vmatprep.mubr.bf16.mxu0 0
      %1740 = vmatmul.mubr.bf16.gmra.mrb[0].mxu0 %v1678
      %v1741 = vpop.f32.mrb[0].mxu0
      %v1742 = vadd.f32 %v1654, %v1741
      %v1743 = vpop.f32.mrb[0].mxu0
      %v1744 = vpop.f32.mrb[0].mxu0
      %v1745 = vadd.f32 %v1657, %v1744
      %v1746 = vpop.f32.mrb[0].mxu0
      %1747 = vdwg.mxu0
      %s1748 = scalar_lea.vmem %s1, 11
      %v1749 = vld [vmem:[%s1748] sm:$0x1]
      %1750 = vrot.lane.b32.xlu0 %v540, 126
      %v1751 = vpop.permute.xlu0 %1750
      %1752 = vrot.lane.b32.xlu0 %v541, 126
      %v1753 = vpop.permute.xlu0 %1752
      %1754 = vrot.lane.b32.xlu0 %v542, 126
      %v1755 = vpop.permute.xlu0 %1754
      %1756 = vrot.lane.b32.xlu0 %v543, 126
      %v1757 = vpop.permute.xlu0 %1756
      %v1759 = vsel %vm217, %v1751, 0
      %v1762 = vsel %vm217, %v1753, 0
      %v1765 = vsel %vm217, %v1755, 0
      %v1768 = vsel %vm217, %v1757, 0
      %v1771 = vsel %vm230, %v1749, 0
      %1773 = vmatprep.subr.bf16.mxu0 0
      %1774 = vmatpush1.bf16.msra.mxu0 %v1771
      %1775 = vmatprep.subr.bf16.mxu0 0
      %1776 = vmatpush1.bf16.msra.mxu0 0
      %1777 = vmatprep.subr.bf16.mxu0 0
      %1778 = vmatpush1.bf16.msra.mxu0 0
      %1779 = vmatprep.subr.bf16.mxu0 0
      %1780 = vmatpush1.bf16.msra.mxu0 0
      %1781 = vmatprep.subr.bf16.mxu0 0
      %1782 = vmatpush1.bf16.msra.mxu0 0
      %1783 = vmatprep.subr.bf16.mxu0 0
      %1784 = vmatpush1.bf16.msra.mxu0 0
      %1785 = vmatprep.subr.bf16.mxu0 0
      %1786 = vmatpush1.bf16.msra.mxu0 0
      %1787 = vmatprep.subr.bf16.mxu0 0
      %1788 = vmatpush1.bf16.msra.mxu0 0
      %1789 = vmatprep.subr.bf16.mxu0 0
      %1790 = vmatpush1.bf16.msra.mxu0 0
      %1791 = vmatprep.subr.bf16.mxu0 0
      %1792 = vmatpush1.bf16.msra.mxu0 0
      %1793 = vmatprep.subr.bf16.mxu0 0
      %1794 = vmatpush1.bf16.msra.mxu0 0
      %1795 = vmatprep.subr.bf16.mxu0 0
      %1796 = vmatpush1.bf16.msra.mxu0 0
      %1797 = vmatprep.subr.bf16.mxu0 0
      %1798 = vmatpush1.bf16.msra.mxu0 0
      %1799 = vmatprep.subr.bf16.mxu0 0
      %1800 = vmatpush1.bf16.msra.mxu0 0
      %1801 = vmatprep.subr.bf16.mxu0 0
      %1802 = vmatpush1.bf16.msra.mxu0 0
      %1803 = vmatprep.subr.bf16.mxu0 0
      %1804 = vmatpush1.bf16.msra.mxu0 0
      %1805 = vmatprep.mubr.bf16.mxu0 0
      %1806 = vmatmul.mubr.bf16.gmra.mrb[0].mxu0 %v1759
      %v1807 = vpop.f32.mrb[0].mxu0
      %v1808 = vadd.f32 0.0, %v1807
      %v1809 = vpop.f32.mrb[0].mxu0
      %v1810 = vpop.f32.mrb[0].mxu0
      %v1811 = vadd.f32 0.0, %v1810
      %v1812 = vpop.f32.mrb[0].mxu0
      %1813 = vmatprep.mubr.bf16.mxu0 0
      %1814 = vmatmul.mubr.bf16.gmra.mrb[0].mxu0 %v1762
      %v1815 = vpop.f32.mrb[0].mxu0
      %v1816 = vadd.f32 0.0, %v1815
      %v1817 = vpop.f32.mrb[0].mxu0
      %v1818 = vpop.f32.mrb[0].mxu0
      %v1819 = vadd.f32 0.0, %v1818
      %v1820 = vpop.f32.mrb[0].mxu0
      %1821 = vmatprep.mubr.bf16.mxu0 0
      %1822 = vmatmul.mubr.bf16.gmra.mrb[0].mxu0 %v1765
      %v1823 = vpop.f32.mrb[0].mxu0
      %v1824 = vadd.f32 0.0, %v1823
      %v1825 = vpop.f32.mrb[0].mxu0
      %v1826 = vpop.f32.mrb[0].mxu0
      %v1827 = vadd.f32 0.0, %v1826
      %v1828 = vpop.f32.mrb[0].mxu0
      %1829 = vmatprep.mubr.bf16.mxu0 0
      %1830 = vmatmul.mubr.bf16.gmra.mrb[0].mxu0 %v1768
      %v1831 = vpop.f32.mrb[0].mxu0
      %v1832 = vadd.f32 0.0, %v1831
      %v1833 = vpop.f32.mrb[0].mxu0
      %v1834 = vpop.f32.mrb[0].mxu0
      %v1835 = vadd.f32 0.0, %v1834
      %v1836 = vpop.f32.mrb[0].mxu0
      %1837 = vdwg.mxu0
      %v1838 = vadd.f32 %v1718, %v1808
      %v1839 = vadd.f32 %v1721, %v1811
      %v1840 = vadd.f32 %v1726, %v1816
      %v1841 = vadd.f32 %v1729, %v1819
      %v1842 = vadd.f32 %v1734, %v1824
      %v1843 = vadd.f32 %v1737, %v1827
      %v1844 = vadd.f32 %v1742, %v1832
      %v1845 = vadd.f32 %v1745, %v1835
      %s1846 = scalar_lea.vmem %s1, 12
      %v1847 = vld [vmem:[%s1846] sm:$0x1]
      %1848 = vrot.lane.b32.xlu0 %v659, 126
      %v1849 = vpop.permute.xlu0 %1848
      %1850 = vrot.lane.b32.xlu0 %v660, 126
      %v1851 = vpop.permute.xlu0 %1850
      %1852 = vrot.lane.b32.xlu0 %v661, 126
      %v1853 = vpop.permute.xlu0 %1852
      %1854 = vrot.lane.b32.xlu0 %v662, 126
      %v1855 = vpop.permute.xlu0 %1854
      %v1857 = vsel %vm217, %v1849, 0
      %v1860 = vsel %vm217, %v1851, 0
      %v1863 = vsel %vm217, %v1853, 0
      %v1866 = vsel %vm217, %v1855, 0
      %v1869 = vsel %vm230, %v1847, 0
      %1871 = vmatprep.subr.bf16.mxu0 0
      %1872 = vmatpush1.bf16.msra.mxu0 %v1869
      %1873 = vmatprep.subr.bf16.mxu0 0
      %1874 = vmatpush1.bf16.msra.mxu0 0
      %1875 = vmatprep.subr.bf16.mxu0 0
      %1876 = vmatpush1.bf16.msra.mxu0 0
      %1877 = vmatprep.subr.bf16.mxu0 0
      %1878 = vmatpush1.bf16.msra.mxu0 0
      %1879 = vmatprep.subr.bf16.mxu0 0
      %1880 = vmatpush1.bf16.msra.mxu0 0
      %1881 = vmatprep.subr.bf16.mxu0 0
      %1882 = vmatpush1.bf16.msra.mxu0 0
      %1883 = vmatprep.subr.bf16.mxu0 0
      %1884 = vmatpush1.bf16.msra.mxu0 0
      %1885 = vmatprep.subr.bf16.mxu0 0
      %1886 = vmatpush1.bf16.msra.mxu0 0
      %1887 = vmatprep.subr.bf16.mxu0 0
      %1888 = vmatpush1.bf16.msra.mxu0 0
      %1889 = vmatprep.subr.bf16.mxu0 0
      %1890 = vmatpush1.bf16.msra.mxu0 0
      %1891 = vmatprep.subr.bf16.mxu0 0
      %1892 = vmatpush1.bf16.msra.mxu0 0
      %1893 = vmatprep.subr.bf16.mxu0 0
      %1894 = vmatpush1.bf16.msra.mxu0 0
      %1895 = vmatprep.subr.bf16.mxu0 0
      %1896 = vmatpush1.bf16.msra.mxu0 0
      %1897 = vmatprep.subr.bf16.mxu0 0
      %1898 = vmatpush1.bf16.msra.mxu0 0
      %1899 = vmatprep.subr.bf16.mxu0 0
      %1900 = vmatpush1.bf16.msra.mxu0 0
      %1901 = vmatprep.subr.bf16.mxu0 0
      %1902 = vmatpush1.bf16.msra.mxu0 0
      %1903 = vmatprep.mubr.bf16.mxu0 0
      %1904 = vmatmul.mubr.bf16.gmra.mrb[0].mxu0 %v1857
      %v1905 = vpop.f32.mrb[0].mxu0
      %v1906 = vadd.f32 0.0, %v1905
      %v1907 = vpop.f32.mrb[0].mxu0
      %v1908 = vpop.f32.mrb[0].mxu0
      %v1909 = vadd.f32 0.0, %v1908
      %v1910 = vpop.f32.mrb[0].mxu0
      %1911 = vmatprep.mubr.bf16.mxu0 0
      %1912 = vmatmul.mubr.bf16.gmra.mrb[0].mxu0 %v1860
      %v1913 = vpop.f32.mrb[0].mxu0
      %v1914 = vadd.f32 0.0, %v1913
      %v1915 = vpop.f32.mrb[0].mxu0
      %v1916 = vpop.f32.mrb[0].mxu0
      %v1917 = vadd.f32 0.0, %v1916
      %v1918 = vpop.f32.mrb[0].mxu0
      %1919 = vmatprep.mubr.bf16.mxu0 0
      %1920 = vmatmul.mubr.bf16.gmra.mrb[0].mxu0 %v1863
      %v1921 = vpop.f32.mrb[0].mxu0
      %v1922 = vadd.f32 0.0, %v1921
      %v1923 = vpop.f32.mrb[0].mxu0
      %v1924 = vpop.f32.mrb[0].mxu0
      %v1925 = vadd.f32 0.0, %v1924
      %v1926 = vpop.f32.mrb[0].mxu0
      %1927 = vmatprep.mubr.bf16.mxu0 0
      %1928 = vmatmul.mubr.bf16.gmra.mrb[0].mxu0 %v1866
      %v1929 = vpop.f32.mrb[0].mxu0
      %v1930 = vadd.f32 0.0, %v1929
      %v1931 = vpop.f32.mrb[0].mxu0
      %v1932 = vpop.f32.mrb[0].mxu0
      %v1933 = vadd.f32 0.0, %v1932
      %v1934 = vpop.f32.mrb[0].mxu0
      %1935 = vdwg.mxu0
      %v1936 = vadd.f32 %v1838, %v1906
      %v1937 = vadd.f32 %v1839, %v1909
      %v1938 = vadd.f32 %v1840, %v1914
      %v1939 = vadd.f32 %v1841, %v1917
      %v1940 = vadd.f32 %v1842, %v1922
      %v1941 = vadd.f32 %v1843, %v1925
      %v1942 = vadd.f32 %v1844, %v1930
      %v1943 = vadd.f32 %v1845, %v1933
      %s1944 = scalar_lea.vmem %s1, 13
      %v1945 = vld [vmem:[%s1944] sm:$0x1]
      %1946 = vrot.lane.b32.xlu0 %v778, 126
      %v1947 = vpop.permute.xlu0 %1946
      %1948 = vrot.lane.b32.xlu0 %v779, 126
      %v1949 = vpop.permute.xlu0 %1948
      %1950 = vrot.lane.b32.xlu0 %v780, 126
      %v1951 = vpop.permute.xlu0 %1950
      %1952 = vrot.lane.b32.xlu0 %v781, 126
      %v1953 = vpop.permute.xlu0 %1952
      %v1955 = vsel %vm217, %v1947, 0
      %v1958 = vsel %vm217, %v1949, 0
      %v1961 = vsel %vm217, %v1951, 0
      %v1964 = vsel %vm217, %v1953, 0
      %v1967 = vsel %vm230, %v1945, 0
      %1969 = vmatprep.subr.bf16.mxu0 0
      %1970 = vmatpush1.bf16.msra.mxu0 %v1967
      %1971 = vmatprep.subr.bf16.mxu0 0
      %1972 = vmatpush1.bf16.msra.mxu0 0
      %1973 = vmatprep.subr.bf16.mxu0 0
      %1974 = vmatpush1.bf16.msra.mxu0 0
      %1975 = vmatprep.subr.bf16.mxu0 0
      %1976 = vmatpush1.bf16.msra.mxu0 0
      %1977 = vmatprep.subr.bf16.mxu0 0
      %1978 = vmatpush1.bf16.msra.mxu0 0
      %1979 = vmatprep.subr.bf16.mxu0 0
      %1980 = vmatpush1.bf16.msra.mxu0 0
      %1981 = vmatprep.subr.bf16.mxu0 0
      %1982 = vmatpush1.bf16.msra.mxu0 0
      %1983 = vmatprep.subr.bf16.mxu0 0
      %1984 = vmatpush1.bf16.msra.mxu0 0
      %1985 = vmatprep.subr.bf16.mxu0 0
      %1986 = vmatpush1.bf16.msra.mxu0 0
      %1987 = vmatprep.subr.bf16.mxu0 0
      %1988 = vmatpush1.bf16.msra.mxu0 0
      %1989 = vmatprep.subr.bf16.mxu0 0
      %1990 = vmatpush1.bf16.msra.mxu0 0
      %1991 = vmatprep.subr.bf16.mxu0 0
      %1992 = vmatpush1.bf16.msra.mxu0 0
      %1993 = vmatprep.subr.bf16.mxu0 0
      %1994 = vmatpush1.bf16.msra.mxu0 0
      %1995 = vmatprep.subr.bf16.mxu0 0
      %1996 = vmatpush1.bf16.msra.mxu0 0
      %1997 = vmatprep.subr.bf16.mxu0 0
      %1998 = vmatpush1.bf16.msra.mxu0 0
      %1999 = vmatprep.subr.bf16.mxu0 0
      %2000 = vmatpush1.bf16.msra.mxu0 0
      %2001 = vmatprep.mubr.bf16.mxu0 0
      %2002 = vmatmul.mubr.bf16.gmra.mrb[0].mxu0 %v1955
      %v2003 = vpop.f32.mrb[0].mxu0
      %v2004 = vadd.f32 0.0, %v2003
      %v2005 = vpop.f32.mrb[0].mxu0
      %v2006 = vpop.f32.mrb[0].mxu0
      %v2007 = vadd.f32 0.0, %v2006
      %v2008 = vpop.f32.mrb[0].mxu0
      %2009 = vmatprep.mubr.bf16.mxu0 0
      %2010 = vmatmul.mubr.bf16.gmra.mrb[0].mxu0 %v1958
      %v2011 = vpop.f32.mrb[0].mxu0
      %v2012 = vadd.f32 0.0, %v2011
      %v2013 = vpop.f32.mrb[0].mxu0
      %v2014 = vpop.f32.mrb[0].mxu0
      %v2015 = vadd.f32 0.0, %v2014
      %v2016 = vpop.f32.mrb[0].mxu0
      %2017 = vmatprep.mubr.bf16.mxu0 0
      %2018 = vmatmul.mubr.bf16.gmra.mrb[0].mxu0 %v1961
      %v2019 = vpop.f32.mrb[0].mxu0
      %v2020 = vadd.f32 0.0, %v2019
      %v2021 = vpop.f32.mrb[0].mxu0
      %v2022 = vpop.f32.mrb[0].mxu0
      %v2023 = vadd.f32 0.0, %v2022
      %v2024 = vpop.f32.mrb[0].mxu0
      %2025 = vmatprep.mubr.bf16.mxu0 0
      %2026 = vmatmul.mubr.bf16.gmra.mrb[0].mxu0 %v1964
      %v2027 = vpop.f32.mrb[0].mxu0
      %v2028 = vadd.f32 0.0, %v2027
      %v2029 = vpop.f32.mrb[0].mxu0
      %v2030 = vpop.f32.mrb[0].mxu0
      %v2031 = vadd.f32 0.0, %v2030
      %v2032 = vpop.f32.mrb[0].mxu0
      %2033 = vdwg.mxu0
      %v2034 = vadd.f32 %v1936, %v2004
      %v2035 = vadd.f32 %v1937, %v2007
      %v2036 = vadd.f32 %v1938, %v2012
      %v2037 = vadd.f32 %v1939, %v2015
      %v2038 = vadd.f32 %v1940, %v2020
      %v2039 = vadd.f32 %v1941, %v2023
      %v2040 = vadd.f32 %v1942, %v2028
      %v2041 = vadd.f32 %v1943, %v2031
      %s2042 = scalar_lea.vmem %s1, 14
      %v2043 = vld [vmem:[%s2042] sm:$0x1]
      %2044 = vrot.lane.b32.xlu0 %v1008, 126
      %v2045 = vpop.permute.xlu0 %2044
      %2046 = vrot.lane.b32.xlu0 %v1009, 126
      %v2047 = vpop.permute.xlu0 %2046
      %2048 = vrot.lane.b32.xlu0 %v1010, 126
      %v2049 = vpop.permute.xlu0 %2048
      %2050 = vrot.lane.b32.xlu0 %v1011, 126
      %v2051 = vpop.permute.xlu0 %2050
      %v2053 = vsel %vm217, %v2045, 0
      %v2056 = vsel %vm217, %v2047, 0
      %v2059 = vsel %vm217, %v2049, 0
      %v2062 = vsel %vm217, %v2051, 0
      %v2065 = vsel %vm230, %v2043, 0
      %2067 = vmatprep.subr.bf16.mxu0 0
      %2068 = vmatpush1.bf16.msra.mxu0 %v2065
      %2069 = vmatprep.subr.bf16.mxu0 0
      %2070 = vmatpush1.bf16.msra.mxu0 0
      %2071 = vmatprep.subr.bf16.mxu0 0
      %2072 = vmatpush1.bf16.msra.mxu0 0
      %2073 = vmatprep.subr.bf16.mxu0 0
      %2074 = vmatpush1.bf16.msra.mxu0 0
      %2075 = vmatprep.subr.bf16.mxu0 0
      %2076 = vmatpush1.bf16.msra.mxu0 0
      %2077 = vmatprep.subr.bf16.mxu0 0
      %2078 = vmatpush1.bf16.msra.mxu0 0
      %2079 = vmatprep.subr.bf16.mxu0 0
      %2080 = vmatpush1.bf16.msra.mxu0 0
      %2081 = vmatprep.subr.bf16.mxu0 0
      %2082 = vmatpush1.bf16.msra.mxu0 0
      %2083 = vmatprep.subr.bf16.mxu0 0
      %2084 = vmatpush1.bf16.msra.mxu0 0
      %2085 = vmatprep.subr.bf16.mxu0 0
      %2086 = vmatpush1.bf16.msra.mxu0 0
      %2087 = vmatprep.subr.bf16.mxu0 0
      %2088 = vmatpush1.bf16.msra.mxu0 0
      %2089 = vmatprep.subr.bf16.mxu0 0
      %2090 = vmatpush1.bf16.msra.mxu0 0
      %2091 = vmatprep.subr.bf16.mxu0 0
      %2092 = vmatpush1.bf16.msra.mxu0 0
      %2093 = vmatprep.subr.bf16.mxu0 0
      %2094 = vmatpush1.bf16.msra.mxu0 0
      %2095 = vmatprep.subr.bf16.mxu0 0
      %2096 = vmatpush1.bf16.msra.mxu0 0
      %2097 = vmatprep.subr.bf16.mxu0 0
      %2098 = vmatpush1.bf16.msra.mxu0 0
      %2099 = vmatprep.mubr.bf16.mxu0 0
      %2100 = vmatmul.mubr.bf16.gmra.mrb[0].mxu0 %v2053
      %v2101 = vpop.f32.mrb[0].mxu0
      %v2102 = vadd.f32 0.0, %v2101
      %v2103 = vpop.f32.mrb[0].mxu0
      %v2104 = vpop.f32.mrb[0].mxu0
      %v2105 = vadd.f32 0.0, %v2104
      %v2106 = vpop.f32.mrb[0].mxu0
      %2107 = vmatprep.mubr.bf16.mxu0 0
      %2108 = vmatmul.mubr.bf16.gmra.mrb[0].mxu0 %v2056
      %v2109 = vpop.f32.mrb[0].mxu0
      %v2110 = vadd.f32 0.0, %v2109
      %v2111 = vpop.f32.mrb[0].mxu0
      %v2112 = vpop.f32.mrb[0].mxu0
      %v2113 = vadd.f32 0.0, %v2112
      %v2114 = vpop.f32.mrb[0].mxu0
      %2115 = vmatprep.mubr.bf16.mxu0 0
      %2116 = vmatmul.mubr.bf16.gmra.mrb[0].mxu0 %v2059
      %v2117 = vpop.f32.mrb[0].mxu0
      %v2118 = vadd.f32 0.0, %v2117
      %v2119 = vpop.f32.mrb[0].mxu0
      %v2120 = vpop.f32.mrb[0].mxu0
      %v2121 = vadd.f32 0.0, %v2120
      %v2122 = vpop.f32.mrb[0].mxu0
      %2123 = vmatprep.mubr.bf16.mxu0 0
      %2124 = vmatmul.mubr.bf16.gmra.mrb[0].mxu0 %v2062
      %v2125 = vpop.f32.mrb[0].mxu0
      %v2126 = vadd.f32 0.0, %v2125
      %v2127 = vpop.f32.mrb[0].mxu0
      %v2128 = vpop.f32.mrb[0].mxu0
      %v2129 = vadd.f32 0.0, %v2128
      %v2130 = vpop.f32.mrb[0].mxu0
      %2131 = vdwg.mxu0
      %v2132 = vadd.f32 %v2034, %v2102
      %v2133 = vadd.f32 %v2035, %v2105
      %v2134 = vadd.f32 %v2036, %v2110
      %v2135 = vadd.f32 %v2037, %v2113
      %v2136 = vadd.f32 %v2038, %v2118
      %v2137 = vadd.f32 %v2039, %v2121
      %v2138 = vadd.f32 %v2040, %v2126
      %v2139 = vadd.f32 %v2041, %v2129
      %s2140 = scalar_lea.vmem %s1, 15
      %v2141 = vld [vmem:[%s2140] sm:$0x1]
      %2142 = vrot.lane.b32.xlu0 %v1127, 126
      %v2143 = vpop.permute.xlu0 %2142
      %2144 = vrot.lane.b32.xlu0 %v1128, 126
      %v2145 = vpop.permute.xlu0 %2144
      %2146 = vrot.lane.b32.xlu0 %v1129, 126
      %v2147 = vpop.permute.xlu0 %2146
      %2148 = vrot.lane.b32.xlu0 %v1130, 126
      %v2149 = vpop.permute.xlu0 %2148
      %v2151 = vsel %vm217, %v2143, 0
      %v2154 = vsel %vm217, %v2145, 0
      %v2157 = vsel %vm217, %v2147, 0
      %v2160 = vsel %vm217, %v2149, 0
      %v2163 = vsel %vm230, %v2141, 0
      %2165 = vmatprep.subr.bf16.mxu0 0
      %2166 = vmatpush1.bf16.msra.mxu0 %v2163
      %2167 = vmatprep.subr.bf16.mxu0 0
      %2168 = vmatpush1.bf16.msra.mxu0 0
      %2169 = vmatprep.subr.bf16.mxu0 0
      %2170 = vmatpush1.bf16.msra.mxu0 0
      %2171 = vmatprep.subr.bf16.mxu0 0
      %2172 = vmatpush1.bf16.msra.mxu0 0
      %2173 = vmatprep.subr.bf16.mxu0 0
      %2174 = vmatpush1.bf16.msra.mxu0 0
      %2175 = vmatprep.subr.bf16.mxu0 0
      %2176 = vmatpush1.bf16.msra.mxu0 0
      %2177 = vmatprep.subr.bf16.mxu0 0
      %2178 = vmatpush1.bf16.msra.mxu0 0
      %2179 = vmatprep.subr.bf16.mxu0 0
      %2180 = vmatpush1.bf16.msra.mxu0 0
      %2181 = vmatprep.subr.bf16.mxu0 0
      %2182 = vmatpush1.bf16.msra.mxu0 0
      %2183 = vmatprep.subr.bf16.mxu0 0
      %2184 = vmatpush1.bf16.msra.mxu0 0
      %2185 = vmatprep.subr.bf16.mxu0 0
      %2186 = vmatpush1.bf16.msra.mxu0 0
      %2187 = vmatprep.subr.bf16.mxu0 0
      %2188 = vmatpush1.bf16.msra.mxu0 0
      %2189 = vmatprep.subr.bf16.mxu0 0
      %2190 = vmatpush1.bf16.msra.mxu0 0
      %2191 = vmatprep.subr.bf16.mxu0 0
      %2192 = vmatpush1.bf16.msra.mxu0 0
      %2193 = vmatprep.subr.bf16.mxu0 0
      %2194 = vmatpush1.bf16.msra.mxu0 0
      %2195 = vmatprep.subr.bf16.mxu0 0
      %2196 = vmatpush1.bf16.msra.mxu0 0
      %2197 = vmatprep.mubr.bf16.mxu0 0
      %2198 = vmatmul.mubr.bf16.gmra.mrb[0].mxu0 %v2151
      %v2199 = vpop.f32.mrb[0].mxu0
      %v2200 = vadd.f32 0.0, %v2199
      %v2201 = vpop.f32.mrb[0].mxu0
      %v2202 = vpop.f32.mrb[0].mxu0
      %v2203 = vadd.f32 0.0, %v2202
      %v2204 = vpop.f32.mrb[0].mxu0
      %2205 = vmatprep.mubr.bf16.mxu0 0
      %2206 = vmatmul.mubr.bf16.gmra.mrb[0].mxu0 %v2154
      %v2207 = vpop.f32.mrb[0].mxu0
      %v2208 = vadd.f32 0.0, %v2207
      %v2209 = vpop.f32.mrb[0].mxu0
      %v2210 = vpop.f32.mrb[0].mxu0
      %v2211 = vadd.f32 0.0, %v2210
      %v2212 = vpop.f32.mrb[0].mxu0
      %2213 = vmatprep.mubr.bf16.mxu0 0
      %2214 = vmatmul.mubr.bf16.gmra.mrb[0].mxu0 %v2157
      %v2215 = vpop.f32.mrb[0].mxu0
      %v2216 = vadd.f32 0.0, %v2215
      %v2217 = vpop.f32.mrb[0].mxu0
      %v2218 = vpop.f32.mrb[0].mxu0
      %v2219 = vadd.f32 0.0, %v2218
      %v2220 = vpop.f32.mrb[0].mxu0
      %2221 = vmatprep.mubr.bf16.mxu0 0
      %2222 = vmatmul.mubr.bf16.gmra.mrb[0].mxu0 %v2160
      %v2223 = vpop.f32.mrb[0].mxu0
      %v2224 = vadd.f32 0.0, %v2223
      %v2225 = vpop.f32.mrb[0].mxu0
      %v2226 = vpop.f32.mrb[0].mxu0
      %v2227 = vadd.f32 0.0, %v2226
      %v2228 = vpop.f32.mrb[0].mxu0
      %2229 = vdwg.mxu0
      %v2230 = vadd.f32 %v2132, %v2200
      %v2231 = vadd.f32 %v2133, %v2203
      %v2232 = vadd.f32 %v2134, %v2208
      %v2233 = vadd.f32 %v2135, %v2211
      %v2234 = vadd.f32 %v2136, %v2216
      %v2235 = vadd.f32 %v2137, %v2219
      %v2236 = vadd.f32 %v2138, %v2224
      %v2237 = vadd.f32 %v2139, %v2227
      %s2238 = scalar_lea.vmem %s1, 16
      %v2239 = vld [vmem:[%s2238] sm:$0x1]
      %2240 = vrot.lane.b32.xlu0 %v1246, 126
      %v2241 = vpop.permute.xlu0 %2240
      %2242 = vrot.lane.b32.xlu0 %v1247, 126
      %v2243 = vpop.permute.xlu0 %2242
      %2244 = vrot.lane.b32.xlu0 %v1248, 126
      %v2245 = vpop.permute.xlu0 %2244
      %2246 = vrot.lane.b32.xlu0 %v1249, 126
      %v2247 = vpop.permute.xlu0 %2246
      %v2249 = vsel %vm217, %v2241, 0
      %v2252 = vsel %vm217, %v2243, 0
      %v2255 = vsel %vm217, %v2245, 0
      %v2258 = vsel %vm217, %v2247, 0
      %v2261 = vsel %vm230, %v2239, 0
      %2263 = vmatprep.subr.bf16.mxu0 0
      %2264 = vmatpush1.bf16.msra.mxu0 %v2261
      %2265 = vmatprep.subr.bf16.mxu0 0
      %2266 = vmatpush1.bf16.msra.mxu0 0
      %2267 = vmatprep.subr.bf16.mxu0 0
      %2268 = vmatpush1.bf16.msra.mxu0 0
      %2269 = vmatprep.subr.bf16.mxu0 0
      %2270 = vmatpush1.bf16.msra.mxu0 0
      %2271 = vmatprep.subr.bf16.mxu0 0
      %2272 = vmatpush1.bf16.msra.mxu0 0
      %2273 = vmatprep.subr.bf16.mxu0 0
      %2274 = vmatpush1.bf16.msra.mxu0 0
      %2275 = vmatprep.subr.bf16.mxu0 0
      %2276 = vmatpush1.bf16.msra.mxu0 0
      %2277 = vmatprep.subr.bf16.mxu0 0
      %2278 = vmatpush1.bf16.msra.mxu0 0
      %2279 = vmatprep.subr.bf16.mxu0 0
      %2280 = vmatpush1.bf16.msra.mxu0 0
      %2281 = vmatprep.subr.bf16.mxu0 0
      %2282 = vmatpush1.bf16.msra.mxu0 0
      %2283 = vmatprep.subr.bf16.mxu0 0
      %2284 = vmatpush1.bf16.msra.mxu0 0
      %2285 = vmatprep.subr.bf16.mxu0 0
      %2286 = vmatpush1.bf16.msra.mxu0 0
      %2287 = vmatprep.subr.bf16.mxu0 0
      %2288 = vmatpush1.bf16.msra.mxu0 0
      %2289 = vmatprep.subr.bf16.mxu0 0
      %2290 = vmatpush1.bf16.msra.mxu0 0
      %2291 = vmatprep.subr.bf16.mxu0 0
      %2292 = vmatpush1.bf16.msra.mxu0 0
      %2293 = vmatprep.subr.bf16.mxu0 0
      %2294 = vmatpush1.bf16.msra.mxu0 0
      %2295 = vmatprep.mubr.bf16.mxu0 0
      %2296 = vmatmul.mubr.bf16.gmra.mrb[0].mxu0 %v2249
      %v2297 = vpop.f32.mrb[0].mxu0
      %v2298 = vadd.f32 0.0, %v2297
      %v2299 = vpop.f32.mrb[0].mxu0
      %v2300 = vpop.f32.mrb[0].mxu0
      %v2301 = vadd.f32 0.0, %v2300
      %v2302 = vpop.f32.mrb[0].mxu0
      %2303 = vmatprep.mubr.bf16.mxu0 0
      %2304 = vmatmul.mubr.bf16.gmra.mrb[0].mxu0 %v2252
      %v2305 = vpop.f32.mrb[0].mxu0
      %v2306 = vadd.f32 0.0, %v2305
      %v2307 = vpop.f32.mrb[0].mxu0
      %v2308 = vpop.f32.mrb[0].mxu0
      %v2309 = vadd.f32 0.0, %v2308
      %v2310 = vpop.f32.mrb[0].mxu0
      %2311 = vmatprep.mubr.bf16.mxu0 0
      %2312 = vmatmul.mubr.bf16.gmra.mrb[0].mxu0 %v2255
      %v2313 = vpop.f32.mrb[0].mxu0
      %v2314 = vadd.f32 0.0, %v2313
      %v2315 = vpop.f32.mrb[0].mxu0
      %v2316 = vpop.f32.mrb[0].mxu0
      %v2317 = vadd.f32 0.0, %v2316
      %v2318 = vpop.f32.mrb[0].mxu0
      %2319 = vmatprep.mubr.bf16.mxu0 0
      %2320 = vmatmul.mubr.bf16.gmra.mrb[0].mxu0 %v2258
      %v2321 = vpop.f32.mrb[0].mxu0
      %v2322 = vadd.f32 0.0, %v2321
      %v2323 = vpop.f32.mrb[0].mxu0
      %v2324 = vpop.f32.mrb[0].mxu0
      %v2325 = vadd.f32 0.0, %v2324
      %v2326 = vpop.f32.mrb[0].mxu0
      %2327 = vdwg.mxu0
      %v2328 = vadd.f32 %v2230, %v2298
      %v2329 = vadd.f32 %v2231, %v2301
      %v2330 = vadd.f32 %v2232, %v2306
      %v2331 = vadd.f32 %v2233, %v2309
      %v2332 = vadd.f32 %v2234, %v2314
      %v2333 = vadd.f32 %v2235, %v2317
      %v2334 = vadd.f32 %v2236, %v2322
      %v2335 = vadd.f32 %v2237, %v2325
      %s2336 = scalar_lea.vmem %s1, 17
      %v2337 = vld [vmem:[%s2336] sm:$0x1]
      %2338 = vrot.lane.b32.xlu0 %v1476, 126
      %v2339 = vpop.permute.xlu0 %2338
      %2340 = vrot.lane.b32.xlu0 %v1477, 126
      %v2341 = vpop.permute.xlu0 %2340
      %2342 = vrot.lane.b32.xlu0 %v1478, 126
      %v2343 = vpop.permute.xlu0 %2342
      %2344 = vrot.lane.b32.xlu0 %v1479, 126
      %v2345 = vpop.permute.xlu0 %2344
      %v2347 = vsel %vm217, %v2339, 0
      %v2350 = vsel %vm217, %v2341, 0
      %v2353 = vsel %vm217, %v2343, 0
      %v2356 = vsel %vm217, %v2345, 0
      %v2359 = vsel %vm230, %v2337, 0
      %2361 = vmatprep.subr.bf16.mxu0 0
      %2362 = vmatpush1.bf16.msra.mxu0 %v2359
      %2363 = vmatprep.subr.bf16.mxu0 0
      %2364 = vmatpush1.bf16.msra.mxu0 0
      %2365 = vmatprep.subr.bf16.mxu0 0
      %2366 = vmatpush1.bf16.msra.mxu0 0
      %2367 = vmatprep.subr.bf16.mxu0 0
      %2368 = vmatpush1.bf16.msra.mxu0 0
      %2369 = vmatprep.subr.bf16.mxu0 0
      %2370 = vmatpush1.bf16.msra.mxu0 0
      %2371 = vmatprep.subr.bf16.mxu0 0
      %2372 = vmatpush1.bf16.msra.mxu0 0
      %2373 = vmatprep.subr.bf16.mxu0 0
      %2374 = vmatpush1.bf16.msra.mxu0 0
      %2375 = vmatprep.subr.bf16.mxu0 0
      %2376 = vmatpush1.bf16.msra.mxu0 0
      %2377 = vmatprep.subr.bf16.mxu0 0
      %2378 = vmatpush1.bf16.msra.mxu0 0
      %2379 = vmatprep.subr.bf16.mxu0 0
      %2380 = vmatpush1.bf16.msra.mxu0 0
      %2381 = vmatprep.subr.bf16.mxu0 0
      %2382 = vmatpush1.bf16.msra.mxu0 0
      %2383 = vmatprep.subr.bf16.mxu0 0
      %2384 = vmatpush1.bf16.msra.mxu0 0
      %2385 = vmatprep.subr.bf16.mxu0 0
      %2386 = vmatpush1.bf16.msra.mxu0 0
      %2387 = vmatprep.subr.bf16.mxu0 0
      %2388 = vmatpush1.bf16.msra.mxu0 0
      %2389 = vmatprep.subr.bf16.mxu0 0
      %2390 = vmatpush1.bf16.msra.mxu0 0
      %2391 = vmatprep.subr.bf16.mxu0 0
      %2392 = vmatpush1.bf16.msra.mxu0 0
      %2393 = vmatprep.mubr.bf16.mxu0 0
      %2394 = vmatmul.mubr.bf16.gmra.mrb[0].mxu0 %v2347
      %v2395 = vpop.f32.mrb[0].mxu0
      %v2396 = vadd.f32 0.0, %v2395
      %v2397 = vpop.f32.mrb[0].mxu0
      %v2398 = vpop.f32.mrb[0].mxu0
      %v2399 = vadd.f32 0.0, %v2398
      %v2400 = vpop.f32.mrb[0].mxu0
      %2401 = vmatprep.mubr.bf16.mxu0 0
      %2402 = vmatmul.mubr.bf16.gmra.mrb[0].mxu0 %v2350
      %v2403 = vpop.f32.mrb[0].mxu0
      %v2404 = vadd.f32 0.0, %v2403
      %v2405 = vpop.f32.mrb[0].mxu0
      %v2406 = vpop.f32.mrb[0].mxu0
      %v2407 = vadd.f32 0.0, %v2406
      %v2408 = vpop.f32.mrb[0].mxu0
      %2409 = vmatprep.mubr.bf16.mxu0 0
      %2410 = vmatmul.mubr.bf16.gmra.mrb[0].mxu0 %v2353
      %v2411 = vpop.f32.mrb[0].mxu0
      %v2412 = vadd.f32 0.0, %v2411
      %v2413 = vpop.f32.mrb[0].mxu0
      %v2414 = vpop.f32.mrb[0].mxu0
      %v2415 = vadd.f32 0.0, %v2414
      %v2416 = vpop.f32.mrb[0].mxu0
      %2417 = vmatprep.mubr.bf16.mxu0 0
      %2418 = vmatmul.mubr.bf16.gmra.mrb[0].mxu0 %v2356
      %v2419 = vpop.f32.mrb[0].mxu0
      %v2420 = vadd.f32 0.0, %v2419
      %v2421 = vpop.f32.mrb[0].mxu0
      %v2422 = vpop.f32.mrb[0].mxu0
      %v2423 = vadd.f32 0.0, %v2422
      %v2424 = vpop.f32.mrb[0].mxu0
      %2425 = vdwg.mxu0
      %v2426 = vadd.f32 %v2328, %v2396
      %v2427 = vadd.f32 %v2329, %v2399
      %v2428 = vadd.f32 %v2330, %v2404
      %v2429 = vadd.f32 %v2331, %v2407
      %v2430 = vadd.f32 %v2332, %v2412
      %v2431 = vadd.f32 %v2333, %v2415
      %v2432 = vadd.f32 %v2334, %v2420
      %v2433 = vadd.f32 %v2335, %v2423
      %2442 = vrot.lane.b32.xlu0 %v2426, 2
      %v2443 = vpop.permute.xlu0 %2442
      %2444 = vrot.lane.b32.xlu0 %v2427, 2
      %v2445 = vpop.permute.xlu0 %2444
      %2446 = vrot.lane.b32.xlu0 %v2428, 2
      %v2447 = vpop.permute.xlu0 %2446
      %2448 = vrot.lane.b32.xlu0 %v2429, 2
      %v2449 = vpop.permute.xlu0 %2448
      %2450 = vrot.lane.b32.xlu0 %v2430, 2
      %v2451 = vpop.permute.xlu0 %2450
      %2452 = vrot.lane.b32.xlu0 %v2431, 2
      %v2453 = vpop.permute.xlu0 %2452
      %2454 = vrot.lane.b32.xlu0 %v2432, 2
      %v2455 = vpop.permute.xlu0 %2454
      %2456 = vrot.lane.b32.xlu0 %v2433, 2
      %v2457 = vpop.permute.xlu0 %2456
      %v2466 = vsel %vm217, %v1560, %v2443
      %v2467 = vsel %vm217, %v1561, %v2445
      %v2468 = vsel %vm217, %v1562, %v2447
      %v2469 = vsel %vm217, %v1563, %v2449
      %v2470 = vsel %vm217, %v1564, %v2451
      %v2471 = vsel %vm217, %v1565, %v2453
      %v2472 = vsel %vm217, %v1566, %v2455
      %v2473 = vsel %vm217, %v1567, %v2457
      %v2474 = vld [vmem:[%s2] sm:$0x1]
      %v2476 = vlaneseq
      %v2477 = vshrl.u32 %v2476, 7
      %v2478 = vsub.s32 0, %v2477
      %v2479 = vrot.slane %v2474, %v2478
      %v2481 = vadd.f32 %v2466, %v2479
      %v2482 = vadd.f32 %v2467, %v2479
      %v2483 = vadd.f32 %v2468, %v2479
      %v2484 = vadd.f32 %v2469, %v2479
      %v2485 = vadd.f32 %v2470, %v2479
      %v2486 = vadd.f32 %v2471, %v2479
      %v2487 = vadd.f32 %v2472, %v2479
      %v2488 = vadd.f32 %v2473, %v2479
      %v2489 = vmax.f32 %v2481, 0.0
      %v2490 = vmax.f32 %v2482, 0.0
      %v2491 = vmax.f32 %v2483, 0.0
      %v2492 = vmax.f32 %v2484, 0.0
      %v2493 = vmax.f32 %v2485, 0.0
      %v2494 = vmax.f32 %v2486, 0.0
      %v2495 = vmax.f32 %v2487, 0.0
      %v2496 = vmax.f32 %v2488, 0.0
      %vm2497 = vcmask 31744
      %v2498 = vsel %vm2497, %v2489, 0.0
      %v2499 = vsel %vm2497, %v2490, 0.0
      %v2500 = vsel %vm2497, %v2491, 0.0
      %v2501 = vsel %vm2497, %v2492, 0.0
      %v2502 = vsel %vm2497, %v2493, 0.0
      %v2503 = vsel %vm2497, %v2494, 0.0
      %v2504 = vsel %vm2497, %v2495, 0.0
      %v2505 = vsel %vm2497, %v2496, 0.0
      %v2506 = vpack.c.bf16 %v2499, %v2498
      %v2507 = vpack.c.bf16 %v2501, %v2500
      %v2508 = vpack.c.bf16 %v2503, %v2502
      %v2509 = vpack.c.bf16 %v2505, %v2504
      %v2514 = vunpack.c.l.b16 %v2506
      %v2515 = vunpack.c.h.b16 %v2506
      %v2516 = vunpack.c.l.b16 %v2507
      %v2517 = vunpack.c.h.b16 %v2507
      %v2518 = vunpack.c.l.b16 %v2508
      %v2519 = vunpack.c.h.b16 %v2508
      %v2520 = vunpack.c.l.b16 %v2509
      %v2521 = vunpack.c.h.b16 %v2509
      %v2522 = vpack.c.b16 %v2514, %v2514
      %v2523 = vpack.c.b16 %v2515, %v2515
      %v2524 = vpack.c.b16 %v2516, %v2516
      %v2525 = vpack.c.b16 %v2517, %v2517
      %v2526 = vpack.c.b16 %v2518, %v2518
      %v2527 = vpack.c.b16 %v2519, %v2519
      %v2528 = vpack.c.b16 %v2520, %v2520
      %v2529 = vpack.c.b16 %v2521, %v2521
      %2538 = vst [vmem:[%s175] sm:$0xf] %v2522
      %2539 = vst [vmem:[%s175 + $0x4] sm:$0xf] %v2523
      %2540 = vst [vmem:[%s175 + $0x8] sm:$0xf] %v2524
      %2541 = vst [vmem:[%s175 + $0xc] sm:$0xf] %v2525
      %2542 = vst [vmem:[%s175 + $0x10] sm:$0xf] %v2526
      %2543 = vst [vmem:[%s175 + $0x14] sm:$0xf] %v2527
      %2544 = vst [vmem:[%s175 + $0x18] sm:$0xf] %v2528
      %2545 = vst [vmem:[%s175 + $0x1c] sm:$0xf] %v2529
      %p2546 = scmp.lt.s32.totalorder %s14, 1
      %s2547 = scalar_select %p2546, %s14, 1
      %s2548 = smul.addr %s2547, 8
      %s2549 = smul.addr %s2548, 4
      %s2550 = scalar_lea.vmem %s3, %s2549
      // Predicated region
      $region33: #{resnext_block_forward.5} parent=31 // pred_check
        %p2551 = pneg %p100
      $region34: #{resnext_block_forward.5} parent=31 // pred_check_branch
        %2553 = sbr.rel (%p2551) target = $region36
      $region35: #{resnext_block_forward.5} parent=31 // pred_region
        _
      $region36: #{resnext_block_forward.5} parent=31 // pred_fallthru
        _
    $region32: #{resnext_block_forward.5} parent=5 // pred_fallthru
      _
    %p2554 = scmp.le.s32.totalorder 2, %s9
    // Predicated region
    $region37: #{resnext_block_forward.5} parent=5 // pred_check
      %p2555 = pneg %p2554
    $region38: #{resnext_block_forward.5} parent=5 // pred_check_branch
      %2557 = sbr.rel (%p2555) target = $region40
    $region39: #{resnext_block_forward.5} parent=5 // pred_region
      %s2558 = ssub.s32 %s9, 2
      // Predicated region
      $region41: #{resnext_block_forward.5} parent=39 // pred_check
        %p2559 = pneg %p106
      $region42: #{resnext_block_forward.5} parent=39 // pred_check_branch
        %2561 = sbr.rel (%p2559) target = $region44
      $region43: #{resnext_block_forward.5} parent=39 // pred_region
        %p2562 = scmp.lt.s32.totalorder %s15, 1
        %s2563 = scalar_select %p2562, %s15, 1
        %s2564 = smul.addr %s2563, 8
        %s2565 = smul.addr %s2564, 4
        %s2566 = scalar_lea.vmem %s3, %s2565
      $region44: #{resnext_block_forward.5} parent=39 // pred_fallthru
        _
    $region40: #{resnext_block_forward.5} parent=5 // pred_fallthru
      _
  $region6: #{resnext_block_forward.5} parent=0 // loop_footer
    %s13 = sadd.s32 1, %s9
  $region7: #{resnext_block_forward.5} parent=0 // loop_footer_branch
    %8 = sbr.rel target = $region3
  $region8: #{resnext_block_forward.5} parent=0 // loop_exit
    _

</llo_original>
